<compile_context>
chip_gen: v7x
topology: tpu7x:2x2x1
jax: 0.10.0
libtpu: 0.0.40
codegen_flags: <defaults>
</compile_context>

<pallas_src>
import functools

import jax
import jax.numpy as jnp
from jax.experimental import pallas as pl
from jax.experimental.pallas import tpu as pltpu

LN_EPS = 1e-5
NEG_INF = -1e30  # finite stand-in for -inf on masked attention keys (NaN-safe)


def relnet_kernel(kbias_ref, rowmask_ref, posit_ref, sent_ref, otgt_ref, emb_ref,
                  wq_ref, wk_ref, wv_ref, bq_ref, bk_ref, bv_ref,
                  wo_ref, bo_ref,
                  w1_ref, b1_ref, w2_ref, b2_ref,
                  ln1w_ref, ln1b_ref, ln2w_ref, ln2b_ref,
                  obw_ref, obb_ref,
                  po_ref, lossnum_ref,
                  x_ref,
                  *, nhead, num_real_cols):
    f32 = jnp.float32
    bf16 = jnp.bfloat16
    T, H = x_ref.shape                       # T = TB * S token rows carried across layers
    TB, S, _ = sent_ref.shape
    DH = H // nhead
    CP = obw_ref.shape[1]
    l = pl.program_id(1)
    num_layers = pl.num_programs(1)

    # ---- first layer iteration of this token block: x = sent + posit embedding ----
    @pl.when(l == 0)
    def _():
        posit = posit_ref[...].reshape(T, 1)         # (T, 1) f32 in {0., 1.}
        sent = sent_ref[...].reshape(T, H)
        e0 = emb_ref[0:1, :]                         # (1, H) padding_idx row
        e1 = emb_ref[1:2, :]                         # (1, H)
        x_ref[...] = sent + posit * e1 + (1.0 - posit) * e0

    x = x_ref[...]                                   # (T, H) f32
    xb = x.astype(bf16)
    key_bias = kbias_ref[...]                        # (TB, 1, S) f32 (0 or NEG_INF)

    # ---- fused multi-head self-attention (full-width projections, bf16 MXU inputs) ----
    # 1/sqrt(DH) is pre-folded into wq/bq by the wrapper; M = T rows fills the MXU.
    q = jnp.dot(xb, wq_ref[0], preferred_element_type=f32) + bq_ref[0]   # (T, H) f32
    k = jnp.dot(xb, wk_ref[0], preferred_element_type=f32) + bk_ref[0]
    v = jnp.dot(xb, wv_ref[0], preferred_element_type=f32) + bv_ref[0]

    q3 = q.reshape(TB, S, H)
    k3 = k.reshape(TB, S, H)
    v3 = v.reshape(TB, S, H)
    heads = []
    for h in range(nhead):                           # small fixed head loop, batched over TB
        qh = q3[:, :, h * DH:(h + 1) * DH]           # (TB, S, DH)
        kh = k3[:, :, h * DH:(h + 1) * DH]
        vh = v3[:, :, h * DH:(h + 1) * DH]
        s = jnp.einsum('bqd,bkd->bqk', qh, kh, preferred_element_type=f32) + key_bias
        s = s - jnp.max(s, axis=-1, keepdims=True)   # f32 softmax
        pr = jnp.exp(s)
        pr = pr * pl.reciprocal(jnp.sum(pr, axis=-1, keepdims=True), approx=True)
        oh = jnp.einsum('bqk,bkd->bqd', pr.astype(bf16), vh.astype(bf16),
                        preferred_element_type=f32)  # (TB, S, DH) f32
        heads.append(oh.reshape(T, DH))
    attn = jnp.concatenate(heads, axis=-1)           # (T, H)
    attn = jnp.dot(attn.astype(bf16), wo_ref[0], preferred_element_type=f32) + bo_ref[0]

    # ---- residual + LayerNorm, feed-forward (ReLU), residual + LayerNorm (post-norm) ----
    def layer_norm(y, w, b):
        mu = jnp.mean(y, axis=-1, keepdims=True)
        var = jnp.mean((y - mu) ** 2, axis=-1, keepdims=True)
        return (y - mu) * jax.lax.rsqrt(var + LN_EPS) * w + b

    y = layer_norm(x + attn, ln1w_ref[0], ln1b_ref[0])
    ff = jnp.maximum(jnp.dot(y.astype(bf16), w1_ref[0], preferred_element_type=f32)
                     + b1_ref[0], 0.0)
    ff = jnp.dot(ff.astype(bf16), w2_ref[0], preferred_element_type=f32) + b2_ref[0]
    y = layer_norm(y + ff, ln2w_ref[0], ln2b_ref[0])
    x_ref[...] = y

    # ---- last layer iteration: fused (H, 128)-padded classification head + loss ----
    @pl.when(l == num_layers - 1)
    def _():
        z = jnp.dot(y.astype(bf16), obw_ref[...], preferred_element_type=f32) + obb_ref[...]
        po_ref[...] = (1.0 / (1.0 + jnp.exp(-z))).reshape(TB, S, CP).astype(po_ref.dtype)

        # BCE-with-logits over both heads' real class columns, masked rows.
        zr = z[:, :num_real_cols]                    # (T, 2C)
        tgt = otgt_ref[...].reshape(T, num_real_cols)
        rowm = rowmask_ref[...].reshape(T, 1)
        per = jnp.maximum(zr, 0.0) - zr * tgt + jnp.log(1.0 + jnp.exp(-jnp.abs(zr)))
        lossnum_ref[0] = jnp.sum(per * rowm, keepdims=True)   # (1, 1)


def _pick_vmem_limit():
    """Per-generation VMEM scoped limit: ~3/4 of physical, capped at 96 MiB."""
    try:
        phys = int(pltpu.get_tpu_info().vmem_capacity_bytes)
    except Exception:
        phys = 64 << 20                          # conservative fallback (v7x per-core VMEM)
    return int(min(max(phys * 3 // 4, 32 << 20), 96 << 20))


def relnet_forward(passages, posit_ids, sent_encoder, o1, o2, params, nhead,
                   tokens_per_block=256):
    f32 = jnp.float32
    bf16 = jnp.bfloat16
    B, S, H = sent_encoder.shape
    C = o1.shape[-1]
    p = params
    L = p['wq'].shape[0]
    DFF = p['w1'].shape[-1]
    DH = H // nhead
    C2 = 2 * C
    CP = max(128, ((C2 + 127) // 128) * 128)     # lane-dense padded head width
    scale = 1.0 / (DH ** 0.5)

    # ----- token tiling: TB batch rows (TB*S tokens) per grid block -----
    TB = max(1, min(B, tokens_per_block // max(S, 1)))
    NB = -(-B // TB)                             # ceil(B / TB)
    B_pad = NB * TB
    if B_pad != B:                               # pad with fully-masked (id 0) rows
        padn = B_pad - B
        passages_p = jnp.pad(passages, ((0, padn), (0, 0)))
        posit_p = jnp.pad(posit_ids, ((0, padn), (0, 0)))
        sent_p = jnp.pad(sent_encoder, ((0, padn), (0, 0), (0, 0)))
        o1_p = jnp.pad(o1, ((0, padn), (0, 0), (0, 0)))
        o2_p = jnp.pad(o2, ((0, padn), (0, 0), (0, 0)))
    else:
        passages_p, posit_p, sent_p, o1_p, o2_p = passages, posit_ids, sent_encoder, o1, o2

    # ----- input prep (cheap elementwise, done once in the wrapper) -----
    pad_tok = (passages_p == 0)
    key_bias = jnp.where(pad_tok, f32(NEG_INF), f32(0.0))[:, None, :]    # (B_pad, 1, S)
    row_mask = (~pad_tok).astype(f32)[:, :, None]                        # (B_pad, S, 1)
    posit_f = posit_p.astype(f32)[:, :, None]                            # (B_pad, S, 1)
    den = jnp.maximum(jnp.sum((passages != 0).astype(f32)), 1.0)         # all-pad guard

    # fold attention scale into the Q projection; stream big weights as bf16
    wq = (p['wq'].astype(f32) * scale).astype(bf16)
    bq = p['bq'].astype(f32) * scale
    wk, wv, wo = p['wk'].astype(bf16), p['wv'].astype(bf16), p['wo'].astype(bf16)
    w1, w2 = p['w1'].astype(bf16), p['w2'].astype(bf16)

    # fuse both heads into one padded (H, CP) weight; columns [0:C]=ob1, [C:2C]=ob2
    obw = (jnp.zeros((H, CP), f32)
           .at[:, :C].set(p['ob1_w'].astype(f32))
           .at[:, C:C2].set(p['ob2_w'].astype(f32))).astype(bf16)
    obb = (jnp.zeros((1, CP), f32)
           .at[0, :C].set(p['ob1_b'].astype(f32))
           .at[0, C:C2].set(p['ob2_b'].astype(f32)))
    # unpadded packed targets (B_pad, S, 2C) -- no 128-lane f32 padding in HBM
    otgt = jnp.concatenate([o1_p.astype(f32), o2_p.astype(f32)], axis=-1)

    inputs = (key_bias, row_mask, posit_f, sent_p.astype(f32), otgt,
              p['emb'].astype(f32),
              wq, wk, wv, bq, p['bk'].astype(f32), p['bv'].astype(f32),
              wo, p['bo'].astype(f32),
              w1, p['b1'].astype(f32), w2, p['b2'].astype(f32),
              p['ln1_w'].astype(f32), p['ln1_b'].astype(f32),
              p['ln2_w'].astype(f32), p['ln2_b'].astype(f32),
              obw, obb)

    tok_blk = lambda *tail: pl.BlockSpec((TB,) + tail, lambda bb, l: (bb, 0, 0))
    layer_blk = lambda *tail: pl.BlockSpec((1,) + tail, lambda bb, l: (l, 0, 0))

    in_specs = [
        tok_blk(1, S),              # key_bias
        tok_blk(S, 1),              # row_mask
        tok_blk(S, 1),              # posit_f
        tok_blk(S, H),              # sent_encoder
        tok_blk(S, C2),             # packed targets (unpadded)
        pl.BlockSpec((2, H), lambda bb, l: (0, 0)),           # embedding table
        layer_blk(H, H),            # wq
        layer_blk(H, H),            # wk
        layer_blk(H, H),            # wv
        layer_blk(1, H),            # bq
        layer_blk(1, H),            # bk
        layer_blk(1, H),            # bv
        layer_blk(H, H),            # wo
        layer_blk(1, H),            # bo
        layer_blk(H, DFF),          # w1
        layer_blk(1, DFF),          # b1
        layer_blk(DFF, H),          # w2
        layer_blk(1, H),            # b2
        layer_blk(1, H),            # ln1_w
        layer_blk(1, H),            # ln1_b
        layer_blk(1, H),            # ln2_w
        layer_blk(1, H),            # ln2_b
        pl.BlockSpec((H, CP), lambda bb, l: (0, 0)),          # fused head weight
        pl.BlockSpec((1, CP), lambda bb, l: (0, 0)),          # fused head bias
    ]
    out_specs = (
        pl.BlockSpec((TB, S, CP), lambda bb, l: (bb, 0, 0)),  # bf16 sigmoid slab
        pl.BlockSpec((1, 1, 1), lambda bb, l: (bb, 0, 0)),    # per-block loss numerator
    )
    out_shape = (jax.ShapeDtypeStruct((B_pad, S, CP), bf16),
                 jax.ShapeDtypeStruct((NB, 1, 1), f32))

    fn = pl.pallas_call(
        functools.partial(relnet_kernel, nhead=nhead, num_real_cols=C2),
        out_shape=out_shape,
        grid_spec=pltpu.PrefetchScalarGridSpec(
            num_scalar_prefetch=0,
            grid=(NB, L),                               # token blocks (parallel) x layers (stream)
            in_specs=in_specs,
            out_specs=out_specs,
            scratch_shapes=[pltpu.VMEM((TB * S, H), f32)],  # hidden-state carry across layers
        ),
        compiler_params=pltpu.CompilerParams(
            dimension_semantics=("parallel", "arbitrary"),
            vmem_limit_bytes=_pick_vmem_limit(),
        ),
    )
    po_slab, loss_num = fn(*inputs)
    po_slab = po_slab[:B].astype(f32)
    po1 = po_slab[:, :, :C]
    po2 = po_slab[:, :, C:C2]
    rel_loss = jnp.sum(loss_num) / den / C
    return rel_loss, po1, po2


def init_params(key, H, nhead, L, C, DFF):
    ks = jax.random.split(key, 12)
    f32, bf16 = jnp.float32, jnp.bfloat16
    nrm = lambda k, shp, s=0.05: jax.random.normal(k, shp, f32) * s
    emb = nrm(ks[0], (2, H)).at[0].set(0.0)              # padding_idx=0 row zeroed
    params = dict(
        emb=emb,
        # fused in-proj weights (stored transposed: y = x @ W), bf16 masters
        wq=nrm(ks[1], (L, H, H)).astype(bf16),
        wk=nrm(ks[2], (L, H, H)).astype(bf16),
        wv=nrm(ks[3], (L, H, H)).astype(bf16),
        wo=nrm(ks[4], (L, H, H)).astype(bf16),
        bq=nrm(ks[5], (L, 1, H)),
        bk=nrm(ks[6], (L, 1, H)),
        bv=nrm(ks[7], (L, 1, H)),
        bo=jnp.zeros((L, 1, H), f32),
        # feed-forward (dim_feedforward = PyTorch default 2048)
        w1=nrm(ks[8], (L, H, DFF)).astype(bf16), b1=jnp.zeros((L, 1, DFF), f32),
        w2=nrm(ks[9], (L, DFF, H)).astype(bf16), b2=jnp.zeros((L, 1, H), f32),
        ln1_w=jnp.ones((L, 1, H), f32), ln1_b=jnp.zeros((L, 1, H), f32),
        ln2_w=jnp.ones((L, 1, H), f32), ln2_b=jnp.zeros((L, 1, H), f32),
        # ob1 / ob2 heads, stored transposed: (H, C)
        ob1_w=nrm(ks[10], (H, C)).astype(bf16), ob1_b=jnp.zeros((C,), f32),
        ob2_w=nrm(ks[11], (H, C)).astype(bf16), ob2_b=jnp.zeros((C,), f32),
    )
    return params


def reference_forward(passages, posit_ids, sent_encoder, o1, o2, p, nhead):
    """Pure-JAX f32 reference of the same math (sanity check of the Pallas lowering)."""
    f32 = jnp.float32
    c = lambda a: a.astype(f32)
    B, S, H = sent_encoder.shape
    L = p['wq'].shape[0]
    DH = H // nhead
    C = o1.shape[-1]
    seq_mask = (passages != 0).astype(f32)
    bias = jnp.where(passages == 0, f32(NEG_INF), f32(0.0))[:, None, None, :]  # (B,1,1,S)
    posit = posit_ids.astype(f32)[..., None]
    emb = c(p['emb'])
    x = sent_encoder + posit * emb[1] + (1.0 - posit) * emb[0]

    def ln(y, w, b):
        mu = y.mean(-1, keepdims=True)
        var = ((y - mu) ** 2).mean(-1, keepdims=True)
        return (y - mu) / jnp.sqrt(var + LN_EPS) * w + b

    for l in range(L):
        x2 = x.reshape(B * S, H)
        q = (x2 @ c(p['wq'][l]) + p['bq'][l]) / jnp.sqrt(DH)
        k = x2 @ c(p['wk'][l]) + p['bk'][l]
        v = x2 @ c(p['wv'][l]) + p['bv'][l]
        q, k, v = (a.reshape(B, S, nhead, DH) for a in (q, k, v))
        s = jnp.einsum('bqhd,bkhd->bhqk', q, k) + bias
        pr = jax.nn.softmax(s, axis=-1)
        o = jnp.einsum('bhqk,bkhd->bqhd', pr, v).reshape(B * S, H)
        attn = o @ c(p['wo'][l]) + p['bo'][l]
        y = ln(x2 + attn, p['ln1_w'][l], p['ln1_b'][l])
        ff = jax.nn.relu(y @ c(p['w1'][l]) + p['b1'][l]) @ c(p['w2'][l]) + p['b2'][l]
        y = ln(y + ff, p['ln2_w'][l], p['ln2_b'][l])
        x = y.reshape(B, S, H)

    xf = x.reshape(B * S, H)
    z1 = (xf @ c(p['ob1_w']) + p['ob1_b']).reshape(B, S, C)
    z2 = (xf @ c(p['ob2_w']) + p['ob2_b']).reshape(B, S, C)

    def bce(z, t):
        per = (jnp.maximum(z, 0.0) - z * t + jnp.log1p(jnp.exp(-jnp.abs(z)))).sum(-1)
        return (per * seq_mask).sum() / jnp.maximum(seq_mask.sum(), 1.0) / C

    return bce(z1, o1) + bce(z2, o2), jax.nn.sigmoid(z1), jax.nn.sigmoid(z2)


if __name__ == "__main__":
    B, S, H, NHEAD, LAYERS, C = 2, 8, 32, 4, 2, 5   # bert_hidden_size=32, nhead=4, 2 layers, 5 relations
    DFF = 2048                                      # PyTorch TransformerEncoderLayer default

    key = jax.random.PRNGKey(0)
    k_inp, k_par = jax.random.split(key)
    ks = jax.random.split(k_inp, 6)

    # token ids with trailing padding (id 0)
    passages = jax.random.randint(ks[0], (B, S), 1, 100, dtype=jnp.int32)
    lengths = jnp.array([[6], [7]], dtype=jnp.int32)
    valid = jnp.arange(S, dtype=jnp.int32)[None, :] < lengths
    passages = jnp.where(valid, passages, 0)

    posit_ids = jnp.where(valid, jax.random.bernoulli(ks[1], 0.3, (B, S)).astype(jnp.int32), 0)
    sent_encoder = jax.random.normal(ks[2], (B, S, H), jnp.float32)
    o1 = jax.random.bernoulli(ks[3], 0.2, (B, S, C)).astype(jnp.float32)
    o2 = jax.random.bernoulli(ks[4], 0.2, (B, S, C)).astype(jnp.float32)

    params = init_params(k_par, H, NHEAD, LAYERS, C, DFF)

    loss, po1, po2 = relnet_forward(passages, posit_ids, sent_encoder, o1, o2, params, NHEAD)
    jax.block_until_ready((loss, po1, po2))

    # sanity check against a pure-JAX reference of the same math (bf16-tolerant bounds)
    ref_loss, ref_po1, ref_po2 = reference_forward(passages, posit_ids, sent_encoder,
                                                   o1, o2, params, NHEAD)
    assert bool(jnp.isfinite(loss)), "loss is not finite"
    assert jnp.allclose(loss, ref_loss, rtol=2e-2, atol=2e-2), (loss, ref_loss)
    assert jnp.allclose(po1, ref_po1, rtol=2e-2, atol=2e-2)
    assert jnp.allclose(po2, ref_po2, rtol=2e-2, atol=2e-2)

    print("KERNEL_OK")
</pallas_src>

<mosaic_0001>
module attributes {stable_mosaic.version = 11 : i64} {
  func.func @relnet_kernel(%arg0: i32, %arg1: i32, %arg2: memref<2x1x8xf32, #tpu.memory_space<vmem>>, %arg3: memref<2x8x1xf32, #tpu.memory_space<vmem>>, %arg4: memref<2x8x1xf32, #tpu.memory_space<vmem>>, %arg5: memref<2x8x32xf32, #tpu.memory_space<vmem>>, %arg6: memref<2x8x10xf32, #tpu.memory_space<vmem>>, %arg7: memref<2x32xf32, #tpu.memory_space<vmem>>, %arg8: memref<1x32x32xbf16, #tpu.memory_space<vmem>>, %arg9: memref<1x32x32xbf16, #tpu.memory_space<vmem>>, %arg10: memref<1x32x32xbf16, #tpu.memory_space<vmem>>, %arg11: memref<1x1x32xf32, #tpu.memory_space<vmem>>, %arg12: memref<1x1x32xf32, #tpu.memory_space<vmem>>, %arg13: memref<1x1x32xf32, #tpu.memory_space<vmem>>, %arg14: memref<1x32x32xbf16, #tpu.memory_space<vmem>>, %arg15: memref<1x1x32xf32, #tpu.memory_space<vmem>>, %arg16: memref<1x32x2048xbf16, #tpu.memory_space<vmem>>, %arg17: memref<1x1x2048xf32, #tpu.memory_space<vmem>>, %arg18: memref<1x2048x32xbf16, #tpu.memory_space<vmem>>, %arg19: memref<1x1x32xf32, #tpu.memory_space<vmem>>, %arg20: memref<1x1x32xf32, #tpu.memory_space<vmem>>, %arg21: memref<1x1x32xf32, #tpu.memory_space<vmem>>, %arg22: memref<1x1x32xf32, #tpu.memory_space<vmem>>, %arg23: memref<1x1x32xf32, #tpu.memory_space<vmem>>, %arg24: memref<32x128xbf16, #tpu.memory_space<vmem>>, %arg25: memref<1x128xf32, #tpu.memory_space<vmem>>, %arg26: memref<2x8x128xbf16, #tpu.memory_space<vmem>>, %arg27: memref<1x1x1xf32, #tpu.memory_space<vmem>>, %arg28: memref<16x32xf32, #tpu.memory_space<vmem>>) attributes {dimension_semantics = [#tpu.dimension_semantics<parallel>, #tpu.dimension_semantics<arbitrary>], iteration_bounds = array<i64: 1, 2>, scalar_prefetch = 0 : i64, scratch_operands = 1 : i64, tpu.core_type = #tpu.core_type<tc>, window_params = [{transform_indices = @transform_0, window_bounds = array<i64: 2, 1, 8>}, {transform_indices = @transform_1, window_bounds = array<i64: 2, 8, 1>}, {transform_indices = @transform_2, window_bounds = array<i64: 2, 8, 1>}, {transform_indices = @transform_3, window_bounds = array<i64: 2, 8, 32>}, {transform_indices = @transform_4, window_bounds = array<i64: 2, 8, 10>}, {pipeline_mode = #tpu.pipeline_mode<synchronous>, transform_indices = @transform_5, window_bounds = array<i64: 2, 32>}, {transform_indices = @transform_6, window_bounds = array<i64: 1, 32, 32>}, {transform_indices = @transform_7, window_bounds = array<i64: 1, 32, 32>}, {transform_indices = @transform_8, window_bounds = array<i64: 1, 32, 32>}, {transform_indices = @transform_9, window_bounds = array<i64: 1, 1, 32>}, {transform_indices = @transform_10, window_bounds = array<i64: 1, 1, 32>}, {transform_indices = @transform_11, window_bounds = array<i64: 1, 1, 32>}, {transform_indices = @transform_12, window_bounds = array<i64: 1, 32, 32>}, {transform_indices = @transform_13, window_bounds = array<i64: 1, 1, 32>}, {transform_indices = @transform_14, window_bounds = array<i64: 1, 32, 2048>}, {transform_indices = @transform_15, window_bounds = array<i64: 1, 1, 2048>}, {transform_indices = @transform_16, window_bounds = array<i64: 1, 2048, 32>}, {transform_indices = @transform_17, window_bounds = array<i64: 1, 1, 32>}, {transform_indices = @transform_18, window_bounds = array<i64: 1, 1, 32>}, {transform_indices = @transform_19, window_bounds = array<i64: 1, 1, 32>}, {transform_indices = @transform_20, window_bounds = array<i64: 1, 1, 32>}, {transform_indices = @transform_21, window_bounds = array<i64: 1, 1, 32>}, {pipeline_mode = #tpu.pipeline_mode<synchronous>, transform_indices = @transform_22, window_bounds = array<i64: 32, 128>}, {pipeline_mode = #tpu.pipeline_mode<synchronous>, transform_indices = @transform_23, window_bounds = array<i64: 1, 128>}, {transform_indices = @transform_24, window_bounds = array<i64: 2, 8, 128>}, {transform_indices = @transform_25, window_bounds = array<i64: 1, 1, 1>}]} {
    %c0_i32 = arith.constant 0 : i32
    %0 = arith.cmpi eq, %arg1, %c0_i32 : i32
    %1 = arith.extui %0 : i1 to i32
    %c0_i32_0 = arith.constant 0 : i32
    %2 = arith.cmpi ne, %1, %c0_i32_0 : i32
    scf.if %2 {
      %c0_88 = arith.constant 0 : index
      %c0_89 = arith.constant 0 : index
      %c0_90 = arith.constant 0 : index
      %195 = vector.load %arg4[%c0_88, %c0_89, %c0_90] : memref<2x8x1xf32, #tpu.memory_space<vmem>>, vector<2x8x1xf32>
      %196 = vector.shape_cast %195 : vector<2x8x1xf32> to vector<16x1xf32>
      %c0_91 = arith.constant 0 : index
      %c0_92 = arith.constant 0 : index
      %c0_93 = arith.constant 0 : index
      %197 = vector.load %arg5[%c0_91, %c0_92, %c0_93] : memref<2x8x32xf32, #tpu.memory_space<vmem>>, vector<2x8x32xf32>
      %198 = vector.shape_cast %197 : vector<2x8x32xf32> to vector<16x32xf32>
      %c0_94 = arith.constant 0 : index
      %c0_95 = arith.constant 0 : index
      %199 = vector.load %arg7[%c0_94, %c0_95] : memref<2x32xf32, #tpu.memory_space<vmem>>, vector<1x32xf32>
      %c1 = arith.constant 1 : index
      %c0_96 = arith.constant 0 : index
      %200 = vector.load %arg7[%c1, %c0_96] : memref<2x32xf32, #tpu.memory_space<vmem>>, vector<1x32xf32>
      %201 = vector.broadcast %196 : vector<16x1xf32> to vector<16x32xf32>
      %202 = vector.broadcast %200 : vector<1x32xf32> to vector<16x32xf32>
      %203 = arith.mulf %201, %202 : vector<16x32xf32>
      %204 = arith.addf %198, %203 : vector<16x32xf32>
      %cst_97 = arith.constant 1.000000e+00 : f32
      %205 = vector.broadcast %cst_97 : f32 to vector<16x1xf32>
      %206 = arith.subf %205, %196 : vector<16x1xf32>
      %207 = vector.broadcast %206 : vector<16x1xf32> to vector<16x32xf32>
      %208 = vector.broadcast %199 : vector<1x32xf32> to vector<16x32xf32>
      %209 = arith.mulf %207, %208 : vector<16x32xf32>
      %210 = arith.addf %204, %209 : vector<16x32xf32>
      %c0_98 = arith.constant 0 : index
      %c0_99 = arith.constant 0 : index
      %211 = vector.load %arg28[%c0_98, %c0_99] : memref<16x32xf32, #tpu.memory_space<vmem>>, vector<16x32xf32>
      tpu.vector_store %arg28[%c0_98, %c0_99], %210 {strides = array<i32>} : memref<16x32xf32, #tpu.memory_space<vmem>>, vector<16x32xf32>,
    } else {
    }
    %c0 = arith.constant 0 : index
    %c0_1 = arith.constant 0 : index
    %3 = vector.load %arg28[%c0, %c0_1] : memref<16x32xf32, #tpu.memory_space<vmem>>, vector<16x32xf32>
    %4 = arith.truncf %3 : vector<16x32xf32> to vector<16x32xbf16>
    %c0_2 = arith.constant 0 : index
    %c0_3 = arith.constant 0 : index
    %c0_4 = arith.constant 0 : index
    %5 = vector.load %arg2[%c0_2, %c0_3, %c0_4] : memref<2x1x8xf32, #tpu.memory_space<vmem>>, vector<2x1x8xf32>
    %c0_5 = arith.constant 0 : index
    %c0_6 = arith.constant 0 : index
    %c0_7 = arith.constant 0 : index
    %6 = vector.load %arg8[%c0_5, %c0_6, %c0_7] : memref<1x32x32xbf16, #tpu.memory_space<vmem>>, vector<1x32x32xbf16>
    %7 = vector.shape_cast %6 : vector<1x32x32xbf16> to vector<32x32xbf16>
    %cst = arith.constant dense<0.000000e+00> : vector<16x32xf32>
    %8 = tpu.matmul %4, %7, %cst {dimension_numbers = #tpu.dot_dimension_numbers<[1], [0], [0], [1], [0, 0, 1, 1], [], []>} : vector<16x32xbf16>, vector<32x32xbf16>, vector<16x32xf32> -> vector<16x32xf32>
    %c0_8 = arith.constant 0 : index
    %c0_9 = arith.constant 0 : index
    %c0_10 = arith.constant 0 : index
    %9 = vector.load %arg11[%c0_8, %c0_9, %c0_10] : memref<1x1x32xf32, #tpu.memory_space<vmem>>, vector<1x1x32xf32>
    %10 = vector.shape_cast %9 : vector<1x1x32xf32> to vector<1x32xf32>
    %11 = vector.broadcast %10 : vector<1x32xf32> to vector<16x32xf32>
    %12 = arith.addf %8, %11 : vector<16x32xf32>
    %c0_11 = arith.constant 0 : index
    %c0_12 = arith.constant 0 : index
    %c0_13 = arith.constant 0 : index
    %13 = vector.load %arg9[%c0_11, %c0_12, %c0_13] : memref<1x32x32xbf16, #tpu.memory_space<vmem>>, vector<1x32x32xbf16>
    %14 = vector.shape_cast %13 : vector<1x32x32xbf16> to vector<32x32xbf16>
    %cst_14 = arith.constant dense<0.000000e+00> : vector<16x32xf32>
    %15 = tpu.matmul %4, %14, %cst_14 {dimension_numbers = #tpu.dot_dimension_numbers<[1], [0], [0], [1], [0, 0, 1, 1], [], []>} : vector<16x32xbf16>, vector<32x32xbf16>, vector<16x32xf32> -> vector<16x32xf32>
    %c0_15 = arith.constant 0 : index
    %c0_16 = arith.constant 0 : index
    %c0_17 = arith.constant 0 : index
    %16 = vector.load %arg12[%c0_15, %c0_16, %c0_17] : memref<1x1x32xf32, #tpu.memory_space<vmem>>, vector<1x1x32xf32>
    %17 = vector.shape_cast %16 : vector<1x1x32xf32> to vector<1x32xf32>
    %18 = vector.broadcast %17 : vector<1x32xf32> to vector<16x32xf32>
    %19 = arith.addf %15, %18 : vector<16x32xf32>
    %c0_18 = arith.constant 0 : index
    %c0_19 = arith.constant 0 : index
    %c0_20 = arith.constant 0 : index
    %20 = vector.load %arg10[%c0_18, %c0_19, %c0_20] : memref<1x32x32xbf16, #tpu.memory_space<vmem>>, vector<1x32x32xbf16>
    %21 = vector.shape_cast %20 : vector<1x32x32xbf16> to vector<32x32xbf16>
    %cst_21 = arith.constant dense<0.000000e+00> : vector<16x32xf32>
    %22 = tpu.matmul %4, %21, %cst_21 {dimension_numbers = #tpu.dot_dimension_numbers<[1], [0], [0], [1], [0, 0, 1, 1], [], []>} : vector<16x32xbf16>, vector<32x32xbf16>, vector<16x32xf32> -> vector<16x32xf32>
    %c0_22 = arith.constant 0 : index
    %c0_23 = arith.constant 0 : index
    %c0_24 = arith.constant 0 : index
    %23 = vector.load %arg13[%c0_22, %c0_23, %c0_24] : memref<1x1x32xf32, #tpu.memory_space<vmem>>, vector<1x1x32xf32>
    %24 = vector.shape_cast %23 : vector<1x1x32xf32> to vector<1x32xf32>
    %25 = vector.broadcast %24 : vector<1x32xf32> to vector<16x32xf32>
    %26 = arith.addf %22, %25 : vector<16x32xf32>
    %27 = vector.shape_cast %12 : vector<16x32xf32> to vector<2x8x32xf32>
    %28 = vector.shape_cast %19 : vector<16x32xf32> to vector<2x8x32xf32>
    %29 = vector.shape_cast %26 : vector<16x32xf32> to vector<2x8x32xf32>
    %30 = vector.extract_strided_slice %27 {offsets = [0, 0, 0], sizes = [2, 8, 8], strides = [1, 1, 1]} : vector<2x8x32xf32> to vector<2x8x8xf32>
    %31 = vector.extract_strided_slice %28 {offsets = [0, 0, 0], sizes = [2, 8, 8], strides = [1, 1, 1]} : vector<2x8x32xf32> to vector<2x8x8xf32>
    %32 = vector.extract_strided_slice %29 {offsets = [0, 0, 0], sizes = [2, 8, 8], strides = [1, 1, 1]} : vector<2x8x32xf32> to vector<2x8x8xf32>
    "tpu.trace_start"() <{level = 10 : i32, message = "bqd,bkd->bqk"}> : () -> ()
    %cst_25 = arith.constant dense<0.000000e+00> : vector<2x8x8xf32>
    %33 = tpu.matmul %30, %31, %cst_25 {dimension_numbers = #tpu.dot_dimension_numbers<[2], [2], [1], [1], [0, 0, 0, 1, 1, 1], [0], [0]>} : vector<2x8x8xf32>, vector<2x8x8xf32>, vector<2x8x8xf32> -> vector<2x8x8xf32>
    "tpu.trace_stop"() : () -> ()
    %34 = vector.broadcast %5 : vector<2x1x8xf32> to vector<2x8x8xf32>
    %35 = arith.addf %33, %34 : vector<2x8x8xf32>
    %cst_26 = arith.constant dense<0xFF800000> : vector<2x8xf32>
    %36 = vector.multi_reduction <maximumf>, %35, %cst_26 [2] : vector<2x8x8xf32> to vector<2x8xf32>
    %37 = vector.shape_cast %36 : vector<2x8xf32> to vector<2x8x1xf32>
    %38 = vector.broadcast %37 : vector<2x8x1xf32> to vector<2x8x8xf32>
    %39 = arith.subf %35, %38 : vector<2x8x8xf32>
    %40 = math.exp %39 : vector<2x8x8xf32>
    %cst_27 = arith.constant dense<0.000000e+00> : vector<2x8xf32>
    %41 = vector.multi_reduction <add>, %40, %cst_27 [2] : vector<2x8x8xf32> to vector<2x8xf32>
    %42 = vector.shape_cast %41 : vector<2x8xf32> to vector<2x8x1xf32>
    %43 = tpu.reciprocal %42 {approx = true} : vector<2x8x1xf32> -> vector<2x8x1xf32>
    %44 = vector.broadcast %43 : vector<2x8x1xf32> to vector<2x8x8xf32>
    %45 = arith.mulf %40, %44 : vector<2x8x8xf32>
    %46 = arith.truncf %45 : vector<2x8x8xf32> to vector<2x8x8xbf16>
    %47 = arith.truncf %32 : vector<2x8x8xf32> to vector<2x8x8xbf16>
    "tpu.trace_start"() <{level = 10 : i32, message = "bqk,bkd->bqd"}> : () -> ()
    %cst_28 = arith.constant dense<0.000000e+00> : vector<2x8x8xf32>
    %48 = tpu.matmul %46, %47, %cst_28 {dimension_numbers = #tpu.dot_dimension_numbers<[2], [1], [1], [2], [0, 0, 0, 1, 1, 2], [0], [0]>} : vector<2x8x8xbf16>, vector<2x8x8xbf16>, vector<2x8x8xf32> -> vector<2x8x8xf32>
    "tpu.trace_stop"() : () -> ()
    %49 = vector.shape_cast %48 : vector<2x8x8xf32> to vector<16x8xf32>
    %50 = vector.extract_strided_slice %27 {offsets = [0, 0, 8], sizes = [2, 8, 8], strides = [1, 1, 1]} : vector<2x8x32xf32> to vector<2x8x8xf32>
    %51 = vector.extract_strided_slice %28 {offsets = [0, 0, 8], sizes = [2, 8, 8], strides = [1, 1, 1]} : vector<2x8x32xf32> to vector<2x8x8xf32>
    %52 = vector.extract_strided_slice %29 {offsets = [0, 0, 8], sizes = [2, 8, 8], strides = [1, 1, 1]} : vector<2x8x32xf32> to vector<2x8x8xf32>
    "tpu.trace_start"() <{level = 10 : i32, message = "bqd,bkd->bqk"}> : () -> ()
    %cst_29 = arith.constant dense<0.000000e+00> : vector<2x8x8xf32>
    %53 = tpu.matmul %50, %51, %cst_29 {dimension_numbers = #tpu.dot_dimension_numbers<[2], [2], [1], [1], [0, 0, 0, 1, 1, 1], [0], [0]>} : vector<2x8x8xf32>, vector<2x8x8xf32>, vector<2x8x8xf32> -> vector<2x8x8xf32>
    "tpu.trace_stop"() : () -> ()
    %54 = vector.broadcast %5 : vector<2x1x8xf32> to vector<2x8x8xf32>
    %55 = arith.addf %53, %54 : vector<2x8x8xf32>
    %cst_30 = arith.constant dense<0xFF800000> : vector<2x8xf32>
    %56 = vector.multi_reduction <maximumf>, %55, %cst_30 [2] : vector<2x8x8xf32> to vector<2x8xf32>
    %57 = vector.shape_cast %56 : vector<2x8xf32> to vector<2x8x1xf32>
    %58 = vector.broadcast %57 : vector<2x8x1xf32> to vector<2x8x8xf32>
    %59 = arith.subf %55, %58 : vector<2x8x8xf32>
    %60 = math.exp %59 : vector<2x8x8xf32>
    %cst_31 = arith.constant dense<0.000000e+00> : vector<2x8xf32>
    %61 = vector.multi_reduction <add>, %60, %cst_31 [2] : vector<2x8x8xf32> to vector<2x8xf32>
    %62 = vector.shape_cast %61 : vector<2x8xf32> to vector<2x8x1xf32>
    %63 = tpu.reciprocal %62 {approx = true} : vector<2x8x1xf32> -> vector<2x8x1xf32>
    %64 = vector.broadcast %63 : vector<2x8x1xf32> to vector<2x8x8xf32>
    %65 = arith.mulf %60, %64 : vector<2x8x8xf32>
    %66 = arith.truncf %65 : vector<2x8x8xf32> to vector<2x8x8xbf16>
    %67 = arith.truncf %52 : vector<2x8x8xf32> to vector<2x8x8xbf16>
    "tpu.trace_start"() <{level = 10 : i32, message = "bqk,bkd->bqd"}> : () -> ()
    %cst_32 = arith.constant dense<0.000000e+00> : vector<2x8x8xf32>
    %68 = tpu.matmul %66, %67, %cst_32 {dimension_numbers = #tpu.dot_dimension_numbers<[2], [1], [1], [2], [0, 0, 0, 1, 1, 2], [0], [0]>} : vector<2x8x8xbf16>, vector<2x8x8xbf16>, vector<2x8x8xf32> -> vector<2x8x8xf32>
    "tpu.trace_stop"() : () -> ()
    %69 = vector.shape_cast %68 : vector<2x8x8xf32> to vector<16x8xf32>
    %70 = vector.extract_strided_slice %27 {offsets = [0, 0, 16], sizes = [2, 8, 8], strides = [1, 1, 1]} : vector<2x8x32xf32> to vector<2x8x8xf32>
    %71 = vector.extract_strided_slice %28 {offsets = [0, 0, 16], sizes = [2, 8, 8], strides = [1, 1, 1]} : vector<2x8x32xf32> to vector<2x8x8xf32>
    %72 = vector.extract_strided_slice %29 {offsets = [0, 0, 16], sizes = [2, 8, 8], strides = [1, 1, 1]} : vector<2x8x32xf32> to vector<2x8x8xf32>
    "tpu.trace_start"() <{level = 10 : i32, message = "bqd,bkd->bqk"}> : () -> ()
    %cst_33 = arith.constant dense<0.000000e+00> : vector<2x8x8xf32>
    %73 = tpu.matmul %70, %71, %cst_33 {dimension_numbers = #tpu.dot_dimension_numbers<[2], [2], [1], [1], [0, 0, 0, 1, 1, 1], [0], [0]>} : vector<2x8x8xf32>, vector<2x8x8xf32>, vector<2x8x8xf32> -> vector<2x8x8xf32>
    "tpu.trace_stop"() : () -> ()
    %74 = vector.broadcast %5 : vector<2x1x8xf32> to vector<2x8x8xf32>
    %75 = arith.addf %73, %74 : vector<2x8x8xf32>
    %cst_34 = arith.constant dense<0xFF800000> : vector<2x8xf32>
    %76 = vector.multi_reduction <maximumf>, %75, %cst_34 [2] : vector<2x8x8xf32> to vector<2x8xf32>
    %77 = vector.shape_cast %76 : vector<2x8xf32> to vector<2x8x1xf32>
    %78 = vector.broadcast %77 : vector<2x8x1xf32> to vector<2x8x8xf32>
    %79 = arith.subf %75, %78 : vector<2x8x8xf32>
    %80 = math.exp %79 : vector<2x8x8xf32>
    %cst_35 = arith.constant dense<0.000000e+00> : vector<2x8xf32>
    %81 = vector.multi_reduction <add>, %80, %cst_35 [2] : vector<2x8x8xf32> to vector<2x8xf32>
    %82 = vector.shape_cast %81 : vector<2x8xf32> to vector<2x8x1xf32>
    %83 = tpu.reciprocal %82 {approx = true} : vector<2x8x1xf32> -> vector<2x8x1xf32>
    %84 = vector.broadcast %83 : vector<2x8x1xf32> to vector<2x8x8xf32>
    %85 = arith.mulf %80, %84 : vector<2x8x8xf32>
    %86 = arith.truncf %85 : vector<2x8x8xf32> to vector<2x8x8xbf16>
    %87 = arith.truncf %72 : vector<2x8x8xf32> to vector<2x8x8xbf16>
    "tpu.trace_start"() <{level = 10 : i32, message = "bqk,bkd->bqd"}> : () -> ()
    %cst_36 = arith.constant dense<0.000000e+00> : vector<2x8x8xf32>
    %88 = tpu.matmul %86, %87, %cst_36 {dimension_numbers = #tpu.dot_dimension_numbers<[2], [1], [1], [2], [0, 0, 0, 1, 1, 2], [0], [0]>} : vector<2x8x8xbf16>, vector<2x8x8xbf16>, vector<2x8x8xf32> -> vector<2x8x8xf32>
    "tpu.trace_stop"() : () -> ()
    %89 = vector.shape_cast %88 : vector<2x8x8xf32> to vector<16x8xf32>
    %90 = vector.extract_strided_slice %27 {offsets = [0, 0, 24], sizes = [2, 8, 8], strides = [1, 1, 1]} : vector<2x8x32xf32> to vector<2x8x8xf32>
    %91 = vector.extract_strided_slice %28 {offsets = [0, 0, 24], sizes = [2, 8, 8], strides = [1, 1, 1]} : vector<2x8x32xf32> to vector<2x8x8xf32>
    %92 = vector.extract_strided_slice %29 {offsets = [0, 0, 24], sizes = [2, 8, 8], strides = [1, 1, 1]} : vector<2x8x32xf32> to vector<2x8x8xf32>
    "tpu.trace_start"() <{level = 10 : i32, message = "bqd,bkd->bqk"}> : () -> ()
    %cst_37 = arith.constant dense<0.000000e+00> : vector<2x8x8xf32>
    %93 = tpu.matmul %90, %91, %cst_37 {dimension_numbers = #tpu.dot_dimension_numbers<[2], [2], [1], [1], [0, 0, 0, 1, 1, 1], [0], [0]>} : vector<2x8x8xf32>, vector<2x8x8xf32>, vector<2x8x8xf32> -> vector<2x8x8xf32>
    "tpu.trace_stop"() : () -> ()
    %94 = vector.broadcast %5 : vector<2x1x8xf32> to vector<2x8x8xf32>
    %95 = arith.addf %93, %94 : vector<2x8x8xf32>
    %cst_38 = arith.constant dense<0xFF800000> : vector<2x8xf32>
    %96 = vector.multi_reduction <maximumf>, %95, %cst_38 [2] : vector<2x8x8xf32> to vector<2x8xf32>
    %97 = vector.shape_cast %96 : vector<2x8xf32> to vector<2x8x1xf32>
    %98 = vector.broadcast %97 : vector<2x8x1xf32> to vector<2x8x8xf32>
    %99 = arith.subf %95, %98 : vector<2x8x8xf32>
    %100 = math.exp %99 : vector<2x8x8xf32>
    %cst_39 = arith.constant dense<0.000000e+00> : vector<2x8xf32>
    %101 = vector.multi_reduction <add>, %100, %cst_39 [2] : vector<2x8x8xf32> to vector<2x8xf32>
    %102 = vector.shape_cast %101 : vector<2x8xf32> to vector<2x8x1xf32>
    %103 = tpu.reciprocal %102 {approx = true} : vector<2x8x1xf32> -> vector<2x8x1xf32>
    %104 = vector.broadcast %103 : vector<2x8x1xf32> to vector<2x8x8xf32>
    %105 = arith.mulf %100, %104 : vector<2x8x8xf32>
    %106 = arith.truncf %105 : vector<2x8x8xf32> to vector<2x8x8xbf16>
    %107 = arith.truncf %92 : vector<2x8x8xf32> to vector<2x8x8xbf16>
    "tpu.trace_start"() <{level = 10 : i32, message = "bqk,bkd->bqd"}> : () -> ()
    %cst_40 = arith.constant dense<0.000000e+00> : vector<2x8x8xf32>
    %108 = tpu.matmul %106, %107, %cst_40 {dimension_numbers = #tpu.dot_dimension_numbers<[2], [1], [1], [2], [0, 0, 0, 1, 1, 2], [0], [0]>} : vector<2x8x8xbf16>, vector<2x8x8xbf16>, vector<2x8x8xf32> -> vector<2x8x8xf32>
    "tpu.trace_stop"() : () -> ()
    %109 = vector.shape_cast %108 : vector<2x8x8xf32> to vector<16x8xf32>
    %110 = tpu.concatenate %49, %69, %89, %109 in 1 : vector<16x8xf32>, vector<16x8xf32>, vector<16x8xf32>, vector<16x8xf32> -> vector<16x32xf32>
    %111 = arith.truncf %110 : vector<16x32xf32> to vector<16x32xbf16>
    %c0_41 = arith.constant 0 : index
    %c0_42 = arith.constant 0 : index
    %c0_43 = arith.constant 0 : index
    %112 = vector.load %arg14[%c0_41, %c0_42, %c0_43] : memref<1x32x32xbf16, #tpu.memory_space<vmem>>, vector<1x32x32xbf16>
    %113 = vector.shape_cast %112 : vector<1x32x32xbf16> to vector<32x32xbf16>
    %cst_44 = arith.constant dense<0.000000e+00> : vector<16x32xf32>
    %114 = tpu.matmul %111, %113, %cst_44 {dimension_numbers = #tpu.dot_dimension_numbers<[1], [0], [0], [1], [0, 0, 1, 1], [], []>} : vector<16x32xbf16>, vector<32x32xbf16>, vector<16x32xf32> -> vector<16x32xf32>
    %c0_45 = arith.constant 0 : index
    %c0_46 = arith.constant 0 : index
    %c0_47 = arith.constant 0 : index
    %115 = vector.load %arg15[%c0_45, %c0_46, %c0_47] : memref<1x1x32xf32, #tpu.memory_space<vmem>>, vector<1x1x32xf32>
    %116 = vector.shape_cast %115 : vector<1x1x32xf32> to vector<1x32xf32>
    %117 = vector.broadcast %116 : vector<1x32xf32> to vector<16x32xf32>
    %118 = arith.addf %114, %117 : vector<16x32xf32>
    %119 = arith.addf %3, %118 : vector<16x32xf32>
    %c0_48 = arith.constant 0 : index
    %c0_49 = arith.constant 0 : index
    %c0_50 = arith.constant 0 : index
    %120 = vector.load %arg20[%c0_48, %c0_49, %c0_50] : memref<1x1x32xf32, #tpu.memory_space<vmem>>, vector<1x1x32xf32>
    %121 = vector.shape_cast %120 : vector<1x1x32xf32> to vector<1x32xf32>
    %c0_51 = arith.constant 0 : index
    %c0_52 = arith.constant 0 : index
    %c0_53 = arith.constant 0 : index
    %122 = vector.load %arg21[%c0_51, %c0_52, %c0_53] : memref<1x1x32xf32, #tpu.memory_space<vmem>>, vector<1x1x32xf32>
    %123 = vector.shape_cast %122 : vector<1x1x32xf32> to vector<1x32xf32>
    %cst_54 = arith.constant dense<0.000000e+00> : vector<16xf32>
    %124 = vector.multi_reduction <add>, %119, %cst_54 [1] : vector<16x32xf32> to vector<16xf32>
    %125 = vector.shape_cast %124 : vector<16xf32> to vector<16x1xf32>
    %cst_55 = arith.constant 3.200000e+01 : f32
    %126 = vector.broadcast %cst_55 : f32 to vector<16x1xf32>
    %127 = arith.divf %125, %126 : vector<16x1xf32>
    %128 = vector.broadcast %127 : vector<16x1xf32> to vector<16x32xf32>
    %129 = arith.subf %119, %128 : vector<16x32xf32>
    %130 = arith.mulf %129, %129 : vector<16x32xf32>
    %cst_56 = arith.constant dense<0.000000e+00> : vector<16xf32>
    %131 = vector.multi_reduction <add>, %130, %cst_56 [1] : vector<16x32xf32> to vector<16xf32>
    %132 = vector.shape_cast %131 : vector<16xf32> to vector<16x1xf32>
    %cst_57 = arith.constant 3.200000e+01 : f32
    %133 = vector.broadcast %cst_57 : f32 to vector<16x1xf32>
    %134 = arith.divf %132, %133 : vector<16x1xf32>
    %135 = vector.broadcast %127 : vector<16x1xf32> to vector<16x32xf32>
    %136 = arith.subf %119, %135 : vector<16x32xf32>
    %cst_58 = arith.constant 9.99999974E-6 : f32
    %137 = vector.broadcast %cst_58 : f32 to vector<16x1xf32>
    %138 = arith.addf %134, %137 : vector<16x1xf32>
    %139 = math.rsqrt %138 : vector<16x1xf32>
    %140 = vector.broadcast %139 : vector<16x1xf32> to vector<16x32xf32>
    %141 = arith.mulf %136, %140 : vector<16x32xf32>
    %142 = vector.broadcast %121 : vector<1x32xf32> to vector<16x32xf32>
    %143 = arith.mulf %141, %142 : vector<16x32xf32>
    %144 = vector.broadcast %123 : vector<1x32xf32> to vector<16x32xf32>
    %145 = arith.addf %143, %144 : vector<16x32xf32>
    %146 = arith.truncf %145 : vector<16x32xf32> to vector<16x32xbf16>
    %c0_59 = arith.constant 0 : index
    %c0_60 = arith.constant 0 : index
    %c0_61 = arith.constant 0 : index
    %147 = vector.load %arg16[%c0_59, %c0_60, %c0_61] : memref<1x32x2048xbf16, #tpu.memory_space<vmem>>, vector<1x32x2048xbf16>
    %148 = vector.shape_cast %147 : vector<1x32x2048xbf16> to vector<32x2048xbf16>
    %cst_62 = arith.constant dense<0.000000e+00> : vector<16x2048xf32>
    %149 = tpu.matmul %146, %148, %cst_62 {dimension_numbers = #tpu.dot_dimension_numbers<[1], [0], [0], [1], [0, 0, 1, 1], [], []>} : vector<16x32xbf16>, vector<32x2048xbf16>, vector<16x2048xf32> -> vector<16x2048xf32>
    %c0_63 = arith.constant 0 : index
    %c0_64 = arith.constant 0 : index
    %c0_65 = arith.constant 0 : index
    %150 = vector.load %arg17[%c0_63, %c0_64, %c0_65] : memref<1x1x2048xf32, #tpu.memory_space<vmem>>, vector<1x1x2048xf32>
    %151 = vector.shape_cast %150 : vector<1x1x2048xf32> to vector<1x2048xf32>
    %152 = vector.broadcast %151 : vector<1x2048xf32> to vector<16x2048xf32>
    %153 = arith.addf %149, %152 : vector<16x2048xf32>
    %cst_66 = arith.constant 0.000000e+00 : f32
    %154 = vector.broadcast %cst_66 : f32 to vector<16x2048xf32>
    %155 = arith.maximumf %153, %154 : vector<16x2048xf32>
    %156 = arith.truncf %155 : vector<16x2048xf32> to vector<16x2048xbf16>
    %c0_67 = arith.constant 0 : index
    %c0_68 = arith.constant 0 : index
    %c0_69 = arith.constant 0 : index
    %157 = vector.load %arg18[%c0_67, %c0_68, %c0_69] : memref<1x2048x32xbf16, #tpu.memory_space<vmem>>, vector<1x2048x32xbf16>
    %158 = vector.shape_cast %157 : vector<1x2048x32xbf16> to vector<2048x32xbf16>
    %cst_70 = arith.constant dense<0.000000e+00> : vector<16x32xf32>
    %159 = tpu.matmul %156, %158, %cst_70 {dimension_numbers = #tpu.dot_dimension_numbers<[1], [0], [0], [1], [0, 0, 1, 1], [], []>} : vector<16x2048xbf16>, vector<2048x32xbf16>, vector<16x32xf32> -> vector<16x32xf32>
    %c0_71 = arith.constant 0 : index
    %c0_72 = arith.constant 0 : index
    %c0_73 = arith.constant 0 : index
    %160 = vector.load %arg19[%c0_71, %c0_72, %c0_73] : memref<1x1x32xf32, #tpu.memory_space<vmem>>, vector<1x1x32xf32>
    %161 = vector.shape_cast %160 : vector<1x1x32xf32> to vector<1x32xf32>
    %162 = vector.broadcast %161 : vector<1x32xf32> to vector<16x32xf32>
    %163 = arith.addf %159, %162 : vector<16x32xf32>
    %164 = arith.addf %145, %163 : vector<16x32xf32>
    %c0_74 = arith.constant 0 : index
    %c0_75 = arith.constant 0 : index
    %c0_76 = arith.constant 0 : index
    %165 = vector.load %arg22[%c0_74, %c0_75, %c0_76] : memref<1x1x32xf32, #tpu.memory_space<vmem>>, vector<1x1x32xf32>
    %166 = vector.shape_cast %165 : vector<1x1x32xf32> to vector<1x32xf32>
    %c0_77 = arith.constant 0 : index
    %c0_78 = arith.constant 0 : index
    %c0_79 = arith.constant 0 : index
    %167 = vector.load %arg23[%c0_77, %c0_78, %c0_79] : memref<1x1x32xf32, #tpu.memory_space<vmem>>, vector<1x1x32xf32>
    %168 = vector.shape_cast %167 : vector<1x1x32xf32> to vector<1x32xf32>
    %cst_80 = arith.constant dense<0.000000e+00> : vector<16xf32>
    %169 = vector.multi_reduction <add>, %164, %cst_80 [1] : vector<16x32xf32> to vector<16xf32>
    %170 = vector.shape_cast %169 : vector<16xf32> to vector<16x1xf32>
    %cst_81 = arith.constant 3.200000e+01 : f32
    %171 = vector.broadcast %cst_81 : f32 to vector<16x1xf32>
    %172 = arith.divf %170, %171 : vector<16x1xf32>
    %173 = vector.broadcast %172 : vector<16x1xf32> to vector<16x32xf32>
    %174 = arith.subf %164, %173 : vector<16x32xf32>
    %175 = arith.mulf %174, %174 : vector<16x32xf32>
    %cst_82 = arith.constant dense<0.000000e+00> : vector<16xf32>
    %176 = vector.multi_reduction <add>, %175, %cst_82 [1] : vector<16x32xf32> to vector<16xf32>
    %177 = vector.shape_cast %176 : vector<16xf32> to vector<16x1xf32>
    %cst_83 = arith.constant 3.200000e+01 : f32
    %178 = vector.broadcast %cst_83 : f32 to vector<16x1xf32>
    %179 = arith.divf %177, %178 : vector<16x1xf32>
    %180 = vector.broadcast %172 : vector<16x1xf32> to vector<16x32xf32>
    %181 = arith.subf %164, %180 : vector<16x32xf32>
    %cst_84 = arith.constant 9.99999974E-6 : f32
    %182 = vector.broadcast %cst_84 : f32 to vector<16x1xf32>
    %183 = arith.addf %179, %182 : vector<16x1xf32>
    %184 = math.rsqrt %183 : vector<16x1xf32>
    %185 = vector.broadcast %184 : vector<16x1xf32> to vector<16x32xf32>
    %186 = arith.mulf %181, %185 : vector<16x32xf32>
    %187 = vector.broadcast %166 : vector<1x32xf32> to vector<16x32xf32>
    %188 = arith.mulf %186, %187 : vector<16x32xf32>
    %189 = vector.broadcast %168 : vector<1x32xf32> to vector<16x32xf32>
    %190 = arith.addf %188, %189 : vector<16x32xf32>
    %c0_85 = arith.constant 0 : index
    %c0_86 = arith.constant 0 : index
    %191 = vector.load %arg28[%c0_85, %c0_86] : memref<16x32xf32, #tpu.memory_space<vmem>>, vector<16x32xf32>
    tpu.vector_store %arg28[%c0_85, %c0_86], %190 {strides = array<i32>} : memref<16x32xf32, #tpu.memory_space<vmem>>, vector<16x32xf32>,
    %c1_i32 = arith.constant 1 : i32
    %192 = arith.cmpi eq, %arg1, %c1_i32 : i32
    %193 = arith.extui %192 : i1 to i32
    %c0_i32_87 = arith.constant 0 : i32
    %194 = arith.cmpi ne, %193, %c0_i32_87 : i32
    scf.if %194 {
      %195 = arith.truncf %190 : vector<16x32xf32> to vector<16x32xbf16>
      %c0_88 = arith.constant 0 : index
      %c0_89 = arith.constant 0 : index
      %196 = vector.load %arg24[%c0_88, %c0_89] : memref<32x128xbf16, #tpu.memory_space<vmem>>, vector<32x128xbf16>
      %cst_90 = arith.constant dense<0.000000e+00> : vector<16x128xf32>
      %197 = tpu.matmul %195, %196, %cst_90 {dimension_numbers = #tpu.dot_dimension_numbers<[1], [0], [0], [1], [0, 0, 1, 1], [], []>} : vector<16x32xbf16>, vector<32x128xbf16>, vector<16x128xf32> -> vector<16x128xf32>
      %c0_91 = arith.constant 0 : index
      %c0_92 = arith.constant 0 : index
      %198 = vector.load %arg25[%c0_91, %c0_92] : memref<1x128xf32, #tpu.memory_space<vmem>>, vector<1x128xf32>
      %199 = vector.broadcast %198 : vector<1x128xf32> to vector<16x128xf32>
      %200 = arith.addf %197, %199 : vector<16x128xf32>
      %cst_93 = arith.constant 0.000000e+00 : f32
      %201 = vector.broadcast %cst_93 : f32 to vector<16x128xf32>
      %202 = arith.subf %201, %200 : vector<16x128xf32>
      %203 = math.exp %202 : vector<16x128xf32>
      %cst_94 = arith.constant 1.000000e+00 : f32
      %204 = vector.broadcast %cst_94 : f32 to vector<16x128xf32>
      %205 = arith.addf %204, %203 : vector<16x128xf32>
      %cst_95 = arith.constant 1.000000e+00 : f32
      %206 = vector.broadcast %cst_95 : f32 to vector<16x128xf32>
      %207 = arith.divf %206, %205 : vector<16x128xf32>
      %208 = vector.shape_cast %207 : vector<16x128xf32> to vector<2x8x128xf32>
      %209 = arith.truncf %208 : vector<2x8x128xf32> to vector<2x8x128xbf16>
      %c0_96 = arith.constant 0 : index
      %c0_97 = arith.constant 0 : index
      %c0_98 = arith.constant 0 : index
      %210 = vector.load %arg26[%c0_96, %c0_97, %c0_98] : memref<2x8x128xbf16, #tpu.memory_space<vmem>>, vector<2x8x128xbf16>
      tpu.vector_store %arg26[%c0_96, %c0_97, %c0_98], %209 {strides = array<i32>} : memref<2x8x128xbf16, #tpu.memory_space<vmem>>, vector<2x8x128xbf16>,
      %211 = vector.extract_strided_slice %200 {offsets = [0, 0], sizes = [16, 10], strides = [1, 1]} : vector<16x128xf32> to vector<16x10xf32>
      %c0_99 = arith.constant 0 : index
      %c0_100 = arith.constant 0 : index
      %c0_101 = arith.constant 0 : index
      %212 = vector.load %arg6[%c0_99, %c0_100, %c0_101] : memref<2x8x10xf32, #tpu.memory_space<vmem>>, vector<2x8x10xf32>
      %213 = vector.shape_cast %212 : vector<2x8x10xf32> to vector<16x10xf32>
      %c0_102 = arith.constant 0 : index
      %c0_103 = arith.constant 0 : index
      %c0_104 = arith.constant 0 : index
      %214 = vector.load %arg3[%c0_102, %c0_103, %c0_104] : memref<2x8x1xf32, #tpu.memory_space<vmem>>, vector<2x8x1xf32>
      %215 = vector.shape_cast %214 : vector<2x8x1xf32> to vector<16x1xf32>
      %cst_105 = arith.constant 0.000000e+00 : f32
      %216 = vector.broadcast %cst_105 : f32 to vector<16x10xf32>
      %217 = arith.maximumf %211, %216 : vector<16x10xf32>
      %218 = arith.mulf %211, %213 : vector<16x10xf32>
      %219 = arith.subf %217, %218 : vector<16x10xf32>
      %220 = math.absf %211 : vector<16x10xf32>
      %cst_106 = arith.constant 0.000000e+00 : f32
      %221 = vector.broadcast %cst_106 : f32 to vector<16x10xf32>
      %222 = arith.subf %221, %220 : vector<16x10xf32>
      %223 = math.exp %222 : vector<16x10xf32>
      %cst_107 = arith.constant 1.000000e+00 : f32
      %224 = vector.broadcast %cst_107 : f32 to vector<16x10xf32>
      %225 = arith.addf %224, %223 : vector<16x10xf32>
      %226 = math.log %225 : vector<16x10xf32>
      %227 = arith.addf %219, %226 : vector<16x10xf32>
      %228 = vector.broadcast %215 : vector<16x1xf32> to vector<16x10xf32>
      %229 = arith.mulf %227, %228 : vector<16x10xf32>
      %230 = vector.shape_cast %229 : vector<16x10xf32> to vector<1x16x10xf32>
      %cst_108 = arith.constant dense<0.000000e+00> : vector<1xf32>
      %231 = vector.multi_reduction <add>, %230, %cst_108 [1, 2] : vector<1x16x10xf32> to vector<1xf32>
      %232 = vector.shape_cast %231 : vector<1xf32> to vector<1x1x1xf32>
      %233 = vector.extract %232[0, 0, 0] : f32 from vector<1x1x1xf32>
      %234 = vector.broadcast %233 : f32 to vector<1x1xf32>
      %c0_109 = arith.constant 0 : index
      %c0_110 = arith.constant 0 : index
      %c0_111 = arith.constant 0 : index
      %235 = vector.load %arg27[%c0_109, %c0_110, %c0_111] : memref<1x1x1xf32, #tpu.memory_space<vmem>>, vector<1x1x1xf32>
      %236 = vector.shape_cast %235 : vector<1x1x1xf32> to vector<1x1xf32>
      %237 = vector.shape_cast %234 : vector<1x1xf32> to vector<1x1x1xf32>
      tpu.vector_store %arg27[%c0_109, %c0_110, %c0_111], %237 {strides = array<i32>} : memref<1x1x1xf32, #tpu.memory_space<vmem>>, vector<1x1x1xf32>,
    } else {
    }
    return
  }
  func.func @transform_0(%arg0: i32, %arg1: i32) -> (i32, i32, i32) {
    %c0_i32 = arith.constant 0 : i32
    %c0_i32_0 = arith.constant 0 : i32
    %c0_i32_1 = arith.constant 0 : i32
    return %arg0, %c0_i32, %c0_i32_0 : i32, i32, i32
  }
  func.func @transform_1(%arg0: i32, %arg1: i32) -> (i32, i32, i32) {
    %c0_i32 = arith.constant 0 : i32
    %c0_i32_0 = arith.constant 0 : i32
    %c0_i32_1 = arith.constant 0 : i32
    return %arg0, %c0_i32, %c0_i32_0 : i32, i32, i32
  }
  func.func @transform_2(%arg0: i32, %arg1: i32) -> (i32, i32, i32) {
    %c0_i32 = arith.constant 0 : i32
    %c0_i32_0 = arith.constant 0 : i32
    %c0_i32_1 = arith.constant 0 : i32
    return %arg0, %c0_i32, %c0_i32_0 : i32, i32, i32
  }
  func.func @transform_3(%arg0: i32, %arg1: i32) -> (i32, i32, i32) {
    %c0_i32 = arith.constant 0 : i32
    %c0_i32_0 = arith.constant 0 : i32
    %c0_i32_1 = arith.constant 0 : i32
    return %arg0, %c0_i32, %c0_i32_0 : i32, i32, i32
  }
  func.func @transform_4(%arg0: i32, %arg1: i32) -> (i32, i32, i32) {
    %c0_i32 = arith.constant 0 : i32
    %c0_i32_0 = arith.constant 0 : i32
    %c0_i32_1 = arith.constant 0 : i32
    return %arg0, %c0_i32, %c0_i32_0 : i32, i32, i32
  }
  func.func @transform_5(%arg0: i32, %arg1: i32) -> (i32, i32) {
    %c0_i32 = arith.constant 0 : i32
    %c0_i32_0 = arith.constant 0 : i32
    %c0_i32_1 = arith.constant 0 : i32
    return %c0_i32, %c0_i32_0 : i32, i32
  }
  func.func @transform_6(%arg0: i32, %arg1: i32) -> (i32, i32, i32) {
    %c0_i32 = arith.constant 0 : i32
    %c0_i32_0 = arith.constant 0 : i32
    %c0_i32_1 = arith.constant 0 : i32
    return %arg1, %c0_i32, %c0_i32_0 : i32, i32, i32
  }
  func.func @transform_7(%arg0: i32, %arg1: i32) -> (i32, i32, i32) {
    %c0_i32 = arith.constant 0 : i32
    %c0_i32_0 = arith.constant 0 : i32
    %c0_i32_1 = arith.constant 0 : i32
    return %arg1, %c0_i32, %c0_i32_0 : i32, i32, i32
  }
  func.func @transform_8(%arg0: i32, %arg1: i32) -> (i32, i32, i32) {
    %c0_i32 = arith.constant 0 : i32
    %c0_i32_0 = arith.constant 0 : i32
    %c0_i32_1 = arith.constant 0 : i32
    return %arg1, %c0_i32, %c0_i32_0 : i32, i32, i32
  }
  func.func @transform_9(%arg0: i32, %arg1: i32) -> (i32, i32, i32) {
    %c0_i32 = arith.constant 0 : i32
    %c0_i32_0 = arith.constant 0 : i32
    %c0_i32_1 = arith.constant 0 : i32
    return %arg1, %c0_i32, %c0_i32_0 : i32, i32, i32
  }
  func.func @transform_10(%arg0: i32, %arg1: i32) -> (i32, i32, i32) {
    %c0_i32 = arith.constant 0 : i32
    %c0_i32_0 = arith.constant 0 : i32
    %c0_i32_1 = arith.constant 0 : i32
    return %arg1, %c0_i32, %c0_i32_0 : i32, i32, i32
  }
  func.func @transform_11(%arg0: i32, %arg1: i32) -> (i32, i32, i32) {
    %c0_i32 = arith.constant 0 : i32
    %c0_i32_0 = arith.constant 0 : i32
    %c0_i32_1 = arith.constant 0 : i32
    return %arg1, %c0_i32, %c0_i32_0 : i32, i32, i32
  }
  func.func @transform_12(%arg0: i32, %arg1: i32) -> (i32, i32, i32) {
    %c0_i32 = arith.constant 0 : i32
    %c0_i32_0 = arith.constant 0 : i32
    %c0_i32_1 = arith.constant 0 : i32
    return %arg1, %c0_i32, %c0_i32_0 : i32, i32, i32
  }
  func.func @transform_13(%arg0: i32, %arg1: i32) -> (i32, i32, i32) {
    %c0_i32 = arith.constant 0 : i32
    %c0_i32_0 = arith.constant 0 : i32
    %c0_i32_1 = arith.constant 0 : i32
    return %arg1, %c0_i32, %c0_i32_0 : i32, i32, i32
  }
  func.func @transform_14(%arg0: i32, %arg1: i32) -> (i32, i32, i32) {
    %c0_i32 = arith.constant 0 : i32
    %c0_i32_0 = arith.constant 0 : i32
    %c0_i32_1 = arith.constant 0 : i32
    return %arg1, %c0_i32, %c0_i32_0 : i32, i32, i32
  }
  func.func @transform_15(%arg0: i32, %arg1: i32) -> (i32, i32, i32) {
    %c0_i32 = arith.constant 0 : i32
    %c0_i32_0 = arith.constant 0 : i32
    %c0_i32_1 = arith.constant 0 : i32
    return %arg1, %c0_i32, %c0_i32_0 : i32, i32, i32
  }
  func.func @transform_16(%arg0: i32, %arg1: i32) -> (i32, i32, i32) {
    %c0_i32 = arith.constant 0 : i32
    %c0_i32_0 = arith.constant 0 : i32
    %c0_i32_1 = arith.constant 0 : i32
    return %arg1, %c0_i32, %c0_i32_0 : i32, i32, i32
  }
  func.func @transform_17(%arg0: i32, %arg1: i32) -> (i32, i32, i32) {
    %c0_i32 = arith.constant 0 : i32
    %c0_i32_0 = arith.constant 0 : i32
    %c0_i32_1 = arith.constant 0 : i32
    return %arg1, %c0_i32, %c0_i32_0 : i32, i32, i32
  }
  func.func @transform_18(%arg0: i32, %arg1: i32) -> (i32, i32, i32) {
    %c0_i32 = arith.constant 0 : i32
    %c0_i32_0 = arith.constant 0 : i32
    %c0_i32_1 = arith.constant 0 : i32
    return %arg1, %c0_i32, %c0_i32_0 : i32, i32, i32
  }
  func.func @transform_19(%arg0: i32, %arg1: i32) -> (i32, i32, i32) {
    %c0_i32 = arith.constant 0 : i32
    %c0_i32_0 = arith.constant 0 : i32
    %c0_i32_1 = arith.constant 0 : i32
    return %arg1, %c0_i32, %c0_i32_0 : i32, i32, i32
  }
  func.func @transform_20(%arg0: i32, %arg1: i32) -> (i32, i32, i32) {
    %c0_i32 = arith.constant 0 : i32
    %c0_i32_0 = arith.constant 0 : i32
    %c0_i32_1 = arith.constant 0 : i32
    return %arg1, %c0_i32, %c0_i32_0 : i32, i32, i32
  }
  func.func @transform_21(%arg0: i32, %arg1: i32) -> (i32, i32, i32) {
    %c0_i32 = arith.constant 0 : i32
    %c0_i32_0 = arith.constant 0 : i32
    %c0_i32_1 = arith.constant 0 : i32
    return %arg1, %c0_i32, %c0_i32_0 : i32, i32, i32
  }
  func.func @transform_22(%arg0: i32, %arg1: i32) -> (i32, i32) {
    %c0_i32 = arith.constant 0 : i32
    %c0_i32_0 = arith.constant 0 : i32
    %c0_i32_1 = arith.constant 0 : i32
    return %c0_i32, %c0_i32_0 : i32, i32
  }
  func.func @transform_23(%arg0: i32, %arg1: i32) -> (i32, i32) {
    %c0_i32 = arith.constant 0 : i32
    %c0_i32_0 = arith.constant 0 : i32
    %c0_i32_1 = arith.constant 0 : i32
    return %c0_i32, %c0_i32_0 : i32, i32
  }
  func.func @transform_24(%arg0: i32, %arg1: i32) -> (i32, i32, i32) {
    %c0_i32 = arith.constant 0 : i32
    %c0_i32_0 = arith.constant 0 : i32
    %c0_i32_1 = arith.constant 0 : i32
    return %arg0, %c0_i32, %c0_i32_0 : i32, i32, i32
  }
  func.func @transform_25(%arg0: i32, %arg1: i32) -> (i32, i32, i32) {
    %c0_i32 = arith.constant 0 : i32
    %c0_i32_0 = arith.constant 0 : i32
    %c0_i32_1 = arith.constant 0 : i32
    return %arg0, %c0_i32, %c0_i32_0 : i32, i32, i32
  }
}

</mosaic_0001>

<llo_original>
// kernel: tpu_custom_call.1
$region0: #{tpu_custom_call.1}
  #allocation0 [shape = 'u32[]', space=smem, size = 0x4, offset = 0x4, fixed_abs, tag = 'smem constant byte address 0x4 - core index']
  #allocation1 [shape = 'u32[144,128]{1,0:T(1,128)}', space=vmem, size = 0x12000, scoped, tag = 'internal scratch']
  #allocation2 [shape = 'f32[16,32]{1,0:T(8,128)}', space=vmem, size = 0x2000, scoped, tag = 'scratch operand']
  %s0 = inlined_call_operand.vmem [shape: f32[2,1,8], index: 0, kind: input, shape index: {}]
  %s1 = inlined_call_operand.vmem [shape: f32[2,8,1], index: 1, kind: input, shape index: {}]
  %s2 = inlined_call_operand.vmem [shape: f32[2,8,1], index: 2, kind: input, shape index: {}]
  %s3 = inlined_call_operand.vmem [shape: f32[2,8,32], index: 3, kind: input, shape index: {}]
  %s4 = inlined_call_operand.vmem [shape: f32[2,8,10], index: 4, kind: input, shape index: {}]
  %s5 = inlined_call_operand.vmem [shape: f32[2,32], index: 5, kind: input, shape index: {}]
  %s6 = inlined_call_operand.vmem [shape: bf16[2,32,32], index: 6, kind: input, shape index: {}]
  %s7 = inlined_call_operand.vmem [shape: bf16[2,32,32], index: 7, kind: input, shape index: {}]
  %s8 = inlined_call_operand.vmem [shape: bf16[2,32,32], index: 8, kind: input, shape index: {}]
  %s9 = inlined_call_operand.vmem [shape: f32[2,1,32], index: 9, kind: input, shape index: {}]
  %s10 = inlined_call_operand.vmem [shape: f32[2,1,32], index: 10, kind: input, shape index: {}]
  %s11 = inlined_call_operand.vmem [shape: f32[2,1,32], index: 11, kind: input, shape index: {}]
  %s12 = inlined_call_operand.vmem [shape: bf16[2,32,32], index: 12, kind: input, shape index: {}]
  %s13 = inlined_call_operand.vmem [shape: f32[2,1,32], index: 13, kind: input, shape index: {}]
  %s14 = inlined_call_operand.vmem [shape: bf16[2,32,2048], index: 14, kind: input, shape index: {}]
  %s15 = inlined_call_operand.vmem [shape: f32[2,1,2048], index: 15, kind: input, shape index: {}]
  %s16 = inlined_call_operand.vmem [shape: bf16[2,2048,32], index: 16, kind: input, shape index: {}]
  %s17 = inlined_call_operand.vmem [shape: f32[2,1,32], index: 17, kind: input, shape index: {}]
  %s18 = inlined_call_operand.vmem [shape: f32[2,1,32], index: 18, kind: input, shape index: {}]
  %s19 = inlined_call_operand.vmem [shape: f32[2,1,32], index: 19, kind: input, shape index: {}]
  %s20 = inlined_call_operand.vmem [shape: f32[2,1,32], index: 20, kind: input, shape index: {}]
  %s21 = inlined_call_operand.vmem [shape: f32[2,1,32], index: 21, kind: input, shape index: {}]
  %s22 = inlined_call_operand.vmem [shape: bf16[32,128], index: 22, kind: input, shape index: {}]
  %s23 = inlined_call_operand.vmem [shape: f32[1,128], index: 23, kind: input, shape index: {}]
  %s24 = inlined_call_operand.hbm [shape: bf16[2,8,128], index: 24, kind: output, shape index: {0}]
  %s25 = inlined_call_operand.hbm [shape: f32[1,1,1], index: 25, kind: output, shape index: {1}]
  %26 = xla_tuple %s24, %s25
  %s27 = sld [smem:[#allocation0]]
  $region145: #{tpu_custom_call.1} parent=0
    _
  %s29 = ssub.s32 1, %s27
  %s30 = scalar_select 0, %s29, %s27
  $region1: #{tpu_custom_call.1} parent=0
    #allocation3 [shape = 'u8[4096]{0}', space=vmem, size = 0x1000, scoped, tag = 'output window, operand 0, single buffered']
    #allocation4 [shape = 's32[2]{0}', space=sflag, size = 0x8, scoped, tag = 'scoped memory for tpu_custom_call.1']
    #allocation5 [shape = 'u8[512]{0}', space=vmem, size = 0x400, scoped, tag = 'output window, operand 1, single buffered']
    #allocation6 [shape = 's32[1]{0}', space=sflag, size = 0x4, scoped, tag = 'scoped memory for tpu_custom_call.1']
    %31 = vsyncpa [#allocation4], 0
    %32 = vsyncpa [#allocation6], 0
    loop: start=0, step=1, limit=4
    $region2: #{tpu_custom_call.1} parent=1 // loop_pre_header
      _
    $region3: #{tpu_custom_call.1} parent=1 // loop_header
      %s34 = sphi 0, %s38
      %p35 = scmp.ge.s32.totalorder %s34, 4
      %s41 = sphi 0, %s53
      %s42 = sphi 0, %s49
      %s43 = sphi 0, %s41
      %s44 = sphi 0, %s42
      %s45 = sphi 0, %s43
      %s46 = sphi 0, %s44
      %s56 = sphi 0, %s58
      %s59 = sphi 0, %s56
      %s60 = sphi 0, %s59
      %s76 = sphi 0, %s60
      %s82 = sphi 0, %s84
      %s85 = sphi 0, %s82
      %s86 = sphi 0, %s85
      %s102 = sphi 0, %s86
      %s108 = sphi 0, %s110
      %s111 = sphi 0, %s108
      %s112 = sphi 0, %s111
      %s128 = sphi 0, %s112
      %s134 = sphi 0, %s136
      %s137 = sphi 0, %s134
      %s138 = sphi 0, %s137
      %s154 = sphi 0, %s138
      %s160 = sphi 0, %s162
      %s163 = sphi 0, %s160
      %s164 = sphi 0, %s163
      %s180 = sphi 0, %s164
      %s184 = sphi 0, %s184
      %s186 = sphi 0, %s184
      %s187 = sphi 0, %s186
      %s201 = sphi 0, %s187
      %s207 = sphi 0, %s209
      %s210 = sphi 0, %s207
      %s211 = sphi 0, %s210
      %s227 = sphi 0, %s211
      %s233 = sphi 0, %s235
      %s236 = sphi 0, %s233
      %s237 = sphi 0, %s236
      %s253 = sphi 0, %s237
      %s259 = sphi 0, %s261
      %s262 = sphi 0, %s259
      %s263 = sphi 0, %s262
      %s279 = sphi 0, %s263
      %s285 = sphi 0, %s287
      %s288 = sphi 0, %s285
      %s289 = sphi 0, %s288
      %s305 = sphi 0, %s289
      %s311 = sphi 0, %s313
      %s314 = sphi 0, %s311
      %s315 = sphi 0, %s314
      %s331 = sphi 0, %s315
      %s337 = sphi 0, %s339
      %s340 = sphi 0, %s337
      %s341 = sphi 0, %s340
      %s357 = sphi 0, %s341
      %s363 = sphi 0, %s365
      %s366 = sphi 0, %s363
      %s367 = sphi 0, %s366
      %s383 = sphi 0, %s367
      %s389 = sphi 0, %s391
      %s392 = sphi 0, %s389
      %s393 = sphi 0, %s392
      %s409 = sphi 0, %s393
      %s415 = sphi 0, %s417
      %s418 = sphi 0, %s415
      %s419 = sphi 0, %s418
      %s435 = sphi 0, %s419
      %s441 = sphi 0, %s443
      %s444 = sphi 0, %s441
      %s445 = sphi 0, %s444
      %s461 = sphi 0, %s445
      %s467 = sphi 0, %s469
      %s470 = sphi 0, %s467
      %s471 = sphi 0, %s470
      %s487 = sphi 0, %s471
      %s493 = sphi 0, %s495
      %s496 = sphi 0, %s493
      %s497 = sphi 0, %s496
      %s513 = sphi 0, %s497
      %s519 = sphi 0, %s521
      %s522 = sphi 0, %s519
      %s523 = sphi 0, %s522
      %s539 = sphi 0, %s523
      %s545 = sphi 0, %s547
      %s548 = sphi 0, %s545
      %s549 = sphi 0, %s548
      %s565 = sphi 0, %s549
      %s571 = sphi 0, %s573
      %s574 = sphi 0, %s571
      %s575 = sphi 0, %s574
      %s591 = sphi 0, %s575
      %s597 = sphi 0, %s599
      %s600 = sphi 0, %s597
      %s601 = sphi 0, %s600
      %s617 = sphi 0, %s601
      %s621 = sphi 0, %s621
      %s623 = sphi 0, %s621
      %s624 = sphi 0, %s623
      %s638 = sphi 0, %s624
      %s642 = sphi 0, %s642
      %s644 = sphi 0, %s642
      %s645 = sphi 0, %s644
      %s659 = sphi 0, %s645
      %s665 = sphi 0, %s667
      %s668 = sphi 0, %s665
      %s669 = sphi 0, %s668
      %s685 = sphi 0, %s669
      %s691 = sphi 0, %s693
      %s694 = sphi 0, %s691
      %s695 = sphi 0, %s694
      %s711 = sphi 0, %s695
    $region4: #{tpu_custom_call.1} parent=1 // loop_header_branch
      %37 = sbr.rel (%p35) target = $region8
    $region5: #{tpu_custom_call.1} parent=1 // loop_body
      %s39 = ssub.s32 %s34, 1
      %s40 = ssub.s32 %s34, 2
      %s47 = sadd.s32 1, %s42
      %p48 = scmp.ge.s32.totalorder %s47, 2
      %s49 = scalar_select %p48, 0, %s47
      %s50 = sadd.s32 1, %s41
      %s51 = scalar_select %p48, %s50, %s41
      %p52 = scmp.ge.s32.totalorder %s51, 1
      %s53 = scalar_select %p52, 0, %s51
      %s54 = ssub.s32 %s41, %s53
      %p55 = scmp.eq.s32.totalorder %s54, 0
      %s57 = sadd.s32 %s56, 1
      %s58 = scalar_select %p55, %s56, %s57
      %p61 = pneg %p55
      %p62 = scmp.eq.s32.totalorder %s34, 1
      %p63 = por %p61, %p62
      %p64 = scmp.ne.s32.totalorder %s56, %s59
      %p65 = scmp.eq.s32.totalorder %s34, 0
      %p66 = por %p64, %p65
      %p67 = scmp.ne.s32.totalorder %s56, %s59
      %p68 = scmp.eq.s32.totalorder %s39, 1
      %p69 = por %p67, %p68
      %p70 = scmp.ne.s32.totalorder %s59, %s60
      %p71 = scmp.eq.s32.totalorder %s39, 0
      %p72 = por %p70, %p71
      %p73 = scmp.ne.s32.totalorder %s59, %s60
      %p74 = scmp.eq.s32.totalorder %s40, 1
      %p75 = por %p73, %p74
      %p77 = scmp.ne.s32.totalorder %s60, %s76
      %p78 = scmp.eq.s32.totalorder %s40, 0
      %p79 = por %p77, %p78
      %s80 = ssub.s32 %s41, %s53
      %p81 = scmp.eq.s32.totalorder %s80, 0
      %s83 = sadd.s32 %s82, 1
      %s84 = scalar_select %p81, %s82, %s83
      %p87 = pneg %p81
      %p88 = scmp.eq.s32.totalorder %s34, 1
      %p89 = por %p87, %p88
      %p90 = scmp.ne.s32.totalorder %s82, %s85
      %p91 = scmp.eq.s32.totalorder %s34, 0
      %p92 = por %p90, %p91
      %p93 = scmp.ne.s32.totalorder %s82, %s85
      %p94 = scmp.eq.s32.totalorder %s39, 1
      %p95 = por %p93, %p94
      %p96 = scmp.ne.s32.totalorder %s85, %s86
      %p97 = scmp.eq.s32.totalorder %s39, 0
      %p98 = por %p96, %p97
      %p99 = scmp.ne.s32.totalorder %s85, %s86
      %p100 = scmp.eq.s32.totalorder %s40, 1
      %p101 = por %p99, %p100
      %p103 = scmp.ne.s32.totalorder %s86, %s102
      %p104 = scmp.eq.s32.totalorder %s40, 0
      %p105 = por %p103, %p104
      %s106 = ssub.s32 %s41, %s53
      %p107 = scmp.eq.s32.totalorder %s106, 0
      %s109 = sadd.s32 %s108, 1
      %s110 = scalar_select %p107, %s108, %s109
      %p113 = pneg %p107
      %p114 = scmp.eq.s32.totalorder %s34, 1
      %p115 = por %p113, %p114
      %p116 = scmp.ne.s32.totalorder %s108, %s111
      %p117 = scmp.eq.s32.totalorder %s34, 0
      %p118 = por %p116, %p117
      %p119 = scmp.ne.s32.totalorder %s108, %s111
      %p120 = scmp.eq.s32.totalorder %s39, 1
      %p121 = por %p119, %p120
      %p122 = scmp.ne.s32.totalorder %s111, %s112
      %p123 = scmp.eq.s32.totalorder %s39, 0
      %p124 = por %p122, %p123
      %p125 = scmp.ne.s32.totalorder %s111, %s112
      %p126 = scmp.eq.s32.totalorder %s40, 1
      %p127 = por %p125, %p126
      %p129 = scmp.ne.s32.totalorder %s112, %s128
      %p130 = scmp.eq.s32.totalorder %s40, 0
      %p131 = por %p129, %p130
      %s132 = ssub.s32 %s41, %s53
      %p133 = scmp.eq.s32.totalorder %s132, 0
      %s135 = sadd.s32 %s134, 1
      %s136 = scalar_select %p133, %s134, %s135
      %p139 = pneg %p133
      %p140 = scmp.eq.s32.totalorder %s34, 1
      %p141 = por %p139, %p140
      %p142 = scmp.ne.s32.totalorder %s134, %s137
      %p143 = scmp.eq.s32.totalorder %s34, 0
      %p144 = por %p142, %p143
      %p145 = scmp.ne.s32.totalorder %s134, %s137
      %p146 = scmp.eq.s32.totalorder %s39, 1
      %p147 = por %p145, %p146
      %p148 = scmp.ne.s32.totalorder %s137, %s138
      %p149 = scmp.eq.s32.totalorder %s39, 0
      %p150 = por %p148, %p149
      %p151 = scmp.ne.s32.totalorder %s137, %s138
      %p152 = scmp.eq.s32.totalorder %s40, 1
      %p153 = por %p151, %p152
      %p155 = scmp.ne.s32.totalorder %s138, %s154
      %p156 = scmp.eq.s32.totalorder %s40, 0
      %p157 = por %p155, %p156
      %s158 = ssub.s32 %s41, %s53
      %p159 = scmp.eq.s32.totalorder %s158, 0
      %s161 = sadd.s32 %s160, 1
      %s162 = scalar_select %p159, %s160, %s161
      %p165 = pneg %p159
      %p166 = scmp.eq.s32.totalorder %s34, 1
      %p167 = por %p165, %p166
      %p168 = scmp.ne.s32.totalorder %s160, %s163
      %p169 = scmp.eq.s32.totalorder %s34, 0
      %p170 = por %p168, %p169
      %p171 = scmp.ne.s32.totalorder %s160, %s163
      %p172 = scmp.eq.s32.totalorder %s39, 1
      %p173 = por %p171, %p172
      %p174 = scmp.ne.s32.totalorder %s163, %s164
      %p175 = scmp.eq.s32.totalorder %s39, 0
      %p176 = por %p174, %p175
      %p177 = scmp.ne.s32.totalorder %s163, %s164
      %p178 = scmp.eq.s32.totalorder %s40, 1
      %p179 = por %p177, %p178
      %p181 = scmp.ne.s32.totalorder %s164, %s180
      %p182 = scmp.eq.s32.totalorder %s40, 0
      %p183 = por %p181, %p182
      %s185 = sadd.s32 %s184, 1
      %p188 = scmp.eq.s32.totalorder %s34, 1
      %p189 = scmp.ne.s32.totalorder %s184, %s186
      %p190 = scmp.eq.s32.totalorder %s34, 0
      %p191 = por %p189, %p190
      %p192 = scmp.ne.s32.totalorder %s184, %s186
      %p193 = scmp.eq.s32.totalorder %s39, 1
      %p194 = por %p192, %p193
      %p195 = scmp.ne.s32.totalorder %s186, %s187
      %p196 = scmp.eq.s32.totalorder %s39, 0
      %p197 = por %p195, %p196
      %p198 = scmp.ne.s32.totalorder %s186, %s187
      %p199 = scmp.eq.s32.totalorder %s40, 1
      %p200 = por %p198, %p199
      %p202 = scmp.ne.s32.totalorder %s187, %s201
      %p203 = scmp.eq.s32.totalorder %s40, 0
      %p204 = por %p202, %p203
      %s205 = ssub.s32 %s42, %s49
      %p206 = scmp.eq.s32.totalorder %s205, 0
      %s208 = sadd.s32 %s207, 1
      %s209 = scalar_select %p206, %s207, %s208
      %p212 = pneg %p206
      %p213 = scmp.eq.s32.totalorder %s34, 1
      %p214 = por %p212, %p213
      %p215 = scmp.ne.s32.totalorder %s207, %s210
      %p216 = scmp.eq.s32.totalorder %s34, 0
      %p217 = por %p215, %p216
      %p218 = scmp.ne.s32.totalorder %s207, %s210
      %p219 = scmp.eq.s32.totalorder %s39, 1
      %p220 = por %p218, %p219
      %p221 = scmp.ne.s32.totalorder %s210, %s211
      %p222 = scmp.eq.s32.totalorder %s39, 0
      %p223 = por %p221, %p222
      %p224 = scmp.ne.s32.totalorder %s210, %s211
      %p225 = scmp.eq.s32.totalorder %s40, 1
      %p226 = por %p224, %p225
      %p228 = scmp.ne.s32.totalorder %s211, %s227
      %p229 = scmp.eq.s32.totalorder %s40, 0
      %p230 = por %p228, %p229
      %s231 = ssub.s32 %s42, %s49
      %p232 = scmp.eq.s32.totalorder %s231, 0
      %s234 = sadd.s32 %s233, 1
      %s235 = scalar_select %p232, %s233, %s234
      %p238 = pneg %p232
      %p239 = scmp.eq.s32.totalorder %s34, 1
      %p240 = por %p238, %p239
      %p241 = scmp.ne.s32.totalorder %s233, %s236
      %p242 = scmp.eq.s32.totalorder %s34, 0
      %p243 = por %p241, %p242
      %p244 = scmp.ne.s32.totalorder %s233, %s236
      %p245 = scmp.eq.s32.totalorder %s39, 1
      %p246 = por %p244, %p245
      %p247 = scmp.ne.s32.totalorder %s236, %s237
      %p248 = scmp.eq.s32.totalorder %s39, 0
      %p249 = por %p247, %p248
      %p250 = scmp.ne.s32.totalorder %s236, %s237
      %p251 = scmp.eq.s32.totalorder %s40, 1
      %p252 = por %p250, %p251
      %p254 = scmp.ne.s32.totalorder %s237, %s253
      %p255 = scmp.eq.s32.totalorder %s40, 0
      %p256 = por %p254, %p255
      %s257 = ssub.s32 %s42, %s49
      %p258 = scmp.eq.s32.totalorder %s257, 0
      %s260 = sadd.s32 %s259, 1
      %s261 = scalar_select %p258, %s259, %s260
      %p264 = pneg %p258
      %p265 = scmp.eq.s32.totalorder %s34, 1
      %p266 = por %p264, %p265
      %p267 = scmp.ne.s32.totalorder %s259, %s262
      %p268 = scmp.eq.s32.totalorder %s34, 0
      %p269 = por %p267, %p268
      %p270 = scmp.ne.s32.totalorder %s259, %s262
      %p271 = scmp.eq.s32.totalorder %s39, 1
      %p272 = por %p270, %p271
      %p273 = scmp.ne.s32.totalorder %s262, %s263
      %p274 = scmp.eq.s32.totalorder %s39, 0
      %p275 = por %p273, %p274
      %p276 = scmp.ne.s32.totalorder %s262, %s263
      %p277 = scmp.eq.s32.totalorder %s40, 1
      %p278 = por %p276, %p277
      %p280 = scmp.ne.s32.totalorder %s263, %s279
      %p281 = scmp.eq.s32.totalorder %s40, 0
      %p282 = por %p280, %p281
      %s283 = ssub.s32 %s42, %s49
      %p284 = scmp.eq.s32.totalorder %s283, 0
      %s286 = sadd.s32 %s285, 1
      %s287 = scalar_select %p284, %s285, %s286
      %p290 = pneg %p284
      %p291 = scmp.eq.s32.totalorder %s34, 1
      %p292 = por %p290, %p291
      %p293 = scmp.ne.s32.totalorder %s285, %s288
      %p294 = scmp.eq.s32.totalorder %s34, 0
      %p295 = por %p293, %p294
      %p296 = scmp.ne.s32.totalorder %s285, %s288
      %p297 = scmp.eq.s32.totalorder %s39, 1
      %p298 = por %p296, %p297
      %p299 = scmp.ne.s32.totalorder %s288, %s289
      %p300 = scmp.eq.s32.totalorder %s39, 0
      %p301 = por %p299, %p300
      %p302 = scmp.ne.s32.totalorder %s288, %s289
      %p303 = scmp.eq.s32.totalorder %s40, 1
      %p304 = por %p302, %p303
      %p306 = scmp.ne.s32.totalorder %s289, %s305
      %p307 = scmp.eq.s32.totalorder %s40, 0
      %p308 = por %p306, %p307
      %s309 = ssub.s32 %s42, %s49
      %p310 = scmp.eq.s32.totalorder %s309, 0
      %s312 = sadd.s32 %s311, 1
      %s313 = scalar_select %p310, %s311, %s312
      %p316 = pneg %p310
      %p317 = scmp.eq.s32.totalorder %s34, 1
      %p318 = por %p316, %p317
      %p319 = scmp.ne.s32.totalorder %s311, %s314
      %p320 = scmp.eq.s32.totalorder %s34, 0
      %p321 = por %p319, %p320
      %p322 = scmp.ne.s32.totalorder %s311, %s314
      %p323 = scmp.eq.s32.totalorder %s39, 1
      %p324 = por %p322, %p323
      %p325 = scmp.ne.s32.totalorder %s314, %s315
      %p326 = scmp.eq.s32.totalorder %s39, 0
      %p327 = por %p325, %p326
      %p328 = scmp.ne.s32.totalorder %s314, %s315
      %p329 = scmp.eq.s32.totalorder %s40, 1
      %p330 = por %p328, %p329
      %p332 = scmp.ne.s32.totalorder %s315, %s331
      %p333 = scmp.eq.s32.totalorder %s40, 0
      %p334 = por %p332, %p333
      %s335 = ssub.s32 %s42, %s49
      %p336 = scmp.eq.s32.totalorder %s335, 0
      %s338 = sadd.s32 %s337, 1
      %s339 = scalar_select %p336, %s337, %s338
      %p342 = pneg %p336
      %p343 = scmp.eq.s32.totalorder %s34, 1
      %p344 = por %p342, %p343
      %p345 = scmp.ne.s32.totalorder %s337, %s340
      %p346 = scmp.eq.s32.totalorder %s34, 0
      %p347 = por %p345, %p346
      %p348 = scmp.ne.s32.totalorder %s337, %s340
      %p349 = scmp.eq.s32.totalorder %s39, 1
      %p350 = por %p348, %p349
      %p351 = scmp.ne.s32.totalorder %s340, %s341
      %p352 = scmp.eq.s32.totalorder %s39, 0
      %p353 = por %p351, %p352
      %p354 = scmp.ne.s32.totalorder %s340, %s341
      %p355 = scmp.eq.s32.totalorder %s40, 1
      %p356 = por %p354, %p355
      %p358 = scmp.ne.s32.totalorder %s341, %s357
      %p359 = scmp.eq.s32.totalorder %s40, 0
      %p360 = por %p358, %p359
      %s361 = ssub.s32 %s42, %s49
      %p362 = scmp.eq.s32.totalorder %s361, 0
      %s364 = sadd.s32 %s363, 1
      %s365 = scalar_select %p362, %s363, %s364
      %p368 = pneg %p362
      %p369 = scmp.eq.s32.totalorder %s34, 1
      %p370 = por %p368, %p369
      %p371 = scmp.ne.s32.totalorder %s363, %s366
      %p372 = scmp.eq.s32.totalorder %s34, 0
      %p373 = por %p371, %p372
      %p374 = scmp.ne.s32.totalorder %s363, %s366
      %p375 = scmp.eq.s32.totalorder %s39, 1
      %p376 = por %p374, %p375
      %p377 = scmp.ne.s32.totalorder %s366, %s367
      %p378 = scmp.eq.s32.totalorder %s39, 0
      %p379 = por %p377, %p378
      %p380 = scmp.ne.s32.totalorder %s366, %s367
      %p381 = scmp.eq.s32.totalorder %s40, 1
      %p382 = por %p380, %p381
      %p384 = scmp.ne.s32.totalorder %s367, %s383
      %p385 = scmp.eq.s32.totalorder %s40, 0
      %p386 = por %p384, %p385
      %s387 = ssub.s32 %s42, %s49
      %p388 = scmp.eq.s32.totalorder %s387, 0
      %s390 = sadd.s32 %s389, 1
      %s391 = scalar_select %p388, %s389, %s390
      %p394 = pneg %p388
      %p395 = scmp.eq.s32.totalorder %s34, 1
      %p396 = por %p394, %p395
      %p397 = scmp.ne.s32.totalorder %s389, %s392
      %p398 = scmp.eq.s32.totalorder %s34, 0
      %p399 = por %p397, %p398
      %p400 = scmp.ne.s32.totalorder %s389, %s392
      %p401 = scmp.eq.s32.totalorder %s39, 1
      %p402 = por %p400, %p401
      %p403 = scmp.ne.s32.totalorder %s392, %s393
      %p404 = scmp.eq.s32.totalorder %s39, 0
      %p405 = por %p403, %p404
      %p406 = scmp.ne.s32.totalorder %s392, %s393
      %p407 = scmp.eq.s32.totalorder %s40, 1
      %p408 = por %p406, %p407
      %p410 = scmp.ne.s32.totalorder %s393, %s409
      %p411 = scmp.eq.s32.totalorder %s40, 0
      %p412 = por %p410, %p411
      %s413 = ssub.s32 %s42, %s49
      %p414 = scmp.eq.s32.totalorder %s413, 0
      %s416 = sadd.s32 %s415, 1
      %s417 = scalar_select %p414, %s415, %s416
      %p420 = pneg %p414
      %p421 = scmp.eq.s32.totalorder %s34, 1
      %p422 = por %p420, %p421
      %p423 = scmp.ne.s32.totalorder %s415, %s418
      %p424 = scmp.eq.s32.totalorder %s34, 0
      %p425 = por %p423, %p424
      %p426 = scmp.ne.s32.totalorder %s415, %s418
      %p427 = scmp.eq.s32.totalorder %s39, 1
      %p428 = por %p426, %p427
      %p429 = scmp.ne.s32.totalorder %s418, %s419
      %p430 = scmp.eq.s32.totalorder %s39, 0
      %p431 = por %p429, %p430
      %p432 = scmp.ne.s32.totalorder %s418, %s419
      %p433 = scmp.eq.s32.totalorder %s40, 1
      %p434 = por %p432, %p433
      %p436 = scmp.ne.s32.totalorder %s419, %s435
      %p437 = scmp.eq.s32.totalorder %s40, 0
      %p438 = por %p436, %p437
      %s439 = ssub.s32 %s42, %s49
      %p440 = scmp.eq.s32.totalorder %s439, 0
      %s442 = sadd.s32 %s441, 1
      %s443 = scalar_select %p440, %s441, %s442
      %p446 = pneg %p440
      %p447 = scmp.eq.s32.totalorder %s34, 1
      %p448 = por %p446, %p447
      %p449 = scmp.ne.s32.totalorder %s441, %s444
      %p450 = scmp.eq.s32.totalorder %s34, 0
      %p451 = por %p449, %p450
      %p452 = scmp.ne.s32.totalorder %s441, %s444
      %p453 = scmp.eq.s32.totalorder %s39, 1
      %p454 = por %p452, %p453
      %p455 = scmp.ne.s32.totalorder %s444, %s445
      %p456 = scmp.eq.s32.totalorder %s39, 0
      %p457 = por %p455, %p456
      %p458 = scmp.ne.s32.totalorder %s444, %s445
      %p459 = scmp.eq.s32.totalorder %s40, 1
      %p460 = por %p458, %p459
      %p462 = scmp.ne.s32.totalorder %s445, %s461
      %p463 = scmp.eq.s32.totalorder %s40, 0
      %p464 = por %p462, %p463
      %s465 = ssub.s32 %s42, %s49
      %p466 = scmp.eq.s32.totalorder %s465, 0
      %s468 = sadd.s32 %s467, 1
      %s469 = scalar_select %p466, %s467, %s468
      %p472 = pneg %p466
      %p473 = scmp.eq.s32.totalorder %s34, 1
      %p474 = por %p472, %p473
      %p475 = scmp.ne.s32.totalorder %s467, %s470
      %p476 = scmp.eq.s32.totalorder %s34, 0
      %p477 = por %p475, %p476
      %p478 = scmp.ne.s32.totalorder %s467, %s470
      %p479 = scmp.eq.s32.totalorder %s39, 1
      %p480 = por %p478, %p479
      %p481 = scmp.ne.s32.totalorder %s470, %s471
      %p482 = scmp.eq.s32.totalorder %s39, 0
      %p483 = por %p481, %p482
      %p484 = scmp.ne.s32.totalorder %s470, %s471
      %p485 = scmp.eq.s32.totalorder %s40, 1
      %p486 = por %p484, %p485
      %p488 = scmp.ne.s32.totalorder %s471, %s487
      %p489 = scmp.eq.s32.totalorder %s40, 0
      %p490 = por %p488, %p489
      %s491 = ssub.s32 %s42, %s49
      %p492 = scmp.eq.s32.totalorder %s491, 0
      %s494 = sadd.s32 %s493, 1
      %s495 = scalar_select %p492, %s493, %s494
      %p498 = pneg %p492
      %p499 = scmp.eq.s32.totalorder %s34, 1
      %p500 = por %p498, %p499
      %p501 = scmp.ne.s32.totalorder %s493, %s496
      %p502 = scmp.eq.s32.totalorder %s34, 0
      %p503 = por %p501, %p502
      %p504 = scmp.ne.s32.totalorder %s493, %s496
      %p505 = scmp.eq.s32.totalorder %s39, 1
      %p506 = por %p504, %p505
      %p507 = scmp.ne.s32.totalorder %s496, %s497
      %p508 = scmp.eq.s32.totalorder %s39, 0
      %p509 = por %p507, %p508
      %p510 = scmp.ne.s32.totalorder %s496, %s497
      %p511 = scmp.eq.s32.totalorder %s40, 1
      %p512 = por %p510, %p511
      %p514 = scmp.ne.s32.totalorder %s497, %s513
      %p515 = scmp.eq.s32.totalorder %s40, 0
      %p516 = por %p514, %p515
      %s517 = ssub.s32 %s42, %s49
      %p518 = scmp.eq.s32.totalorder %s517, 0
      %s520 = sadd.s32 %s519, 1
      %s521 = scalar_select %p518, %s519, %s520
      %p524 = pneg %p518
      %p525 = scmp.eq.s32.totalorder %s34, 1
      %p526 = por %p524, %p525
      %p527 = scmp.ne.s32.totalorder %s519, %s522
      %p528 = scmp.eq.s32.totalorder %s34, 0
      %p529 = por %p527, %p528
      %p530 = scmp.ne.s32.totalorder %s519, %s522
      %p531 = scmp.eq.s32.totalorder %s39, 1
      %p532 = por %p530, %p531
      %p533 = scmp.ne.s32.totalorder %s522, %s523
      %p534 = scmp.eq.s32.totalorder %s39, 0
      %p535 = por %p533, %p534
      %p536 = scmp.ne.s32.totalorder %s522, %s523
      %p537 = scmp.eq.s32.totalorder %s40, 1
      %p538 = por %p536, %p537
      %p540 = scmp.ne.s32.totalorder %s523, %s539
      %p541 = scmp.eq.s32.totalorder %s40, 0
      %p542 = por %p540, %p541
      %s543 = ssub.s32 %s42, %s49
      %p544 = scmp.eq.s32.totalorder %s543, 0
      %s546 = sadd.s32 %s545, 1
      %s547 = scalar_select %p544, %s545, %s546
      %p550 = pneg %p544
      %p551 = scmp.eq.s32.totalorder %s34, 1
      %p552 = por %p550, %p551
      %p553 = scmp.ne.s32.totalorder %s545, %s548
      %p554 = scmp.eq.s32.totalorder %s34, 0
      %p555 = por %p553, %p554
      %p556 = scmp.ne.s32.totalorder %s545, %s548
      %p557 = scmp.eq.s32.totalorder %s39, 1
      %p558 = por %p556, %p557
      %p559 = scmp.ne.s32.totalorder %s548, %s549
      %p560 = scmp.eq.s32.totalorder %s39, 0
      %p561 = por %p559, %p560
      %p562 = scmp.ne.s32.totalorder %s548, %s549
      %p563 = scmp.eq.s32.totalorder %s40, 1
      %p564 = por %p562, %p563
      %p566 = scmp.ne.s32.totalorder %s549, %s565
      %p567 = scmp.eq.s32.totalorder %s40, 0
      %p568 = por %p566, %p567
      %s569 = ssub.s32 %s42, %s49
      %p570 = scmp.eq.s32.totalorder %s569, 0
      %s572 = sadd.s32 %s571, 1
      %s573 = scalar_select %p570, %s571, %s572
      %p576 = pneg %p570
      %p577 = scmp.eq.s32.totalorder %s34, 1
      %p578 = por %p576, %p577
      %p579 = scmp.ne.s32.totalorder %s571, %s574
      %p580 = scmp.eq.s32.totalorder %s34, 0
      %p581 = por %p579, %p580
      %p582 = scmp.ne.s32.totalorder %s571, %s574
      %p583 = scmp.eq.s32.totalorder %s39, 1
      %p584 = por %p582, %p583
      %p585 = scmp.ne.s32.totalorder %s574, %s575
      %p586 = scmp.eq.s32.totalorder %s39, 0
      %p587 = por %p585, %p586
      %p588 = scmp.ne.s32.totalorder %s574, %s575
      %p589 = scmp.eq.s32.totalorder %s40, 1
      %p590 = por %p588, %p589
      %p592 = scmp.ne.s32.totalorder %s575, %s591
      %p593 = scmp.eq.s32.totalorder %s40, 0
      %p594 = por %p592, %p593
      %s595 = ssub.s32 %s42, %s49
      %p596 = scmp.eq.s32.totalorder %s595, 0
      %s598 = sadd.s32 %s597, 1
      %s599 = scalar_select %p596, %s597, %s598
      %p602 = pneg %p596
      %p603 = scmp.eq.s32.totalorder %s34, 1
      %p604 = por %p602, %p603
      %p605 = scmp.ne.s32.totalorder %s597, %s600
      %p606 = scmp.eq.s32.totalorder %s34, 0
      %p607 = por %p605, %p606
      %p608 = scmp.ne.s32.totalorder %s597, %s600
      %p609 = scmp.eq.s32.totalorder %s39, 1
      %p610 = por %p608, %p609
      %p611 = scmp.ne.s32.totalorder %s600, %s601
      %p612 = scmp.eq.s32.totalorder %s39, 0
      %p613 = por %p611, %p612
      %p614 = scmp.ne.s32.totalorder %s600, %s601
      %p615 = scmp.eq.s32.totalorder %s40, 1
      %p616 = por %p614, %p615
      %p618 = scmp.ne.s32.totalorder %s601, %s617
      %p619 = scmp.eq.s32.totalorder %s40, 0
      %p620 = por %p618, %p619
      %s622 = sadd.s32 %s621, 1
      %p625 = scmp.eq.s32.totalorder %s34, 1
      %p626 = scmp.ne.s32.totalorder %s621, %s623
      %p627 = scmp.eq.s32.totalorder %s34, 0
      %p628 = por %p626, %p627
      %p629 = scmp.ne.s32.totalorder %s621, %s623
      %p630 = scmp.eq.s32.totalorder %s39, 1
      %p631 = por %p629, %p630
      %p632 = scmp.ne.s32.totalorder %s623, %s624
      %p633 = scmp.eq.s32.totalorder %s39, 0
      %p634 = por %p632, %p633
      %p635 = scmp.ne.s32.totalorder %s623, %s624
      %p636 = scmp.eq.s32.totalorder %s40, 1
      %p637 = por %p635, %p636
      %p639 = scmp.ne.s32.totalorder %s624, %s638
      %p640 = scmp.eq.s32.totalorder %s40, 0
      %p641 = por %p639, %p640
      %s643 = sadd.s32 %s642, 1
      %p646 = scmp.eq.s32.totalorder %s34, 1
      %p647 = scmp.ne.s32.totalorder %s642, %s644
      %p648 = scmp.eq.s32.totalorder %s34, 0
      %p649 = por %p647, %p648
      %p650 = scmp.ne.s32.totalorder %s642, %s644
      %p651 = scmp.eq.s32.totalorder %s39, 1
      %p652 = por %p650, %p651
      %p653 = scmp.ne.s32.totalorder %s644, %s645
      %p654 = scmp.eq.s32.totalorder %s39, 0
      %p655 = por %p653, %p654
      %p656 = scmp.ne.s32.totalorder %s644, %s645
      %p657 = scmp.eq.s32.totalorder %s40, 1
      %p658 = por %p656, %p657
      %p660 = scmp.ne.s32.totalorder %s645, %s659
      %p661 = scmp.eq.s32.totalorder %s40, 0
      %p662 = por %p660, %p661
      %s663 = ssub.s32 %s41, %s53
      %p664 = scmp.eq.s32.totalorder %s663, 0
      %s666 = sadd.s32 %s665, 1
      %s667 = scalar_select %p664, %s665, %s666
      %p670 = pneg %p664
      %p671 = scmp.eq.s32.totalorder %s34, 1
      %p672 = por %p670, %p671
      %p673 = scmp.ne.s32.totalorder %s665, %s668
      %p674 = scmp.eq.s32.totalorder %s34, 0
      %p675 = por %p673, %p674
      %p676 = scmp.ne.s32.totalorder %s665, %s668
      %p677 = scmp.eq.s32.totalorder %s39, 1
      %p678 = por %p676, %p677
      %p679 = scmp.ne.s32.totalorder %s668, %s669
      %p680 = scmp.eq.s32.totalorder %s39, 0
      %p681 = por %p679, %p680
      %p682 = scmp.ne.s32.totalorder %s668, %s669
      %p683 = scmp.eq.s32.totalorder %s40, 1
      %p684 = por %p682, %p683
      %p686 = scmp.ne.s32.totalorder %s669, %s685
      %p687 = scmp.eq.s32.totalorder %s40, 0
      %p688 = por %p686, %p687
      %s689 = ssub.s32 %s41, %s53
      %p690 = scmp.eq.s32.totalorder %s689, 0
      %s692 = sadd.s32 %s691, 1
      %s693 = scalar_select %p690, %s691, %s692
      %p696 = pneg %p690
      %p697 = scmp.eq.s32.totalorder %s34, 1
      %p698 = por %p696, %p697
      %p699 = scmp.ne.s32.totalorder %s691, %s694
      %p700 = scmp.eq.s32.totalorder %s34, 0
      %p701 = por %p699, %p700
      %p702 = scmp.ne.s32.totalorder %s691, %s694
      %p703 = scmp.eq.s32.totalorder %s39, 1
      %p704 = por %p702, %p703
      %p705 = scmp.ne.s32.totalorder %s694, %s695
      %p706 = scmp.eq.s32.totalorder %s39, 0
      %p707 = por %p705, %p706
      %p708 = scmp.ne.s32.totalorder %s694, %s695
      %p709 = scmp.eq.s32.totalorder %s40, 1
      %p710 = por %p708, %p709
      %p712 = scmp.ne.s32.totalorder %s695, %s711
      %p713 = scmp.eq.s32.totalorder %s40, 0
      %p714 = por %p712, %p713
      %p715 = scmp.le.s32.totalorder 1, %s34
      %p716 = scmp.lt.s32.totalorder %s34, 3
      %p717 = pnand %p715, %p716
      %p718 = pneg %p717
      // Predicated region
      $region9: #{tpu_custom_call.1} parent=5 // pred_check
        _
      $region10: #{tpu_custom_call.1} parent=5 // pred_check_branch
        %720 = sbr.rel (%p717) target = $region12
      $region11: #{tpu_custom_call.1} parent=5 // pred_region
        %s721 = ssub.s32 %s34, 1
        // Predicated region
        $region13: #{tpu_custom_call.1} parent=11 // pred_check
          %p722 = pneg %p72
        $region14: #{tpu_custom_call.1} parent=11 // pred_check_branch
          %724 = sbr.rel (%p722) target = $region16
        $region15: #{tpu_custom_call.1} parent=11 // pred_region
          %s725 = smul.u32 2, %s43
          %p726 = scmp.lt.s32.totalorder %s725, 1
          %s727 = scalar_select %p726, %s725, 1
          %s728 = scalar_lea.vmem %s0, %s727
          %s729 = smul.u32 2, %s43
        $region16: #{tpu_custom_call.1} parent=11 // pred_fallthru
          _
        // Predicated region
        $region17: #{tpu_custom_call.1} parent=11 // pred_check
          %p730 = pneg %p98
        $region18: #{tpu_custom_call.1} parent=11 // pred_check_branch
          %732 = sbr.rel (%p730) target = $region20
        $region19: #{tpu_custom_call.1} parent=11 // pred_region
          %s733 = smul.u32 2, %s43
          %p734 = scmp.lt.s32.totalorder %s733, 1
          %s735 = scalar_select %p734, %s733, 1
          %s736 = smul.addr %s735, 8
          %s737 = scalar_lea.vmem %s1, %s736
          %s738 = smul.u32 2, %s43
        $region20: #{tpu_custom_call.1} parent=11 // pred_fallthru
          _
        // Predicated region
        $region21: #{tpu_custom_call.1} parent=11 // pred_check
          %p739 = pneg %p124
        $region22: #{tpu_custom_call.1} parent=11 // pred_check_branch
          %741 = sbr.rel (%p739) target = $region24
        $region23: #{tpu_custom_call.1} parent=11 // pred_region
          %s742 = smul.u32 2, %s43
          %p743 = scmp.lt.s32.totalorder %s742, 1
          %s744 = scalar_select %p743, %s742, 1
          %s745 = smul.addr %s744, 8
          %s746 = scalar_lea.vmem %s2, %s745
          %s747 = smul.u32 2, %s43
        $region24: #{tpu_custom_call.1} parent=11 // pred_fallthru
          _
        // Predicated region
        $region25: #{tpu_custom_call.1} parent=11 // pred_check
          %p748 = pneg %p150
        $region26: #{tpu_custom_call.1} parent=11 // pred_check_branch
          %750 = sbr.rel (%p748) target = $region28
        $region27: #{tpu_custom_call.1} parent=11 // pred_region
          %s751 = smul.u32 2, %s43
          %p752 = scmp.lt.s32.totalorder %s751, 1
          %s753 = scalar_select %p752, %s751, 1
          %s754 = smul.addr %s753, 8
          %s755 = scalar_lea.vmem %s3, %s754
          %s756 = smul.u32 2, %s43
        $region28: #{tpu_custom_call.1} parent=11 // pred_fallthru
          _
        // Predicated region
        $region29: #{tpu_custom_call.1} parent=11 // pred_check
          %p757 = pneg %p176
        $region30: #{tpu_custom_call.1} parent=11 // pred_check_branch
          %759 = sbr.rel (%p757) target = $region32
        $region31: #{tpu_custom_call.1} parent=11 // pred_region
          %s760 = smul.u32 2, %s43
          %p761 = scmp.lt.s32.totalorder %s760, 1
          %s762 = scalar_select %p761, %s760, 1
          %s763 = smul.addr %s762, 8
          %s764 = scalar_lea.vmem %s4, %s763
          %s765 = smul.u32 2, %s43
        $region32: #{tpu_custom_call.1} parent=11 // pred_fallthru
          _
        // Predicated region
        $region33: #{tpu_custom_call.1} parent=11 // pred_check
          %p766 = pneg %p197
        $region34: #{tpu_custom_call.1} parent=11 // pred_check_branch
          %768 = sbr.rel (%p766) target = $region36
        $region35: #{tpu_custom_call.1} parent=11 // pred_region
          _
        $region36: #{tpu_custom_call.1} parent=11 // pred_fallthru
          _
        // Predicated region
        $region37: #{tpu_custom_call.1} parent=11 // pred_check
          %p769 = pneg %p634
        $region38: #{tpu_custom_call.1} parent=11 // pred_check_branch
          %771 = sbr.rel (%p769) target = $region40
        $region39: #{tpu_custom_call.1} parent=11 // pred_region
          _
        $region40: #{tpu_custom_call.1} parent=11 // pred_fallthru
          _
        // Predicated region
        $region41: #{tpu_custom_call.1} parent=11 // pred_check
          %p772 = pneg %p655
        $region42: #{tpu_custom_call.1} parent=11 // pred_check_branch
          %774 = sbr.rel (%p772) target = $region44
        $region43: #{tpu_custom_call.1} parent=11 // pred_region
          _
        $region44: #{tpu_custom_call.1} parent=11 // pred_fallthru
          _
      $region12: #{tpu_custom_call.1} parent=5 // pred_fallthru
        _
      %p775 = scmp.lt.s32.totalorder %s34, 2
      // Predicated region
      $region45: #{tpu_custom_call.1} parent=5 // pred_check
        %p776 = pneg %p775
      $region46: #{tpu_custom_call.1} parent=5 // pred_check_branch
        %778 = sbr.rel (%p776) target = $region48
      $region47: #{tpu_custom_call.1} parent=5 // pred_region
        // Predicated region
        $region49: #{tpu_custom_call.1} parent=47 // pred_check
          %p779 = pneg %p217
        $region50: #{tpu_custom_call.1} parent=47 // pred_check_branch
          %781 = sbr.rel (%p779) target = $region52
        $region51: #{tpu_custom_call.1} parent=47 // pred_region
          %p782 = scmp.lt.s32.totalorder %s42, 1
          %s783 = scalar_select %p782, %s42, 1
          %s784 = smul.addr %s783, 4
          %s785 = smul.addr %s784, 4
          %s786 = scalar_lea.vmem %s6, %s785
        $region52: #{tpu_custom_call.1} parent=47 // pred_fallthru
          _
        // Predicated region
        $region53: #{tpu_custom_call.1} parent=47 // pred_check
          %p787 = pneg %p243
        $region54: #{tpu_custom_call.1} parent=47 // pred_check_branch
          %789 = sbr.rel (%p787) target = $region56
        $region55: #{tpu_custom_call.1} parent=47 // pred_region
          %p790 = scmp.lt.s32.totalorder %s42, 1
          %s791 = scalar_select %p790, %s42, 1
          %s792 = smul.addr %s791, 4
          %s793 = smul.addr %s792, 4
          %s794 = scalar_lea.vmem %s7, %s793
        $region56: #{tpu_custom_call.1} parent=47 // pred_fallthru
          _
        // Predicated region
        $region57: #{tpu_custom_call.1} parent=47 // pred_check
          %p795 = pneg %p269
        $region58: #{tpu_custom_call.1} parent=47 // pred_check_branch
          %797 = sbr.rel (%p795) target = $region60
        $region59: #{tpu_custom_call.1} parent=47 // pred_region
          %p798 = scmp.lt.s32.totalorder %s42, 1
          %s799 = scalar_select %p798, %s42, 1
          %s800 = smul.addr %s799, 4
          %s801 = smul.addr %s800, 4
          %s802 = scalar_lea.vmem %s8, %s801
        $region60: #{tpu_custom_call.1} parent=47 // pred_fallthru
          _
        // Predicated region
        $region61: #{tpu_custom_call.1} parent=47 // pred_check
          %p803 = pneg %p295
        $region62: #{tpu_custom_call.1} parent=47 // pred_check_branch
          %805 = sbr.rel (%p803) target = $region64
        $region63: #{tpu_custom_call.1} parent=47 // pred_region
          %p806 = scmp.lt.s32.totalorder %s42, 1
          %s807 = scalar_select %p806, %s42, 1
          %s808 = scalar_lea.vmem %s9, %s807
        $region64: #{tpu_custom_call.1} parent=47 // pred_fallthru
          _
        // Predicated region
        $region65: #{tpu_custom_call.1} parent=47 // pred_check
          %p809 = pneg %p321
        $region66: #{tpu_custom_call.1} parent=47 // pred_check_branch
          %811 = sbr.rel (%p809) target = $region68
        $region67: #{tpu_custom_call.1} parent=47 // pred_region
          %p812 = scmp.lt.s32.totalorder %s42, 1
          %s813 = scalar_select %p812, %s42, 1
          %s814 = scalar_lea.vmem %s10, %s813
        $region68: #{tpu_custom_call.1} parent=47 // pred_fallthru
          _
        // Predicated region
        $region69: #{tpu_custom_call.1} parent=47 // pred_check
          %p815 = pneg %p347
        $region70: #{tpu_custom_call.1} parent=47 // pred_check_branch
          %817 = sbr.rel (%p815) target = $region72
        $region71: #{tpu_custom_call.1} parent=47 // pred_region
          %p818 = scmp.lt.s32.totalorder %s42, 1
          %s819 = scalar_select %p818, %s42, 1
          %s820 = scalar_lea.vmem %s11, %s819
        $region72: #{tpu_custom_call.1} parent=47 // pred_fallthru
          _
        // Predicated region
        $region73: #{tpu_custom_call.1} parent=47 // pred_check
          %p821 = pneg %p373
        $region74: #{tpu_custom_call.1} parent=47 // pred_check_branch
          %823 = sbr.rel (%p821) target = $region76
        $region75: #{tpu_custom_call.1} parent=47 // pred_region
          %p824 = scmp.lt.s32.totalorder %s42, 1
          %s825 = scalar_select %p824, %s42, 1
          %s826 = smul.addr %s825, 4
          %s827 = smul.addr %s826, 4
          %s828 = scalar_lea.vmem %s12, %s827
        $region76: #{tpu_custom_call.1} parent=47 // pred_fallthru
          _
        // Predicated region
        $region77: #{tpu_custom_call.1} parent=47 // pred_check
          %p829 = pneg %p399
        $region78: #{tpu_custom_call.1} parent=47 // pred_check_branch
          %831 = sbr.rel (%p829) target = $region80
        $region79: #{tpu_custom_call.1} parent=47 // pred_region
          %p832 = scmp.lt.s32.totalorder %s42, 1
          %s833 = scalar_select %p832, %s42, 1
          %s834 = scalar_lea.vmem %s13, %s833
        $region80: #{tpu_custom_call.1} parent=47 // pred_fallthru
          _
        // Predicated region
        $region81: #{tpu_custom_call.1} parent=47 // pred_check
          %p835 = pneg %p425
        $region82: #{tpu_custom_call.1} parent=47 // pred_check_branch
          %837 = sbr.rel (%p835) target = $region84
        $region83: #{tpu_custom_call.1} parent=47 // pred_region
          %p838 = scmp.lt.s32.totalorder %s42, 1
          %s839 = scalar_select %p838, %s42, 1
          %s840 = smul.addr %s839, 64
          %s841 = smul.addr %s840, 4
          %s842 = scalar_lea.vmem %s14, %s841
        $region84: #{tpu_custom_call.1} parent=47 // pred_fallthru
          _
        // Predicated region
        $region85: #{tpu_custom_call.1} parent=47 // pred_check
          %p843 = pneg %p451
        $region86: #{tpu_custom_call.1} parent=47 // pred_check_branch
          %845 = sbr.rel (%p843) target = $region88
        $region87: #{tpu_custom_call.1} parent=47 // pred_region
          %p846 = scmp.lt.s32.totalorder %s42, 1
          %s847 = scalar_select %p846, %s42, 1
          %s848 = smul.addr %s847, 16
          %s849 = scalar_lea.vmem %s15, %s848
        $region88: #{tpu_custom_call.1} parent=47 // pred_fallthru
          _
        // Predicated region
        $region89: #{tpu_custom_call.1} parent=47 // pred_check
          %p850 = pneg %p477
        $region90: #{tpu_custom_call.1} parent=47 // pred_check_branch
          %852 = sbr.rel (%p850) target = $region92
        $region91: #{tpu_custom_call.1} parent=47 // pred_region
          %p853 = scmp.lt.s32.totalorder %s42, 1
          %s854 = scalar_select %p853, %s42, 1
          %s855 = smul.addr %s854, 256
          %s856 = smul.addr %s855, 4
          %s857 = scalar_lea.vmem %s16, %s856
        $region92: #{tpu_custom_call.1} parent=47 // pred_fallthru
          _
        // Predicated region
        $region93: #{tpu_custom_call.1} parent=47 // pred_check
          %p858 = pneg %p503
        $region94: #{tpu_custom_call.1} parent=47 // pred_check_branch
          %860 = sbr.rel (%p858) target = $region96
        $region95: #{tpu_custom_call.1} parent=47 // pred_region
          %p861 = scmp.lt.s32.totalorder %s42, 1
          %s862 = scalar_select %p861, %s42, 1
          %s863 = scalar_lea.vmem %s17, %s862
        $region96: #{tpu_custom_call.1} parent=47 // pred_fallthru
          _
        // Predicated region
        $region97: #{tpu_custom_call.1} parent=47 // pred_check
          %p864 = pneg %p529
        $region98: #{tpu_custom_call.1} parent=47 // pred_check_branch
          %866 = sbr.rel (%p864) target = $region100
        $region99: #{tpu_custom_call.1} parent=47 // pred_region
          %p867 = scmp.lt.s32.totalorder %s42, 1
          %s868 = scalar_select %p867, %s42, 1
          %s869 = scalar_lea.vmem %s18, %s868
        $region100: #{tpu_custom_call.1} parent=47 // pred_fallthru
          _
        // Predicated region
        $region101: #{tpu_custom_call.1} parent=47 // pred_check
          %p870 = pneg %p555
        $region102: #{tpu_custom_call.1} parent=47 // pred_check_branch
          %872 = sbr.rel (%p870) target = $region104
        $region103: #{tpu_custom_call.1} parent=47 // pred_region
          %p873 = scmp.lt.s32.totalorder %s42, 1
          %s874 = scalar_select %p873, %s42, 1
          %s875 = scalar_lea.vmem %s19, %s874
        $region104: #{tpu_custom_call.1} parent=47 // pred_fallthru
          _
        // Predicated region
        $region105: #{tpu_custom_call.1} parent=47 // pred_check
          %p876 = pneg %p581
        $region106: #{tpu_custom_call.1} parent=47 // pred_check_branch
          %878 = sbr.rel (%p876) target = $region108
        $region107: #{tpu_custom_call.1} parent=47 // pred_region
          %p879 = scmp.lt.s32.totalorder %s42, 1
          %s880 = scalar_select %p879, %s42, 1
          %s881 = scalar_lea.vmem %s20, %s880
        $region108: #{tpu_custom_call.1} parent=47 // pred_fallthru
          _
        // Predicated region
        $region109: #{tpu_custom_call.1} parent=47 // pred_check
          %p882 = pneg %p607
        $region110: #{tpu_custom_call.1} parent=47 // pred_check_branch
          %884 = sbr.rel (%p882) target = $region112
        $region111: #{tpu_custom_call.1} parent=47 // pred_region
          %p885 = scmp.lt.s32.totalorder %s42, 1
          %s886 = scalar_select %p885, %s42, 1
          %s887 = scalar_lea.vmem %s21, %s886
        $region112: #{tpu_custom_call.1} parent=47 // pred_fallthru
          _
      $region48: #{tpu_custom_call.1} parent=5 // pred_fallthru
        _
      %p888 = scmp.le.s32.totalorder 1, %s34
      %p889 = scmp.lt.s32.totalorder %s34, 3
      %p890 = pnand %p888, %p889
      %p891 = pneg %p890
      // Predicated region
      $region113: #{tpu_custom_call.1} parent=5 // pred_check
        _
      $region114: #{tpu_custom_call.1} parent=5 // pred_check_branch
        %893 = sbr.rel (%p890) target = $region116
      $region115: #{tpu_custom_call.1} parent=5 // pred_region
        %s894 = ssub.s32 %s34, 1
        %s895 = smul.u32 2, %s43
        %p896 = scmp.lt.s32.totalorder %s895, 1
        %s897 = scalar_select %p896, %s895, 1
        %s898 = scalar_lea.vmem %s0, %s897
        %p899 = pneg %p72
        %p900 = pneg %p69
        %s901 = smul.u32 2, %s43
        %p902 = scmp.lt.s32.totalorder %s901, 1
        %s903 = scalar_select %p902, %s901, 1
        %s904 = smul.addr %s903, 8
        %s905 = scalar_lea.vmem %s1, %s904
        %p906 = pneg %p98
        %p907 = pneg %p95
        %s908 = smul.u32 2, %s43
        %p909 = scmp.lt.s32.totalorder %s908, 1
        %s910 = scalar_select %p909, %s908, 1
        %s911 = smul.addr %s910, 8
        %s912 = scalar_lea.vmem %s2, %s911
        %p913 = pneg %p124
        %p914 = pneg %p121
        %s915 = smul.u32 2, %s43
        %p916 = scmp.lt.s32.totalorder %s915, 1
        %s917 = scalar_select %p916, %s915, 1
        %s918 = smul.addr %s917, 8
        %s919 = scalar_lea.vmem %s3, %s918
        %p920 = pneg %p150
        %p921 = pneg %p147
        %s922 = smul.u32 2, %s43
        %p923 = scmp.lt.s32.totalorder %s922, 1
        %s924 = scalar_select %p923, %s922, 1
        %s925 = smul.addr %s924, 8
        %s926 = scalar_lea.vmem %s4, %s925
        %p927 = pneg %p176
        %p928 = pneg %p173
        %p929 = pneg %p197
        %p930 = pneg %p194
        %p931 = scmp.lt.s32.totalorder %s44, 1
        %s932 = scalar_select %p931, %s44, 1
        %s933 = smul.addr %s932, 4
        %s934 = smul.addr %s933, 4
        %s935 = scalar_lea.vmem %s6, %s934
        %p936 = pneg %p223
        %p937 = pneg %p220
        %p938 = scmp.lt.s32.totalorder %s44, 1
        %s939 = scalar_select %p938, %s44, 1
        %s940 = smul.addr %s939, 4
        %s941 = smul.addr %s940, 4
        %s942 = scalar_lea.vmem %s7, %s941
        %p943 = pneg %p249
        %p944 = pneg %p246
        %p945 = scmp.lt.s32.totalorder %s44, 1
        %s946 = scalar_select %p945, %s44, 1
        %s947 = smul.addr %s946, 4
        %s948 = smul.addr %s947, 4
        %s949 = scalar_lea.vmem %s8, %s948
        %p950 = pneg %p275
        %p951 = pneg %p272
        %p952 = scmp.lt.s32.totalorder %s44, 1
        %s953 = scalar_select %p952, %s44, 1
        %s954 = scalar_lea.vmem %s9, %s953
        %p955 = pneg %p301
        %p956 = pneg %p298
        %p957 = scmp.lt.s32.totalorder %s44, 1
        %s958 = scalar_select %p957, %s44, 1
        %s959 = scalar_lea.vmem %s10, %s958
        %p960 = pneg %p327
        %p961 = pneg %p324
        %p962 = scmp.lt.s32.totalorder %s44, 1
        %s963 = scalar_select %p962, %s44, 1
        %s964 = scalar_lea.vmem %s11, %s963
        %p965 = pneg %p353
        %p966 = pneg %p350
        %p967 = scmp.lt.s32.totalorder %s44, 1
        %s968 = scalar_select %p967, %s44, 1
        %s969 = smul.addr %s968, 4
        %s970 = smul.addr %s969, 4
        %s971 = scalar_lea.vmem %s12, %s970
        %p972 = pneg %p379
        %p973 = pneg %p376
        %p974 = scmp.lt.s32.totalorder %s44, 1
        %s975 = scalar_select %p974, %s44, 1
        %s976 = scalar_lea.vmem %s13, %s975
        %p977 = pneg %p405
        %p978 = pneg %p402
        %p979 = scmp.lt.s32.totalorder %s44, 1
        %s980 = scalar_select %p979, %s44, 1
        %s981 = smul.addr %s980, 64
        %s982 = smul.addr %s981, 4
        %s983 = scalar_lea.vmem %s14, %s982
        %p984 = pneg %p431
        %p985 = pneg %p428
        %p986 = scmp.lt.s32.totalorder %s44, 1
        %s987 = scalar_select %p986, %s44, 1
        %s988 = smul.addr %s987, 16
        %s989 = scalar_lea.vmem %s15, %s988
        %p990 = pneg %p457
        %p991 = pneg %p454
        %p992 = scmp.lt.s32.totalorder %s44, 1
        %s993 = scalar_select %p992, %s44, 1
        %s994 = smul.addr %s993, 256
        %s995 = smul.addr %s994, 4
        %s996 = scalar_lea.vmem %s16, %s995
        %p997 = pneg %p483
        %p998 = pneg %p480
        %p999 = scmp.lt.s32.totalorder %s44, 1
        %s1000 = scalar_select %p999, %s44, 1
        %s1001 = scalar_lea.vmem %s17, %s1000
        %p1002 = pneg %p509
        %p1003 = pneg %p506
        %p1004 = scmp.lt.s32.totalorder %s44, 1
        %s1005 = scalar_select %p1004, %s44, 1
        %s1006 = scalar_lea.vmem %s18, %s1005
        %p1007 = pneg %p535
        %p1008 = pneg %p532
        %p1009 = scmp.lt.s32.totalorder %s44, 1
        %s1010 = scalar_select %p1009, %s44, 1
        %s1011 = scalar_lea.vmem %s19, %s1010
        %p1012 = pneg %p561
        %p1013 = pneg %p558
        %p1014 = scmp.lt.s32.totalorder %s44, 1
        %s1015 = scalar_select %p1014, %s44, 1
        %s1016 = scalar_lea.vmem %s20, %s1015
        %p1017 = pneg %p587
        %p1018 = pneg %p584
        %p1019 = scmp.lt.s32.totalorder %s44, 1
        %s1020 = scalar_select %p1019, %s44, 1
        %s1021 = scalar_lea.vmem %s21, %s1020
        %p1022 = pneg %p613
        %p1023 = pneg %p610
        %p1024 = pneg %p634
        %p1025 = pneg %p631
        %p1026 = pneg %p655
        %p1027 = pneg %p652
        %p1028 = pneg %p681
        %p1029 = pneg %p678
        %p1030 = pneg %p707
        %p1031 = pneg %p704
        %s1032 = smul.u32 2, %s43
        %p1033 = scmp.lt.s32.totalorder %s1032, 1
        %s1034 = scalar_select %p1033, %s1032, 1
        %s1035 = scalar_lea.vmem %s0, %s1034
        %s1036 = smul.u32 2, %s43
        %s1037 = smul.u32 2, %s43
        %p1038 = scmp.lt.s32.totalorder %s1037, 1
        %s1039 = scalar_select %p1038, %s1037, 1
        %s1040 = smul.addr %s1039, 8
        %s1041 = scalar_lea.vmem %s1, %s1040
        %s1042 = smul.u32 2, %s43
        %s1043 = smul.u32 2, %s43
        %p1044 = scmp.lt.s32.totalorder %s1043, 1
        %s1045 = scalar_select %p1044, %s1043, 1
        %s1046 = smul.addr %s1045, 8
        %s1047 = scalar_lea.vmem %s2, %s1046
        %s1048 = smul.u32 2, %s43
        %s1049 = smul.u32 2, %s43
        %p1050 = scmp.lt.s32.totalorder %s1049, 1
        %s1051 = scalar_select %p1050, %s1049, 1
        %s1052 = smul.addr %s1051, 8
        %s1053 = scalar_lea.vmem %s3, %s1052
        %s1054 = smul.u32 2, %s43
        %s1055 = smul.u32 2, %s43
        %p1056 = scmp.lt.s32.totalorder %s1055, 1
        %s1057 = scalar_select %p1056, %s1055, 1
        %s1058 = smul.addr %s1057, 8
        %s1059 = scalar_lea.vmem %s4, %s1058
        %s1060 = smul.u32 2, %s43
        %p1061 = scmp.lt.s32.totalorder %s44, 1
        %s1062 = scalar_select %p1061, %s44, 1
        %s1063 = smul.addr %s1062, 4
        %s1064 = smul.addr %s1063, 4
        %s1065 = scalar_lea.vmem %s6, %s1064
        %p1066 = scmp.lt.s32.totalorder %s44, 1
        %s1067 = scalar_select %p1066, %s44, 1
        %s1068 = smul.addr %s1067, 4
        %s1069 = smul.addr %s1068, 4
        %s1070 = scalar_lea.vmem %s7, %s1069
        %p1071 = scmp.lt.s32.totalorder %s44, 1
        %s1072 = scalar_select %p1071, %s44, 1
        %s1073 = smul.addr %s1072, 4
        %s1074 = smul.addr %s1073, 4
        %s1075 = scalar_lea.vmem %s8, %s1074
        %p1076 = scmp.lt.s32.totalorder %s44, 1
        %s1077 = scalar_select %p1076, %s44, 1
        %s1078 = scalar_lea.vmem %s9, %s1077
        %p1079 = scmp.lt.s32.totalorder %s44, 1
        %s1080 = scalar_select %p1079, %s44, 1
        %s1081 = scalar_lea.vmem %s10, %s1080
        %p1082 = scmp.lt.s32.totalorder %s44, 1
        %s1083 = scalar_select %p1082, %s44, 1
        %s1084 = scalar_lea.vmem %s11, %s1083
        %p1085 = scmp.lt.s32.totalorder %s44, 1
        %s1086 = scalar_select %p1085, %s44, 1
        %s1087 = smul.addr %s1086, 4
        %s1088 = smul.addr %s1087, 4
        %s1089 = scalar_lea.vmem %s12, %s1088
        %p1090 = scmp.lt.s32.totalorder %s44, 1
        %s1091 = scalar_select %p1090, %s44, 1
        %s1092 = scalar_lea.vmem %s13, %s1091
        %p1093 = scmp.lt.s32.totalorder %s44, 1
        %s1094 = scalar_select %p1093, %s44, 1
        %s1095 = smul.addr %s1094, 64
        %s1096 = smul.addr %s1095, 4
        %s1097 = scalar_lea.vmem %s14, %s1096
        %p1098 = scmp.lt.s32.totalorder %s44, 1
        %s1099 = scalar_select %p1098, %s44, 1
        %s1100 = smul.addr %s1099, 16
        %s1101 = scalar_lea.vmem %s15, %s1100
        %p1102 = scmp.lt.s32.totalorder %s44, 1
        %s1103 = scalar_select %p1102, %s44, 1
        %s1104 = smul.addr %s1103, 256
        %s1105 = smul.addr %s1104, 4
        %s1106 = scalar_lea.vmem %s16, %s1105
        %p1107 = scmp.lt.s32.totalorder %s44, 1
        %s1108 = scalar_select %p1107, %s44, 1
        %s1109 = scalar_lea.vmem %s17, %s1108
        %p1110 = scmp.lt.s32.totalorder %s44, 1
        %s1111 = scalar_select %p1110, %s44, 1
        %s1112 = scalar_lea.vmem %s18, %s1111
        %p1113 = scmp.lt.s32.totalorder %s44, 1
        %s1114 = scalar_select %p1113, %s44, 1
        %s1115 = scalar_lea.vmem %s19, %s1114
        %p1116 = scmp.lt.s32.totalorder %s44, 1
        %s1117 = scalar_select %p1116, %s44, 1
        %s1118 = scalar_lea.vmem %s20, %s1117
        %p1119 = scmp.lt.s32.totalorder %s44, 1
        %s1120 = scalar_select %p1119, %s44, 1
        %s1121 = scalar_lea.vmem %s21, %s1120
        %s1122 = smul.u32 2, %s43
        %p1124 = scmp.eq.s32.totalorder %s44, 0
        // Predicated region
        $region117: #{tpu_custom_call.1} parent=115 // pred_check
          %p1125 = pneg %p1124
        $region118: #{tpu_custom_call.1} parent=115 // pred_check_branch
          %1127 = sbr.rel (%p1125) target = $region120
        $region119: #{tpu_custom_call.1} parent=115 // pred_region
          %v1128 = vld [vmem:[%s1047] sm:$0xff]
          %v1129 = vld [vmem:[%s1047 + $0x8] sm:$0xff]
          %v1130 = vld [vmem:[%s1053] sm:$0xff]
          %v1131 = vld [vmem:[%s1053 + $0x8] sm:$0xff]
          %v1132 = vld [vmem:[%s5] sm:$0x1]
          %v1133 = vld [vmem:[%s5 + $0x1] sm:$0x1]
          %1135 = vset.pattern.permute.xlu0 0
          %1136 = vperm.xlu0 %1135, %v1128
          %v1137 = vpop.permute.xlu0 %1136
          %1140 = vset.pattern.permute.xlu0 0
          %1141 = vperm.xlu0 %1140, %v1129
          %v1142 = vpop.permute.xlu0 %1141
          %v1144 = vlaneseq
          %v1145 = vshrl.u32 %v1144, 7
          %v1146 = vsub.s32 0, %v1145
          %v1147 = vrot.slane %v1133, %v1146
          %v1148 = vmul.f32 %v1137, %v1147
          %v1149 = vmul.f32 %v1142, %v1147
          %v1150 = vadd.f32 %v1130, %v1148
          %v1151 = vadd.f32 %v1131, %v1149
          %v1152 = vsub.f32 1.0, %v1128
          %v1153 = vsub.f32 1.0, %v1129
          %1155 = vset.pattern.permute.xlu0 0
          %1156 = vperm.xlu0 %1155, %v1152
          %v1157 = vpop.permute.xlu0 %1156
          %1160 = vset.pattern.permute.xlu0 0
          %1161 = vperm.xlu0 %1160, %v1153
          %v1162 = vpop.permute.xlu0 %1161
          %v1164 = vlaneseq
          %v1165 = vshrl.u32 %v1164, 7
          %v1166 = vsub.s32 0, %v1165
          %v1167 = vrot.slane %v1132, %v1166
          %v1168 = vmul.f32 %v1157, %v1167
          %v1169 = vmul.f32 %v1162, %v1167
          %v1170 = vadd.f32 %v1150, %v1168
          %v1171 = vadd.f32 %v1151, %v1169
          %vm1172 = vcmask 261120
          %1173 = vst.msk [vmem:[#allocation2] sm:$0xff] %vm1172, %v1170
          %1174 = vst.msk [vmem:[#allocation2 + $0x8] sm:$0xff] %vm1172, %v1171
        $region120: #{tpu_custom_call.1} parent=115 // pred_fallthru
          _
        %v1175 = vld [vmem:[#allocation2] sm:$0xff]
        %v1176 = vld [vmem:[#allocation2 + $0x8] sm:$0xff]
        %v1177 = vpack.c.bf16 %v1176, %v1175
        %v1178 = vld [vmem:[%s1035] sm:$0x1]
        %v1179 = vld [vmem:[%s1035 + $0x1] sm:$0x1]
        %v1180 = vld [vmem:[%s1065] sm:$0xf]
        %v1181 = vld [vmem:[%s1065 + $0x4] sm:$0xf]
        %v1182 = vld [vmem:[%s1065 + $0x8] sm:$0xf]
        %v1183 = vld [vmem:[%s1065 + $0xc] sm:$0xf]
        %v1184 = vld [vmem:[%s1078] sm:$0x1]
        %v1186 = vlaneseq
        %v1187 = vshrl.u32 %v1186, 7
        %v1188 = vsub.s32 0, %v1187
        %v1189 = vrot.slane %v1184, %v1188
        %v1195 = vunpack.c.l.b16 %v1180
        %v1196 = vunpack.c.l.b16 %v1181
        %v1197 = vunpack.c.l.b16 %v1182
        %v1198 = vunpack.c.l.b16 %v1183
        %v1199 = vpack.c.b16 %v1196, %v1195
        %v1200 = vpack.c.b16 %v1198, %v1197
        %vm1203 = vcmask 261120
        %v1205 = vsel %vm1203, %v1177, 0
        %1207 = vmatprep.subr.bf16.mxu0 0
        %1208 = vmatpush1.bf16.msra.mxu0 %v1199
        %1209 = vmatprep.subr.bf16.mxu0 0
        %1210 = vmatpush1.bf16.msra.mxu0 %v1200
        %1211 = vmatprep.subr.bf16.mxu0 0
        %1212 = vmatpush1.bf16.msra.mxu0 0
        %1213 = vmatprep.subr.bf16.mxu0 0
        %1214 = vmatpush1.bf16.msra.mxu0 0
        %1215 = vmatprep.subr.bf16.mxu0 0
        %1216 = vmatpush1.bf16.msra.mxu0 0
        %1217 = vmatprep.subr.bf16.mxu0 0
        %1218 = vmatpush1.bf16.msra.mxu0 0
        %1219 = vmatprep.subr.bf16.mxu0 0
        %1220 = vmatpush1.bf16.msra.mxu0 0
        %1221 = vmatprep.subr.bf16.mxu0 0
        %1222 = vmatpush1.bf16.msra.mxu0 0
        %1223 = vmatprep.subr.bf16.mxu0 0
        %1224 = vmatpush1.bf16.msra.mxu0 0
        %1225 = vmatprep.subr.bf16.mxu0 0
        %1226 = vmatpush1.bf16.msra.mxu0 0
        %1227 = vmatprep.subr.bf16.mxu0 0
        %1228 = vmatpush1.bf16.msra.mxu0 0
        %1229 = vmatprep.subr.bf16.mxu0 0
        %1230 = vmatpush1.bf16.msra.mxu0 0
        %1231 = vmatprep.subr.bf16.mxu0 0
        %1232 = vmatpush1.bf16.msra.mxu0 0
        %1233 = vmatprep.subr.bf16.mxu0 0
        %1234 = vmatpush1.bf16.msra.mxu0 0
        %1235 = vmatprep.subr.bf16.mxu0 0
        %1236 = vmatpush1.bf16.msra.mxu0 0
        %1237 = vmatprep.subr.bf16.mxu0 0
        %1238 = vmatpush1.bf16.msra.mxu0 0
        %1239 = vmatprep.mubr.bf16.mxu0 0
        %1240 = vmatmul.mubr.bf16.gmra.mrb[0].mxu0 %v1205
        %v1241 = vpop.f32.mrb[0].mxu0
        %v1242 = vadd.f32 %v1189, %v1241
        %v1243 = vpop.f32.mrb[0].mxu0
        %v1244 = vpop.f32.mrb[0].mxu0
        %v1245 = vadd.f32 %v1189, %v1244
        %v1246 = vpop.f32.mrb[0].mxu0
        %1247 = vdwg.mxu0
        %v1248 = vld [vmem:[%s1070] sm:$0xf]
        %v1249 = vld [vmem:[%s1070 + $0x4] sm:$0xf]
        %v1250 = vld [vmem:[%s1070 + $0x8] sm:$0xf]
        %v1251 = vld [vmem:[%s1070 + $0xc] sm:$0xf]
        %v1252 = vld [vmem:[%s1081] sm:$0x1]
        %v1254 = vlaneseq
        %v1255 = vshrl.u32 %v1254, 7
        %v1256 = vsub.s32 0, %v1255
        %v1257 = vrot.slane %v1252, %v1256
        %v1263 = vunpack.c.l.b16 %v1248
        %v1264 = vunpack.c.l.b16 %v1249
        %v1265 = vunpack.c.l.b16 %v1250
        %v1266 = vunpack.c.l.b16 %v1251
        %v1267 = vpack.c.b16 %v1264, %v1263
        %v1268 = vpack.c.b16 %v1266, %v1265
        %1271 = vmatprep.subr.bf16.mxu0 0
        %1272 = vmatpush1.bf16.msra.mxu0 %v1267
        %1273 = vmatprep.subr.bf16.mxu0 0
        %1274 = vmatpush1.bf16.msra.mxu0 %v1268
        %1275 = vmatprep.subr.bf16.mxu0 0
        %1276 = vmatpush1.bf16.msra.mxu0 0
        %1277 = vmatprep.subr.bf16.mxu0 0
        %1278 = vmatpush1.bf16.msra.mxu0 0
        %1279 = vmatprep.subr.bf16.mxu0 0
        %1280 = vmatpush1.bf16.msra.mxu0 0
        %1281 = vmatprep.subr.bf16.mxu0 0
        %1282 = vmatpush1.bf16.msra.mxu0 0
        %1283 = vmatprep.subr.bf16.mxu0 0
        %1284 = vmatpush1.bf16.msra.mxu0 0
        %1285 = vmatprep.subr.bf16.mxu0 0
        %1286 = vmatpush1.bf16.msra.mxu0 0
        %1287 = vmatprep.subr.bf16.mxu0 0
        %1288 = vmatpush1.bf16.msra.mxu0 0
        %1289 = vmatprep.subr.bf16.mxu0 0
        %1290 = vmatpush1.bf16.msra.mxu0 0
        %1291 = vmatprep.subr.bf16.mxu0 0
        %1292 = vmatpush1.bf16.msra.mxu0 0
        %1293 = vmatprep.subr.bf16.mxu0 0
        %1294 = vmatpush1.bf16.msra.mxu0 0
        %1295 = vmatprep.subr.bf16.mxu0 0
        %1296 = vmatpush1.bf16.msra.mxu0 0
        %1297 = vmatprep.subr.bf16.mxu0 0
        %1298 = vmatpush1.bf16.msra.mxu0 0
        %1299 = vmatprep.subr.bf16.mxu0 0
        %1300 = vmatpush1.bf16.msra.mxu0 0
        %1301 = vmatprep.subr.bf16.mxu0 0
        %1302 = vmatpush1.bf16.msra.mxu0 0
        %1303 = vmatprep.mubr.bf16.mxu0 0
        %1304 = vmatmul.mubr.bf16.gmra.mrb[0].mxu0 %v1205
        %v1305 = vpop.f32.mrb[0].mxu0
        %v1306 = vadd.f32 %v1257, %v1305
        %v1307 = vpop.f32.mrb[0].mxu0
        %v1308 = vpop.f32.mrb[0].mxu0
        %v1309 = vadd.f32 %v1257, %v1308
        %v1310 = vpop.f32.mrb[0].mxu0
        %1311 = vdwg.mxu0
        %v1312 = vld [vmem:[%s1075] sm:$0xf]
        %v1313 = vld [vmem:[%s1075 + $0x4] sm:$0xf]
        %v1314 = vld [vmem:[%s1075 + $0x8] sm:$0xf]
        %v1315 = vld [vmem:[%s1075 + $0xc] sm:$0xf]
        %v1316 = vld [vmem:[%s1084] sm:$0x1]
        %v1318 = vlaneseq
        %v1319 = vshrl.u32 %v1318, 7
        %v1320 = vsub.s32 0, %v1319
        %v1321 = vrot.slane %v1316, %v1320
        %v1327 = vunpack.c.l.b16 %v1312
        %v1328 = vunpack.c.l.b16 %v1313
        %v1329 = vunpack.c.l.b16 %v1314
        %v1330 = vunpack.c.l.b16 %v1315
        %v1331 = vpack.c.b16 %v1328, %v1327
        %v1332 = vpack.c.b16 %v1330, %v1329
        %1335 = vmatprep.subr.bf16.mxu0 0
        %1336 = vmatpush1.bf16.msra.mxu0 %v1331
        %1337 = vmatprep.subr.bf16.mxu0 0
        %1338 = vmatpush1.bf16.msra.mxu0 %v1332
        %1339 = vmatprep.subr.bf16.mxu0 0
        %1340 = vmatpush1.bf16.msra.mxu0 0
        %1341 = vmatprep.subr.bf16.mxu0 0
        %1342 = vmatpush1.bf16.msra.mxu0 0
        %1343 = vmatprep.subr.bf16.mxu0 0
        %1344 = vmatpush1.bf16.msra.mxu0 0
        %1345 = vmatprep.subr.bf16.mxu0 0
        %1346 = vmatpush1.bf16.msra.mxu0 0
        %1347 = vmatprep.subr.bf16.mxu0 0
        %1348 = vmatpush1.bf16.msra.mxu0 0
        %1349 = vmatprep.subr.bf16.mxu0 0
        %1350 = vmatpush1.bf16.msra.mxu0 0
        %1351 = vmatprep.subr.bf16.mxu0 0
        %1352 = vmatpush1.bf16.msra.mxu0 0
        %1353 = vmatprep.subr.bf16.mxu0 0
        %1354 = vmatpush1.bf16.msra.mxu0 0
        %1355 = vmatprep.subr.bf16.mxu0 0
        %1356 = vmatpush1.bf16.msra.mxu0 0
        %1357 = vmatprep.subr.bf16.mxu0 0
        %1358 = vmatpush1.bf16.msra.mxu0 0
        %1359 = vmatprep.subr.bf16.mxu0 0
        %1360 = vmatpush1.bf16.msra.mxu0 0
        %1361 = vmatprep.subr.bf16.mxu0 0
        %1362 = vmatpush1.bf16.msra.mxu0 0
        %1363 = vmatprep.subr.bf16.mxu0 0
        %1364 = vmatpush1.bf16.msra.mxu0 0
        %1365 = vmatprep.subr.bf16.mxu0 0
        %1366 = vmatpush1.bf16.msra.mxu0 0
        %1367 = vmatprep.mubr.bf16.mxu0 0
        %1368 = vmatmul.mubr.bf16.gmra.mrb[0].mxu0 %v1205
        %v1369 = vpop.f32.mrb[0].mxu0
        %v1370 = vadd.f32 %v1321, %v1369
        %v1371 = vpop.f32.mrb[0].mxu0
        %v1372 = vpop.f32.mrb[0].mxu0
        %v1373 = vadd.f32 %v1321, %v1372
        %v1374 = vpop.f32.mrb[0].mxu0
        %1375 = vdwg.mxu0
        %v1378 = vlaneseq
        %v1379 = vshrl.u32 %v1378, 7
        %v1380 = vsub.s32 0, %v1379
        %v1381 = vrot.slane %v1178, %v1380
        %v1382 = vlaneseq
        %v1383 = vshrl.u32 %v1382, 7
        %v1384 = vsub.s32 0, %v1383
        %v1385 = vrot.slane %v1179, %v1384
        %vm1388 = vcmask 64512
        %v1390 = vsel %vm1388, %v1242, 0
        %v1393 = vsel %vm1388, %v1306, 0
        %1395 = vmatprep.subr.mxu0 0.0
        %1396 = vmatpush1.xpose.msra.mxu0 %v1393
        %1397 = vmatprep.subr.mxu0 0.0
        %1398 = vmatpush1.xpose.msra.mxu0 0.0
        %1399 = vmatprep.subr.mxu0 0.0
        %1400 = vmatpush1.xpose.msra.mxu0 0.0
        %1401 = vmatprep.subr.mxu0 0.0
        %1402 = vmatpush1.xpose.msra.mxu0 0.0
        %1403 = vmatprep.subr.mxu0 0.0
        %1404 = vmatpush1.xpose.msra.mxu0 0.0
        %1405 = vmatprep.subr.mxu0 0.0
        %1406 = vmatpush1.xpose.msra.mxu0 0.0
        %1407 = vmatprep.subr.mxu0 0.0
        %1408 = vmatpush1.xpose.msra.mxu0 0.0
        %1409 = vmatprep.subr.mxu0 0.0
        %1410 = vmatpush1.xpose.msra.mxu0 0.0
        %1411 = vmatprep.subr.mxu0 0.0
        %1412 = vmatpush1.xpose.msra.mxu0 0.0
        %1413 = vmatprep.subr.mxu0 0.0
        %1414 = vmatpush1.xpose.msra.mxu0 0.0
        %1415 = vmatprep.subr.mxu0 0.0
        %1416 = vmatpush1.xpose.msra.mxu0 0.0
        %1417 = vmatprep.subr.mxu0 0.0
        %1418 = vmatpush1.xpose.msra.mxu0 0.0
        %1419 = vmatprep.subr.mxu0 0.0
        %1420 = vmatpush1.xpose.msra.mxu0 0.0
        %1421 = vmatprep.subr.mxu0 0.0
        %1422 = vmatpush1.xpose.msra.mxu0 0.0
        %1423 = vmatprep.subr.mxu0 0.0
        %1424 = vmatpush1.xpose.msra.mxu0 0.0
        %1425 = vmatprep.subr.mxu0 0.0
        %1426 = vmatpush1.xpose.msra.mxu0 0.0
        %1427 = vmatprep.subr.mxu0 0.0
        %1428 = vmatpush1.xpose.msra.mxu0 0.0
        %1429 = vmatprep.subr.mxu0 0.0
        %1430 = vmatpush1.xpose.msra.mxu0 0.0
        %1431 = vmatprep.subr.mxu0 0.0
        %1432 = vmatpush1.xpose.msra.mxu0 0.0
        %1433 = vmatprep.subr.mxu0 0.0
        %1434 = vmatpush1.xpose.msra.mxu0 0.0
        %1435 = vmatprep.subr.mxu0 0.0
        %1436 = vmatpush1.xpose.msra.mxu0 0.0
        %1437 = vmatprep.subr.mxu0 0.0
        %1438 = vmatpush1.xpose.msra.mxu0 0.0
        %1439 = vmatprep.subr.mxu0 0.0
        %1440 = vmatpush1.xpose.msra.mxu0 0.0
        %1441 = vmatprep.subr.mxu0 0.0
        %1442 = vmatpush1.xpose.msra.mxu0 0.0
        %1443 = vmatprep.subr.mxu0 0.0
        %1444 = vmatpush1.xpose.msra.mxu0 0.0
        %1445 = vmatprep.subr.mxu0 0.0
        %1446 = vmatpush1.xpose.msra.mxu0 0.0
        %1447 = vmatprep.subr.mxu0 0.0
        %1448 = vmatpush1.xpose.msra.mxu0 0.0
        %1449 = vmatprep.subr.mxu0 0.0
        %1450 = vmatpush1.xpose.msra.mxu0 0.0
        %1451 = vmatprep.subr.mxu0 0.0
        %1452 = vmatpush1.xpose.msra.mxu0 0.0
        %1453 = vmatprep.subr.mxu0 0.0
        %1454 = vmatpush1.xpose.msra.mxu0 0.0
        %1455 = vmatprep.subr.mxu0 0.0
        %1456 = vmatpush1.xpose.msra.mxu0 0.0
        %1457 = vmatprep.subr.mxu0 0.0
        %1458 = vmatpush1.xpose.msra.mxu0 0.0
        %1459 = vmatprep.mubr.f32.mxu0 0.0
        %1460 = vmatmul.mubr.f32.gmra.mrb[0].mxu0 %v1390
        %v1461 = vpop.f32.mrb[0].mxu0
        %v1462 = vadd.f32 %v1381, %v1461
        %v1463 = vpop.f32.mrb[0].mxu0
        %1464 = vdwg.mxu0
        %v1466 = vsel %vm1388, %v1245, 0
        %v1469 = vsel %vm1388, %v1309, 0
        %1471 = vmatprep.subr.mxu0 0.0
        %1472 = vmatpush1.xpose.msra.mxu0 %v1469
        %1473 = vmatprep.subr.mxu0 0.0
        %1474 = vmatpush1.xpose.msra.mxu0 0.0
        %1475 = vmatprep.subr.mxu0 0.0
        %1476 = vmatpush1.xpose.msra.mxu0 0.0
        %1477 = vmatprep.subr.mxu0 0.0
        %1478 = vmatpush1.xpose.msra.mxu0 0.0
        %1479 = vmatprep.subr.mxu0 0.0
        %1480 = vmatpush1.xpose.msra.mxu0 0.0
        %1481 = vmatprep.subr.mxu0 0.0
        %1482 = vmatpush1.xpose.msra.mxu0 0.0
        %1483 = vmatprep.subr.mxu0 0.0
        %1484 = vmatpush1.xpose.msra.mxu0 0.0
        %1485 = vmatprep.subr.mxu0 0.0
        %1486 = vmatpush1.xpose.msra.mxu0 0.0
        %1487 = vmatprep.subr.mxu0 0.0
        %1488 = vmatpush1.xpose.msra.mxu0 0.0
        %1489 = vmatprep.subr.mxu0 0.0
        %1490 = vmatpush1.xpose.msra.mxu0 0.0
        %1491 = vmatprep.subr.mxu0 0.0
        %1492 = vmatpush1.xpose.msra.mxu0 0.0
        %1493 = vmatprep.subr.mxu0 0.0
        %1494 = vmatpush1.xpose.msra.mxu0 0.0
        %1495 = vmatprep.subr.mxu0 0.0
        %1496 = vmatpush1.xpose.msra.mxu0 0.0
        %1497 = vmatprep.subr.mxu0 0.0
        %1498 = vmatpush1.xpose.msra.mxu0 0.0
        %1499 = vmatprep.subr.mxu0 0.0
        %1500 = vmatpush1.xpose.msra.mxu0 0.0
        %1501 = vmatprep.subr.mxu0 0.0
        %1502 = vmatpush1.xpose.msra.mxu0 0.0
        %1503 = vmatprep.subr.mxu0 0.0
        %1504 = vmatpush1.xpose.msra.mxu0 0.0
        %1505 = vmatprep.subr.mxu0 0.0
        %1506 = vmatpush1.xpose.msra.mxu0 0.0
        %1507 = vmatprep.subr.mxu0 0.0
        %1508 = vmatpush1.xpose.msra.mxu0 0.0
        %1509 = vmatprep.subr.mxu0 0.0
        %1510 = vmatpush1.xpose.msra.mxu0 0.0
        %1511 = vmatprep.subr.mxu0 0.0
        %1512 = vmatpush1.xpose.msra.mxu0 0.0
        %1513 = vmatprep.subr.mxu0 0.0
        %1514 = vmatpush1.xpose.msra.mxu0 0.0
        %1515 = vmatprep.subr.mxu0 0.0
        %1516 = vmatpush1.xpose.msra.mxu0 0.0
        %1517 = vmatprep.subr.mxu0 0.0
        %1518 = vmatpush1.xpose.msra.mxu0 0.0
        %1519 = vmatprep.subr.mxu0 0.0
        %1520 = vmatpush1.xpose.msra.mxu0 0.0
        %1521 = vmatprep.subr.mxu0 0.0
        %1522 = vmatpush1.xpose.msra.mxu0 0.0
        %1523 = vmatprep.subr.mxu0 0.0
        %1524 = vmatpush1.xpose.msra.mxu0 0.0
        %1525 = vmatprep.subr.mxu0 0.0
        %1526 = vmatpush1.xpose.msra.mxu0 0.0
        %1527 = vmatprep.subr.mxu0 0.0
        %1528 = vmatpush1.xpose.msra.mxu0 0.0
        %1529 = vmatprep.subr.mxu0 0.0
        %1530 = vmatpush1.xpose.msra.mxu0 0.0
        %1531 = vmatprep.subr.mxu0 0.0
        %1532 = vmatpush1.xpose.msra.mxu0 0.0
        %1533 = vmatprep.subr.mxu0 0.0
        %1534 = vmatpush1.xpose.msra.mxu0 0.0
        %1535 = vmatprep.mubr.f32.mxu0 0.0
        %1536 = vmatmul.mubr.f32.gmra.mrb[0].mxu0 %v1466
        %v1537 = vpop.f32.mrb[0].mxu0
        %v1538 = vadd.f32 %v1385, %v1537
        %v1539 = vpop.f32.mrb[0].mxu0
        %1540 = vdwg.mxu0
        %v1541 = vsel %vm1388, %v1462, -inf
        %1542 = vmax.xlane.f32.xlu0 %v1541
        %v1543 = vpop.xlane.xlu0 %1542
        %v1544 = vsel %vm1388, %v1538, -inf
        %1545 = vmax.xlane.f32.xlu0 %v1544
        %v1546 = vpop.xlane.xlu0 %1545
        %v1547 = vsub.f32 %v1462, %v1543
        %v1548 = vsub.f32 %v1538, %v1546
        %v1549 = vmul.f32 %v1547, 1.442695
        %v1550 = vpow.pop %v1549
        %v1551 = vmul.f32 %v1548, 1.442695
        %v1552 = vpow.pop %v1551
        %v1553 = vsel %vm1388, %v1550, 0.0
        %1554 = vadd.xlane.f32.xlu0 %v1553
        %v1555 = vpop.xlane.xlu0 %1554
        %v1556 = vsel %vm1388, %v1552, 0.0
        %1557 = vadd.xlane.f32.xlu0 %v1556
        %v1558 = vpop.xlane.xlu0 %1557
        %v1559 = vrcp.pop %v1555
        %v1560 = vrcp.pop %v1558
        %v1561 = vmul.f32 %v1550, %v1559
        %v1562 = vmul.f32 %v1552, %v1560
        %v1563 = vpack.c.bf16 %v1561, %v1561
        %v1564 = vpack.c.bf16 %v1562, %v1562
        %v1565 = vpack.c.bf16 %v1370, %v1370
        %v1566 = vpack.c.bf16 %v1373, %v1373
        %v1568 = vsel %vm1388, %v1563, 0
        %vm1570 = vcmask 1043456
        %v1572 = vsel %vm1570, %v1565, 0
        %1574 = vmatprep.subr.bf16.mxu0 0
        %1575 = vmatpush1.bf16.msra.mxu0 %v1572
        %1576 = vmatprep.subr.bf16.mxu0 0
        %1577 = vmatpush1.bf16.msra.mxu0 0
        %1578 = vmatprep.subr.bf16.mxu0 0
        %1579 = vmatpush1.bf16.msra.mxu0 0
        %1580 = vmatprep.subr.bf16.mxu0 0
        %1581 = vmatpush1.bf16.msra.mxu0 0
        %1582 = vmatprep.subr.bf16.mxu0 0
        %1583 = vmatpush1.bf16.msra.mxu0 0
        %1584 = vmatprep.subr.bf16.mxu0 0
        %1585 = vmatpush1.bf16.msra.mxu0 0
        %1586 = vmatprep.subr.bf16.mxu0 0
        %1587 = vmatpush1.bf16.msra.mxu0 0
        %1588 = vmatprep.subr.bf16.mxu0 0
        %1589 = vmatpush1.bf16.msra.mxu0 0
        %1590 = vmatprep.subr.bf16.mxu0 0
        %1591 = vmatpush1.bf16.msra.mxu0 0
        %1592 = vmatprep.subr.bf16.mxu0 0
        %1593 = vmatpush1.bf16.msra.mxu0 0
        %1594 = vmatprep.subr.bf16.mxu0 0
        %1595 = vmatpush1.bf16.msra.mxu0 0
        %1596 = vmatprep.subr.bf16.mxu0 0
        %1597 = vmatpush1.bf16.msra.mxu0 0
        %1598 = vmatprep.subr.bf16.mxu0 0
        %1599 = vmatpush1.bf16.msra.mxu0 0
        %1600 = vmatprep.subr.bf16.mxu0 0
        %1601 = vmatpush1.bf16.msra.mxu0 0
        %1602 = vmatprep.subr.bf16.mxu0 0
        %1603 = vmatpush1.bf16.msra.mxu0 0
        %1604 = vmatprep.subr.bf16.mxu0 0
        %1605 = vmatpush1.bf16.msra.mxu0 0
        %1606 = vmatprep.mubr.bf16.mxu0 0
        %1607 = vmatmul.mubr.bf16.gmra.mrb[0].mxu0 %v1568
        %v1608 = vpop.f32.mrb[0].mxu0
        %v1609 = vadd.f32 0.0, %v1608
        %v1610 = vpop.f32.mrb[0].mxu0
        %v1611 = vpop.f32.mrb[0].mxu0
        %v1612 = vpop.f32.mrb[0].mxu0
        %1613 = vdwg.mxu0
        %v1615 = vsel %vm1388, %v1564, 0
        %v1618 = vsel %vm1570, %v1566, 0
        %1620 = vmatprep.subr.bf16.mxu0 0
        %1621 = vmatpush1.bf16.msra.mxu0 %v1618
        %1622 = vmatprep.subr.bf16.mxu0 0
        %1623 = vmatpush1.bf16.msra.mxu0 0
        %1624 = vmatprep.subr.bf16.mxu0 0
        %1625 = vmatpush1.bf16.msra.mxu0 0
        %1626 = vmatprep.subr.bf16.mxu0 0
        %1627 = vmatpush1.bf16.msra.mxu0 0
        %1628 = vmatprep.subr.bf16.mxu0 0
        %1629 = vmatpush1.bf16.msra.mxu0 0
        %1630 = vmatprep.subr.bf16.mxu0 0
        %1631 = vmatpush1.bf16.msra.mxu0 0
        %1632 = vmatprep.subr.bf16.mxu0 0
        %1633 = vmatpush1.bf16.msra.mxu0 0
        %1634 = vmatprep.subr.bf16.mxu0 0
        %1635 = vmatpush1.bf16.msra.mxu0 0
        %1636 = vmatprep.subr.bf16.mxu0 0
        %1637 = vmatpush1.bf16.msra.mxu0 0
        %1638 = vmatprep.subr.bf16.mxu0 0
        %1639 = vmatpush1.bf16.msra.mxu0 0
        %1640 = vmatprep.subr.bf16.mxu0 0
        %1641 = vmatpush1.bf16.msra.mxu0 0
        %1642 = vmatprep.subr.bf16.mxu0 0
        %1643 = vmatpush1.bf16.msra.mxu0 0
        %1644 = vmatprep.subr.bf16.mxu0 0
        %1645 = vmatpush1.bf16.msra.mxu0 0
        %1646 = vmatprep.subr.bf16.mxu0 0
        %1647 = vmatpush1.bf16.msra.mxu0 0
        %1648 = vmatprep.subr.bf16.mxu0 0
        %1649 = vmatpush1.bf16.msra.mxu0 0
        %1650 = vmatprep.subr.bf16.mxu0 0
        %1651 = vmatpush1.bf16.msra.mxu0 0
        %1652 = vmatprep.mubr.bf16.mxu0 0
        %1653 = vmatmul.mubr.bf16.gmra.mrb[0].mxu0 %v1615
        %v1654 = vpop.f32.mrb[0].mxu0
        %v1655 = vadd.f32 0.0, %v1654
        %v1656 = vpop.f32.mrb[0].mxu0
        %v1657 = vpop.f32.mrb[0].mxu0
        %v1658 = vpop.f32.mrb[0].mxu0
        %1659 = vdwg.mxu0
        %1660 = vrot.lane.b32.xlu0 %v1242, 120
        %v1661 = vpop.permute.xlu0 %1660
        %1662 = vrot.lane.b32.xlu0 %v1306, 120
        %v1663 = vpop.permute.xlu0 %1662
        %v1664 = vsel %vm1388, %v1661, 0
        %v1666 = vsel %vm1388, %v1663, 0
        %1668 = vmatprep.subr.mxu0 0.0
        %1669 = vmatpush1.xpose.msra.mxu0 %v1666
        %1670 = vmatprep.subr.mxu0 0.0
        %1671 = vmatpush1.xpose.msra.mxu0 0.0
        %1672 = vmatprep.subr.mxu0 0.0
        %1673 = vmatpush1.xpose.msra.mxu0 0.0
        %1674 = vmatprep.subr.mxu0 0.0
        %1675 = vmatpush1.xpose.msra.mxu0 0.0
        %1676 = vmatprep.subr.mxu0 0.0
        %1677 = vmatpush1.xpose.msra.mxu0 0.0
        %1678 = vmatprep.subr.mxu0 0.0
        %1679 = vmatpush1.xpose.msra.mxu0 0.0
        %1680 = vmatprep.subr.mxu0 0.0
        %1681 = vmatpush1.xpose.msra.mxu0 0.0
        %1682 = vmatprep.subr.mxu0 0.0
        %1683 = vmatpush1.xpose.msra.mxu0 0.0
        %1684 = vmatprep.subr.mxu0 0.0
        %1685 = vmatpush1.xpose.msra.mxu0 0.0
        %1686 = vmatprep.subr.mxu0 0.0
        %1687 = vmatpush1.xpose.msra.mxu0 0.0
        %1688 = vmatprep.subr.mxu0 0.0
        %1689 = vmatpush1.xpose.msra.mxu0 0.0
        %1690 = vmatprep.subr.mxu0 0.0
        %1691 = vmatpush1.xpose.msra.mxu0 0.0
        %1692 = vmatprep.subr.mxu0 0.0
        %1693 = vmatpush1.xpose.msra.mxu0 0.0
        %1694 = vmatprep.subr.mxu0 0.0
        %1695 = vmatpush1.xpose.msra.mxu0 0.0
        %1696 = vmatprep.subr.mxu0 0.0
        %1697 = vmatpush1.xpose.msra.mxu0 0.0
        %1698 = vmatprep.subr.mxu0 0.0
        %1699 = vmatpush1.xpose.msra.mxu0 0.0
        %1700 = vmatprep.subr.mxu0 0.0
        %1701 = vmatpush1.xpose.msra.mxu0 0.0
        %1702 = vmatprep.subr.mxu0 0.0
        %1703 = vmatpush1.xpose.msra.mxu0 0.0
        %1704 = vmatprep.subr.mxu0 0.0
        %1705 = vmatpush1.xpose.msra.mxu0 0.0
        %1706 = vmatprep.subr.mxu0 0.0
        %1707 = vmatpush1.xpose.msra.mxu0 0.0
        %1708 = vmatprep.subr.mxu0 0.0
        %1709 = vmatpush1.xpose.msra.mxu0 0.0
        %1710 = vmatprep.subr.mxu0 0.0
        %1711 = vmatpush1.xpose.msra.mxu0 0.0
        %1712 = vmatprep.subr.mxu0 0.0
        %1713 = vmatpush1.xpose.msra.mxu0 0.0
        %1714 = vmatprep.subr.mxu0 0.0
        %1715 = vmatpush1.xpose.msra.mxu0 0.0
        %1716 = vmatprep.subr.mxu0 0.0
        %1717 = vmatpush1.xpose.msra.mxu0 0.0
        %1718 = vmatprep.subr.mxu0 0.0
        %1719 = vmatpush1.xpose.msra.mxu0 0.0
        %1720 = vmatprep.subr.mxu0 0.0
        %1721 = vmatpush1.xpose.msra.mxu0 0.0
        %1722 = vmatprep.subr.mxu0 0.0
        %1723 = vmatpush1.xpose.msra.mxu0 0.0
        %1724 = vmatprep.subr.mxu0 0.0
        %1725 = vmatpush1.xpose.msra.mxu0 0.0
        %1726 = vmatprep.subr.mxu0 0.0
        %1727 = vmatpush1.xpose.msra.mxu0 0.0
        %1728 = vmatprep.subr.mxu0 0.0
        %1729 = vmatpush1.xpose.msra.mxu0 0.0
        %1730 = vmatprep.subr.mxu0 0.0
        %1731 = vmatpush1.xpose.msra.mxu0 0.0
        %1732 = vmatprep.mubr.f32.mxu0 0.0
        %1733 = vmatmul.mubr.f32.gmra.mrb[0].mxu0 %v1664
        %v1734 = vpop.f32.mrb[0].mxu0
        %v1735 = vadd.f32 %v1381, %v1734
        %v1736 = vpop.f32.mrb[0].mxu0
        %1737 = vdwg.mxu0
        %1738 = vrot.lane.b32.xlu0 %v1245, 120
        %v1739 = vpop.permute.xlu0 %1738
        %1740 = vrot.lane.b32.xlu0 %v1309, 120
        %v1741 = vpop.permute.xlu0 %1740
        %v1742 = vsel %vm1388, %v1739, 0
        %v1744 = vsel %vm1388, %v1741, 0
        %1746 = vmatprep.subr.mxu0 0.0
        %1747 = vmatpush1.xpose.msra.mxu0 %v1744
        %1748 = vmatprep.subr.mxu0 0.0
        %1749 = vmatpush1.xpose.msra.mxu0 0.0
        %1750 = vmatprep.subr.mxu0 0.0
        %1751 = vmatpush1.xpose.msra.mxu0 0.0
        %1752 = vmatprep.subr.mxu0 0.0
        %1753 = vmatpush1.xpose.msra.mxu0 0.0
        %1754 = vmatprep.subr.mxu0 0.0
        %1755 = vmatpush1.xpose.msra.mxu0 0.0
        %1756 = vmatprep.subr.mxu0 0.0
        %1757 = vmatpush1.xpose.msra.mxu0 0.0
        %1758 = vmatprep.subr.mxu0 0.0
        %1759 = vmatpush1.xpose.msra.mxu0 0.0
        %1760 = vmatprep.subr.mxu0 0.0
        %1761 = vmatpush1.xpose.msra.mxu0 0.0
        %1762 = vmatprep.subr.mxu0 0.0
        %1763 = vmatpush1.xpose.msra.mxu0 0.0
        %1764 = vmatprep.subr.mxu0 0.0
        %1765 = vmatpush1.xpose.msra.mxu0 0.0
        %1766 = vmatprep.subr.mxu0 0.0
        %1767 = vmatpush1.xpose.msra.mxu0 0.0
        %1768 = vmatprep.subr.mxu0 0.0
        %1769 = vmatpush1.xpose.msra.mxu0 0.0
        %1770 = vmatprep.subr.mxu0 0.0
        %1771 = vmatpush1.xpose.msra.mxu0 0.0
        %1772 = vmatprep.subr.mxu0 0.0
        %1773 = vmatpush1.xpose.msra.mxu0 0.0
        %1774 = vmatprep.subr.mxu0 0.0
        %1775 = vmatpush1.xpose.msra.mxu0 0.0
        %1776 = vmatprep.subr.mxu0 0.0
        %1777 = vmatpush1.xpose.msra.mxu0 0.0
        %1778 = vmatprep.subr.mxu0 0.0
        %1779 = vmatpush1.xpose.msra.mxu0 0.0
        %1780 = vmatprep.subr.mxu0 0.0
        %1781 = vmatpush1.xpose.msra.mxu0 0.0
        %1782 = vmatprep.subr.mxu0 0.0
        %1783 = vmatpush1.xpose.msra.mxu0 0.0
        %1784 = vmatprep.subr.mxu0 0.0
        %1785 = vmatpush1.xpose.msra.mxu0 0.0
        %1786 = vmatprep.subr.mxu0 0.0
        %1787 = vmatpush1.xpose.msra.mxu0 0.0
        %1788 = vmatprep.subr.mxu0 0.0
        %1789 = vmatpush1.xpose.msra.mxu0 0.0
        %1790 = vmatprep.subr.mxu0 0.0
        %1791 = vmatpush1.xpose.msra.mxu0 0.0
        %1792 = vmatprep.subr.mxu0 0.0
        %1793 = vmatpush1.xpose.msra.mxu0 0.0
        %1794 = vmatprep.subr.mxu0 0.0
        %1795 = vmatpush1.xpose.msra.mxu0 0.0
        %1796 = vmatprep.subr.mxu0 0.0
        %1797 = vmatpush1.xpose.msra.mxu0 0.0
        %1798 = vmatprep.subr.mxu0 0.0
        %1799 = vmatpush1.xpose.msra.mxu0 0.0
        %1800 = vmatprep.subr.mxu0 0.0
        %1801 = vmatpush1.xpose.msra.mxu0 0.0
        %1802 = vmatprep.subr.mxu0 0.0
        %1803 = vmatpush1.xpose.msra.mxu0 0.0
        %1804 = vmatprep.subr.mxu0 0.0
        %1805 = vmatpush1.xpose.msra.mxu0 0.0
        %1806 = vmatprep.subr.mxu0 0.0
        %1807 = vmatpush1.xpose.msra.mxu0 0.0
        %1808 = vmatprep.subr.mxu0 0.0
        %1809 = vmatpush1.xpose.msra.mxu0 0.0
        %1810 = vmatprep.mubr.f32.mxu0 0.0
        %1811 = vmatmul.mubr.f32.gmra.mrb[0].mxu0 %v1742
        %v1812 = vpop.f32.mrb[0].mxu0
        %v1813 = vadd.f32 %v1385, %v1812
        %v1814 = vpop.f32.mrb[0].mxu0
        %1815 = vdwg.mxu0
        %v1816 = vsel %vm1388, %v1735, -inf
        %1817 = vmax.xlane.f32.xlu0 %v1816
        %v1818 = vpop.xlane.xlu0 %1817
        %v1819 = vsel %vm1388, %v1813, -inf
        %1820 = vmax.xlane.f32.xlu0 %v1819
        %v1821 = vpop.xlane.xlu0 %1820
        %v1822 = vsub.f32 %v1735, %v1818
        %v1823 = vsub.f32 %v1813, %v1821
        %v1824 = vmul.f32 %v1822, 1.442695
        %v1825 = vpow.pop %v1824
        %v1826 = vmul.f32 %v1823, 1.442695
        %v1827 = vpow.pop %v1826
        %v1828 = vsel %vm1388, %v1825, 0.0
        %1829 = vadd.xlane.f32.xlu0 %v1828
        %v1830 = vpop.xlane.xlu0 %1829
        %v1831 = vsel %vm1388, %v1827, 0.0
        %1832 = vadd.xlane.f32.xlu0 %v1831
        %v1833 = vpop.xlane.xlu0 %1832
        %v1834 = vrcp.pop %v1830
        %v1835 = vrcp.pop %v1833
        %v1836 = vmul.f32 %v1825, %v1834
        %v1837 = vmul.f32 %v1827, %v1835
        %v1838 = vpack.c.bf16 %v1836, %v1836
        %v1839 = vpack.c.bf16 %v1837, %v1837
        %1841 = vrot.lane.b32.xlu0 %v1565, 120
        %v1842 = vpop.permute.xlu0 %1841
        %v1844 = vsel %vm1388, %v1838, 0
        %v1847 = vsel %vm1570, %v1842, 0
        %1849 = vmatprep.subr.bf16.mxu0 0
        %1850 = vmatpush1.bf16.msra.mxu0 %v1847
        %1851 = vmatprep.subr.bf16.mxu0 0
        %1852 = vmatpush1.bf16.msra.mxu0 0
        %1853 = vmatprep.subr.bf16.mxu0 0
        %1854 = vmatpush1.bf16.msra.mxu0 0
        %1855 = vmatprep.subr.bf16.mxu0 0
        %1856 = vmatpush1.bf16.msra.mxu0 0
        %1857 = vmatprep.subr.bf16.mxu0 0
        %1858 = vmatpush1.bf16.msra.mxu0 0
        %1859 = vmatprep.subr.bf16.mxu0 0
        %1860 = vmatpush1.bf16.msra.mxu0 0
        %1861 = vmatprep.subr.bf16.mxu0 0
        %1862 = vmatpush1.bf16.msra.mxu0 0
        %1863 = vmatprep.subr.bf16.mxu0 0
        %1864 = vmatpush1.bf16.msra.mxu0 0
        %1865 = vmatprep.subr.bf16.mxu0 0
        %1866 = vmatpush1.bf16.msra.mxu0 0
        %1867 = vmatprep.subr.bf16.mxu0 0
        %1868 = vmatpush1.bf16.msra.mxu0 0
        %1869 = vmatprep.subr.bf16.mxu0 0
        %1870 = vmatpush1.bf16.msra.mxu0 0
        %1871 = vmatprep.subr.bf16.mxu0 0
        %1872 = vmatpush1.bf16.msra.mxu0 0
        %1873 = vmatprep.subr.bf16.mxu0 0
        %1874 = vmatpush1.bf16.msra.mxu0 0
        %1875 = vmatprep.subr.bf16.mxu0 0
        %1876 = vmatpush1.bf16.msra.mxu0 0
        %1877 = vmatprep.subr.bf16.mxu0 0
        %1878 = vmatpush1.bf16.msra.mxu0 0
        %1879 = vmatprep.subr.bf16.mxu0 0
        %1880 = vmatpush1.bf16.msra.mxu0 0
        %1881 = vmatprep.mubr.bf16.mxu0 0
        %1882 = vmatmul.mubr.bf16.gmra.mrb[0].mxu0 %v1844
        %v1883 = vpop.f32.mrb[0].mxu0
        %v1884 = vadd.f32 0.0, %v1883
        %v1885 = vpop.f32.mrb[0].mxu0
        %v1886 = vpop.f32.mrb[0].mxu0
        %v1887 = vpop.f32.mrb[0].mxu0
        %1888 = vdwg.mxu0
        %1890 = vrot.lane.b32.xlu0 %v1566, 120
        %v1891 = vpop.permute.xlu0 %1890
        %v1893 = vsel %vm1388, %v1839, 0
        %v1896 = vsel %vm1570, %v1891, 0
        %1898 = vmatprep.subr.bf16.mxu0 0
        %1899 = vmatpush1.bf16.msra.mxu0 %v1896
        %1900 = vmatprep.subr.bf16.mxu0 0
        %1901 = vmatpush1.bf16.msra.mxu0 0
        %1902 = vmatprep.subr.bf16.mxu0 0
        %1903 = vmatpush1.bf16.msra.mxu0 0
        %1904 = vmatprep.subr.bf16.mxu0 0
        %1905 = vmatpush1.bf16.msra.mxu0 0
        %1906 = vmatprep.subr.bf16.mxu0 0
        %1907 = vmatpush1.bf16.msra.mxu0 0
        %1908 = vmatprep.subr.bf16.mxu0 0
        %1909 = vmatpush1.bf16.msra.mxu0 0
        %1910 = vmatprep.subr.bf16.mxu0 0
        %1911 = vmatpush1.bf16.msra.mxu0 0
        %1912 = vmatprep.subr.bf16.mxu0 0
        %1913 = vmatpush1.bf16.msra.mxu0 0
        %1914 = vmatprep.subr.bf16.mxu0 0
        %1915 = vmatpush1.bf16.msra.mxu0 0
        %1916 = vmatprep.subr.bf16.mxu0 0
        %1917 = vmatpush1.bf16.msra.mxu0 0
        %1918 = vmatprep.subr.bf16.mxu0 0
        %1919 = vmatpush1.bf16.msra.mxu0 0
        %1920 = vmatprep.subr.bf16.mxu0 0
        %1921 = vmatpush1.bf16.msra.mxu0 0
        %1922 = vmatprep.subr.bf16.mxu0 0
        %1923 = vmatpush1.bf16.msra.mxu0 0
        %1924 = vmatprep.subr.bf16.mxu0 0
        %1925 = vmatpush1.bf16.msra.mxu0 0
        %1926 = vmatprep.subr.bf16.mxu0 0
        %1927 = vmatpush1.bf16.msra.mxu0 0
        %1928 = vmatprep.subr.bf16.mxu0 0
        %1929 = vmatpush1.bf16.msra.mxu0 0
        %1930 = vmatprep.mubr.bf16.mxu0 0
        %1931 = vmatmul.mubr.bf16.gmra.mrb[0].mxu0 %v1893
        %v1932 = vpop.f32.mrb[0].mxu0
        %v1933 = vadd.f32 0.0, %v1932
        %v1934 = vpop.f32.mrb[0].mxu0
        %v1935 = vpop.f32.mrb[0].mxu0
        %v1936 = vpop.f32.mrb[0].mxu0
        %1937 = vdwg.mxu0
        %1938 = vrot.lane.b32.xlu0 %v1242, 112
        %v1939 = vpop.permute.xlu0 %1938
        %1940 = vrot.lane.b32.xlu0 %v1306, 112
        %v1941 = vpop.permute.xlu0 %1940
        %v1942 = vsel %vm1388, %v1939, 0
        %v1944 = vsel %vm1388, %v1941, 0
        %1946 = vmatprep.subr.mxu0 0.0
        %1947 = vmatpush1.xpose.msra.mxu0 %v1944
        %1948 = vmatprep.subr.mxu0 0.0
        %1949 = vmatpush1.xpose.msra.mxu0 0.0
        %1950 = vmatprep.subr.mxu0 0.0
        %1951 = vmatpush1.xpose.msra.mxu0 0.0
        %1952 = vmatprep.subr.mxu0 0.0
        %1953 = vmatpush1.xpose.msra.mxu0 0.0
        %1954 = vmatprep.subr.mxu0 0.0
        %1955 = vmatpush1.xpose.msra.mxu0 0.0
        %1956 = vmatprep.subr.mxu0 0.0
        %1957 = vmatpush1.xpose.msra.mxu0 0.0
        %1958 = vmatprep.subr.mxu0 0.0
        %1959 = vmatpush1.xpose.msra.mxu0 0.0
        %1960 = vmatprep.subr.mxu0 0.0
        %1961 = vmatpush1.xpose.msra.mxu0 0.0
        %1962 = vmatprep.subr.mxu0 0.0
        %1963 = vmatpush1.xpose.msra.mxu0 0.0
        %1964 = vmatprep.subr.mxu0 0.0
        %1965 = vmatpush1.xpose.msra.mxu0 0.0
        %1966 = vmatprep.subr.mxu0 0.0
        %1967 = vmatpush1.xpose.msra.mxu0 0.0
        %1968 = vmatprep.subr.mxu0 0.0
        %1969 = vmatpush1.xpose.msra.mxu0 0.0
        %1970 = vmatprep.subr.mxu0 0.0
        %1971 = vmatpush1.xpose.msra.mxu0 0.0
        %1972 = vmatprep.subr.mxu0 0.0
        %1973 = vmatpush1.xpose.msra.mxu0 0.0
        %1974 = vmatprep.subr.mxu0 0.0
        %1975 = vmatpush1.xpose.msra.mxu0 0.0
        %1976 = vmatprep.subr.mxu0 0.0
        %1977 = vmatpush1.xpose.msra.mxu0 0.0
        %1978 = vmatprep.subr.mxu0 0.0
        %1979 = vmatpush1.xpose.msra.mxu0 0.0
        %1980 = vmatprep.subr.mxu0 0.0
        %1981 = vmatpush1.xpose.msra.mxu0 0.0
        %1982 = vmatprep.subr.mxu0 0.0
        %1983 = vmatpush1.xpose.msra.mxu0 0.0
        %1984 = vmatprep.subr.mxu0 0.0
        %1985 = vmatpush1.xpose.msra.mxu0 0.0
        %1986 = vmatprep.subr.mxu0 0.0
        %1987 = vmatpush1.xpose.msra.mxu0 0.0
        %1988 = vmatprep.subr.mxu0 0.0
        %1989 = vmatpush1.xpose.msra.mxu0 0.0
        %1990 = vmatprep.subr.mxu0 0.0
        %1991 = vmatpush1.xpose.msra.mxu0 0.0
        %1992 = vmatprep.subr.mxu0 0.0
        %1993 = vmatpush1.xpose.msra.mxu0 0.0
        %1994 = vmatprep.subr.mxu0 0.0
        %1995 = vmatpush1.xpose.msra.mxu0 0.0
        %1996 = vmatprep.subr.mxu0 0.0
        %1997 = vmatpush1.xpose.msra.mxu0 0.0
        %1998 = vmatprep.subr.mxu0 0.0
        %1999 = vmatpush1.xpose.msra.mxu0 0.0
        %2000 = vmatprep.subr.mxu0 0.0
        %2001 = vmatpush1.xpose.msra.mxu0 0.0
        %2002 = vmatprep.subr.mxu0 0.0
        %2003 = vmatpush1.xpose.msra.mxu0 0.0
        %2004 = vmatprep.subr.mxu0 0.0
        %2005 = vmatpush1.xpose.msra.mxu0 0.0
        %2006 = vmatprep.subr.mxu0 0.0
        %2007 = vmatpush1.xpose.msra.mxu0 0.0
        %2008 = vmatprep.subr.mxu0 0.0
        %2009 = vmatpush1.xpose.msra.mxu0 0.0
        %2010 = vmatprep.mubr.f32.mxu0 0.0
        %2011 = vmatmul.mubr.f32.gmra.mrb[0].mxu0 %v1942
        %v2012 = vpop.f32.mrb[0].mxu0
        %v2013 = vadd.f32 %v1381, %v2012
        %v2014 = vpop.f32.mrb[0].mxu0
        %2015 = vdwg.mxu0
        %2016 = vrot.lane.b32.xlu0 %v1245, 112
        %v2017 = vpop.permute.xlu0 %2016
        %2018 = vrot.lane.b32.xlu0 %v1309, 112
        %v2019 = vpop.permute.xlu0 %2018
        %v2020 = vsel %vm1388, %v2017, 0
        %v2022 = vsel %vm1388, %v2019, 0
        %2024 = vmatprep.subr.mxu0 0.0
        %2025 = vmatpush1.xpose.msra.mxu0 %v2022
        %2026 = vmatprep.subr.mxu0 0.0
        %2027 = vmatpush1.xpose.msra.mxu0 0.0
        %2028 = vmatprep.subr.mxu0 0.0
        %2029 = vmatpush1.xpose.msra.mxu0 0.0
        %2030 = vmatprep.subr.mxu0 0.0
        %2031 = vmatpush1.xpose.msra.mxu0 0.0
        %2032 = vmatprep.subr.mxu0 0.0
        %2033 = vmatpush1.xpose.msra.mxu0 0.0
        %2034 = vmatprep.subr.mxu0 0.0
        %2035 = vmatpush1.xpose.msra.mxu0 0.0
        %2036 = vmatprep.subr.mxu0 0.0
        %2037 = vmatpush1.xpose.msra.mxu0 0.0
        %2038 = vmatprep.subr.mxu0 0.0
        %2039 = vmatpush1.xpose.msra.mxu0 0.0
        %2040 = vmatprep.subr.mxu0 0.0
        %2041 = vmatpush1.xpose.msra.mxu0 0.0
        %2042 = vmatprep.subr.mxu0 0.0
        %2043 = vmatpush1.xpose.msra.mxu0 0.0
        %2044 = vmatprep.subr.mxu0 0.0
        %2045 = vmatpush1.xpose.msra.mxu0 0.0
        %2046 = vmatprep.subr.mxu0 0.0
        %2047 = vmatpush1.xpose.msra.mxu0 0.0
        %2048 = vmatprep.subr.mxu0 0.0
        %2049 = vmatpush1.xpose.msra.mxu0 0.0
        %2050 = vmatprep.subr.mxu0 0.0
        %2051 = vmatpush1.xpose.msra.mxu0 0.0
        %2052 = vmatprep.subr.mxu0 0.0
        %2053 = vmatpush1.xpose.msra.mxu0 0.0
        %2054 = vmatprep.subr.mxu0 0.0
        %2055 = vmatpush1.xpose.msra.mxu0 0.0
        %2056 = vmatprep.subr.mxu0 0.0
        %2057 = vmatpush1.xpose.msra.mxu0 0.0
        %2058 = vmatprep.subr.mxu0 0.0
        %2059 = vmatpush1.xpose.msra.mxu0 0.0
        %2060 = vmatprep.subr.mxu0 0.0
        %2061 = vmatpush1.xpose.msra.mxu0 0.0
        %2062 = vmatprep.subr.mxu0 0.0
        %2063 = vmatpush1.xpose.msra.mxu0 0.0
        %2064 = vmatprep.subr.mxu0 0.0
        %2065 = vmatpush1.xpose.msra.mxu0 0.0
        %2066 = vmatprep.subr.mxu0 0.0
        %2067 = vmatpush1.xpose.msra.mxu0 0.0
        %2068 = vmatprep.subr.mxu0 0.0
        %2069 = vmatpush1.xpose.msra.mxu0 0.0
        %2070 = vmatprep.subr.mxu0 0.0
        %2071 = vmatpush1.xpose.msra.mxu0 0.0
        %2072 = vmatprep.subr.mxu0 0.0
        %2073 = vmatpush1.xpose.msra.mxu0 0.0
        %2074 = vmatprep.subr.mxu0 0.0
        %2075 = vmatpush1.xpose.msra.mxu0 0.0
        %2076 = vmatprep.subr.mxu0 0.0
        %2077 = vmatpush1.xpose.msra.mxu0 0.0
        %2078 = vmatprep.subr.mxu0 0.0
        %2079 = vmatpush1.xpose.msra.mxu0 0.0
        %2080 = vmatprep.subr.mxu0 0.0
        %2081 = vmatpush1.xpose.msra.mxu0 0.0
        %2082 = vmatprep.subr.mxu0 0.0
        %2083 = vmatpush1.xpose.msra.mxu0 0.0
        %2084 = vmatprep.subr.mxu0 0.0
        %2085 = vmatpush1.xpose.msra.mxu0 0.0
        %2086 = vmatprep.subr.mxu0 0.0
        %2087 = vmatpush1.xpose.msra.mxu0 0.0
        %2088 = vmatprep.mubr.f32.mxu0 0.0
        %2089 = vmatmul.mubr.f32.gmra.mrb[0].mxu0 %v2020
        %v2090 = vpop.f32.mrb[0].mxu0
        %v2091 = vadd.f32 %v1385, %v2090
        %v2092 = vpop.f32.mrb[0].mxu0
        %2093 = vdwg.mxu0
        %v2094 = vsel %vm1388, %v2013, -inf
        %2095 = vmax.xlane.f32.xlu0 %v2094
        %v2096 = vpop.xlane.xlu0 %2095
        %v2097 = vsel %vm1388, %v2091, -inf
        %2098 = vmax.xlane.f32.xlu0 %v2097
        %v2099 = vpop.xlane.xlu0 %2098
        %v2100 = vsub.f32 %v2013, %v2096
        %v2101 = vsub.f32 %v2091, %v2099
        %v2102 = vmul.f32 %v2100, 1.442695
        %v2103 = vpow.pop %v2102
        %v2104 = vmul.f32 %v2101, 1.442695
        %v2105 = vpow.pop %v2104
        %v2106 = vsel %vm1388, %v2103, 0.0
        %2107 = vadd.xlane.f32.xlu0 %v2106
        %v2108 = vpop.xlane.xlu0 %2107
        %v2109 = vsel %vm1388, %v2105, 0.0
        %2110 = vadd.xlane.f32.xlu0 %v2109
        %v2111 = vpop.xlane.xlu0 %2110
        %v2112 = vrcp.pop %v2108
        %v2113 = vrcp.pop %v2111
        %v2114 = vmul.f32 %v2103, %v2112
        %v2115 = vmul.f32 %v2105, %v2113
        %v2116 = vpack.c.bf16 %v2114, %v2114
        %v2117 = vpack.c.bf16 %v2115, %v2115
        %2118 = vrot.lane.b32.xlu0 %v1565, 112
        %v2119 = vpop.permute.xlu0 %2118
        %v2121 = vsel %vm1388, %v2116, 0
        %v2124 = vsel %vm1570, %v2119, 0
        %2126 = vmatprep.subr.bf16.mxu0 0
        %2127 = vmatpush1.bf16.msra.mxu0 %v2124
        %2128 = vmatprep.subr.bf16.mxu0 0
        %2129 = vmatpush1.bf16.msra.mxu0 0
        %2130 = vmatprep.subr.bf16.mxu0 0
        %2131 = vmatpush1.bf16.msra.mxu0 0
        %2132 = vmatprep.subr.bf16.mxu0 0
        %2133 = vmatpush1.bf16.msra.mxu0 0
        %2134 = vmatprep.subr.bf16.mxu0 0
        %2135 = vmatpush1.bf16.msra.mxu0 0
        %2136 = vmatprep.subr.bf16.mxu0 0
        %2137 = vmatpush1.bf16.msra.mxu0 0
        %2138 = vmatprep.subr.bf16.mxu0 0
        %2139 = vmatpush1.bf16.msra.mxu0 0
        %2140 = vmatprep.subr.bf16.mxu0 0
        %2141 = vmatpush1.bf16.msra.mxu0 0
        %2142 = vmatprep.subr.bf16.mxu0 0
        %2143 = vmatpush1.bf16.msra.mxu0 0
        %2144 = vmatprep.subr.bf16.mxu0 0
        %2145 = vmatpush1.bf16.msra.mxu0 0
        %2146 = vmatprep.subr.bf16.mxu0 0
        %2147 = vmatpush1.bf16.msra.mxu0 0
        %2148 = vmatprep.subr.bf16.mxu0 0
        %2149 = vmatpush1.bf16.msra.mxu0 0
        %2150 = vmatprep.subr.bf16.mxu0 0
        %2151 = vmatpush1.bf16.msra.mxu0 0
        %2152 = vmatprep.subr.bf16.mxu0 0
        %2153 = vmatpush1.bf16.msra.mxu0 0
        %2154 = vmatprep.subr.bf16.mxu0 0
        %2155 = vmatpush1.bf16.msra.mxu0 0
        %2156 = vmatprep.subr.bf16.mxu0 0
        %2157 = vmatpush1.bf16.msra.mxu0 0
        %2158 = vmatprep.mubr.bf16.mxu0 0
        %2159 = vmatmul.mubr.bf16.gmra.mrb[0].mxu0 %v2121
        %v2160 = vpop.f32.mrb[0].mxu0
        %v2161 = vadd.f32 0.0, %v2160
        %v2162 = vpop.f32.mrb[0].mxu0
        %v2163 = vpop.f32.mrb[0].mxu0
        %v2164 = vpop.f32.mrb[0].mxu0
        %2165 = vdwg.mxu0
        %2166 = vrot.lane.b32.xlu0 %v1566, 112
        %v2167 = vpop.permute.xlu0 %2166
        %v2169 = vsel %vm1388, %v2117, 0
        %v2172 = vsel %vm1570, %v2167, 0
        %2174 = vmatprep.subr.bf16.mxu0 0
        %2175 = vmatpush1.bf16.msra.mxu0 %v2172
        %2176 = vmatprep.subr.bf16.mxu0 0
        %2177 = vmatpush1.bf16.msra.mxu0 0
        %2178 = vmatprep.subr.bf16.mxu0 0
        %2179 = vmatpush1.bf16.msra.mxu0 0
        %2180 = vmatprep.subr.bf16.mxu0 0
        %2181 = vmatpush1.bf16.msra.mxu0 0
        %2182 = vmatprep.subr.bf16.mxu0 0
        %2183 = vmatpush1.bf16.msra.mxu0 0
        %2184 = vmatprep.subr.bf16.mxu0 0
        %2185 = vmatpush1.bf16.msra.mxu0 0
        %2186 = vmatprep.subr.bf16.mxu0 0
        %2187 = vmatpush1.bf16.msra.mxu0 0
        %2188 = vmatprep.subr.bf16.mxu0 0
        %2189 = vmatpush1.bf16.msra.mxu0 0
        %2190 = vmatprep.subr.bf16.mxu0 0
        %2191 = vmatpush1.bf16.msra.mxu0 0
        %2192 = vmatprep.subr.bf16.mxu0 0
        %2193 = vmatpush1.bf16.msra.mxu0 0
        %2194 = vmatprep.subr.bf16.mxu0 0
        %2195 = vmatpush1.bf16.msra.mxu0 0
        %2196 = vmatprep.subr.bf16.mxu0 0
        %2197 = vmatpush1.bf16.msra.mxu0 0
        %2198 = vmatprep.subr.bf16.mxu0 0
        %2199 = vmatpush1.bf16.msra.mxu0 0
        %2200 = vmatprep.subr.bf16.mxu0 0
        %2201 = vmatpush1.bf16.msra.mxu0 0
        %2202 = vmatprep.subr.bf16.mxu0 0
        %2203 = vmatpush1.bf16.msra.mxu0 0
        %2204 = vmatprep.subr.bf16.mxu0 0
        %2205 = vmatpush1.bf16.msra.mxu0 0
        %2206 = vmatprep.mubr.bf16.mxu0 0
        %2207 = vmatmul.mubr.bf16.gmra.mrb[0].mxu0 %v2169
        %v2208 = vpop.f32.mrb[0].mxu0
        %v2209 = vadd.f32 0.0, %v2208
        %v2210 = vpop.f32.mrb[0].mxu0
        %v2211 = vpop.f32.mrb[0].mxu0
        %v2212 = vpop.f32.mrb[0].mxu0
        %2213 = vdwg.mxu0
        %2214 = vrot.lane.b32.xlu0 %v1242, 104
        %v2215 = vpop.permute.xlu0 %2214
        %2216 = vrot.lane.b32.xlu0 %v1306, 104
        %v2217 = vpop.permute.xlu0 %2216
        %v2218 = vsel %vm1388, %v2215, 0
        %v2220 = vsel %vm1388, %v2217, 0
        %2222 = vmatprep.subr.mxu0 0.0
        %2223 = vmatpush1.xpose.msra.mxu0 %v2220
        %2224 = vmatprep.subr.mxu0 0.0
        %2225 = vmatpush1.xpose.msra.mxu0 0.0
        %2226 = vmatprep.subr.mxu0 0.0
        %2227 = vmatpush1.xpose.msra.mxu0 0.0
        %2228 = vmatprep.subr.mxu0 0.0
        %2229 = vmatpush1.xpose.msra.mxu0 0.0
        %2230 = vmatprep.subr.mxu0 0.0
        %2231 = vmatpush1.xpose.msra.mxu0 0.0
        %2232 = vmatprep.subr.mxu0 0.0
        %2233 = vmatpush1.xpose.msra.mxu0 0.0
        %2234 = vmatprep.subr.mxu0 0.0
        %2235 = vmatpush1.xpose.msra.mxu0 0.0
        %2236 = vmatprep.subr.mxu0 0.0
        %2237 = vmatpush1.xpose.msra.mxu0 0.0
        %2238 = vmatprep.subr.mxu0 0.0
        %2239 = vmatpush1.xpose.msra.mxu0 0.0
        %2240 = vmatprep.subr.mxu0 0.0
        %2241 = vmatpush1.xpose.msra.mxu0 0.0
        %2242 = vmatprep.subr.mxu0 0.0
        %2243 = vmatpush1.xpose.msra.mxu0 0.0
        %2244 = vmatprep.subr.mxu0 0.0
        %2245 = vmatpush1.xpose.msra.mxu0 0.0
        %2246 = vmatprep.subr.mxu0 0.0
        %2247 = vmatpush1.xpose.msra.mxu0 0.0
        %2248 = vmatprep.subr.mxu0 0.0
        %2249 = vmatpush1.xpose.msra.mxu0 0.0
        %2250 = vmatprep.subr.mxu0 0.0
        %2251 = vmatpush1.xpose.msra.mxu0 0.0
        %2252 = vmatprep.subr.mxu0 0.0
        %2253 = vmatpush1.xpose.msra.mxu0 0.0
        %2254 = vmatprep.subr.mxu0 0.0
        %2255 = vmatpush1.xpose.msra.mxu0 0.0
        %2256 = vmatprep.subr.mxu0 0.0
        %2257 = vmatpush1.xpose.msra.mxu0 0.0
        %2258 = vmatprep.subr.mxu0 0.0
        %2259 = vmatpush1.xpose.msra.mxu0 0.0
        %2260 = vmatprep.subr.mxu0 0.0
        %2261 = vmatpush1.xpose.msra.mxu0 0.0
        %2262 = vmatprep.subr.mxu0 0.0
        %2263 = vmatpush1.xpose.msra.mxu0 0.0
        %2264 = vmatprep.subr.mxu0 0.0
        %2265 = vmatpush1.xpose.msra.mxu0 0.0
        %2266 = vmatprep.subr.mxu0 0.0
        %2267 = vmatpush1.xpose.msra.mxu0 0.0
        %2268 = vmatprep.subr.mxu0 0.0
        %2269 = vmatpush1.xpose.msra.mxu0 0.0
        %2270 = vmatprep.subr.mxu0 0.0
        %2271 = vmatpush1.xpose.msra.mxu0 0.0
        %2272 = vmatprep.subr.mxu0 0.0
        %2273 = vmatpush1.xpose.msra.mxu0 0.0
        %2274 = vmatprep.subr.mxu0 0.0
        %2275 = vmatpush1.xpose.msra.mxu0 0.0
        %2276 = vmatprep.subr.mxu0 0.0
        %2277 = vmatpush1.xpose.msra.mxu0 0.0
        %2278 = vmatprep.subr.mxu0 0.0
        %2279 = vmatpush1.xpose.msra.mxu0 0.0
        %2280 = vmatprep.subr.mxu0 0.0
        %2281 = vmatpush1.xpose.msra.mxu0 0.0
        %2282 = vmatprep.subr.mxu0 0.0
        %2283 = vmatpush1.xpose.msra.mxu0 0.0
        %2284 = vmatprep.subr.mxu0 0.0
        %2285 = vmatpush1.xpose.msra.mxu0 0.0
        %2286 = vmatprep.mubr.f32.mxu0 0.0
        %2287 = vmatmul.mubr.f32.gmra.mrb[0].mxu0 %v2218
        %v2288 = vpop.f32.mrb[0].mxu0
        %v2289 = vadd.f32 %v1381, %v2288
        %v2290 = vpop.f32.mrb[0].mxu0
        %2291 = vdwg.mxu0
        %2292 = vrot.lane.b32.xlu0 %v1245, 104
        %v2293 = vpop.permute.xlu0 %2292
        %2294 = vrot.lane.b32.xlu0 %v1309, 104
        %v2295 = vpop.permute.xlu0 %2294
        %v2296 = vsel %vm1388, %v2293, 0
        %v2298 = vsel %vm1388, %v2295, 0
        %2300 = vmatprep.subr.mxu0 0.0
        %2301 = vmatpush1.xpose.msra.mxu0 %v2298
        %2302 = vmatprep.subr.mxu0 0.0
        %2303 = vmatpush1.xpose.msra.mxu0 0.0
        %2304 = vmatprep.subr.mxu0 0.0
        %2305 = vmatpush1.xpose.msra.mxu0 0.0
        %2306 = vmatprep.subr.mxu0 0.0
        %2307 = vmatpush1.xpose.msra.mxu0 0.0
        %2308 = vmatprep.subr.mxu0 0.0
        %2309 = vmatpush1.xpose.msra.mxu0 0.0
        %2310 = vmatprep.subr.mxu0 0.0
        %2311 = vmatpush1.xpose.msra.mxu0 0.0
        %2312 = vmatprep.subr.mxu0 0.0
        %2313 = vmatpush1.xpose.msra.mxu0 0.0
        %2314 = vmatprep.subr.mxu0 0.0
        %2315 = vmatpush1.xpose.msra.mxu0 0.0
        %2316 = vmatprep.subr.mxu0 0.0
        %2317 = vmatpush1.xpose.msra.mxu0 0.0
        %2318 = vmatprep.subr.mxu0 0.0
        %2319 = vmatpush1.xpose.msra.mxu0 0.0
        %2320 = vmatprep.subr.mxu0 0.0
        %2321 = vmatpush1.xpose.msra.mxu0 0.0
        %2322 = vmatprep.subr.mxu0 0.0
        %2323 = vmatpush1.xpose.msra.mxu0 0.0
        %2324 = vmatprep.subr.mxu0 0.0
        %2325 = vmatpush1.xpose.msra.mxu0 0.0
        %2326 = vmatprep.subr.mxu0 0.0
        %2327 = vmatpush1.xpose.msra.mxu0 0.0
        %2328 = vmatprep.subr.mxu0 0.0
        %2329 = vmatpush1.xpose.msra.mxu0 0.0
        %2330 = vmatprep.subr.mxu0 0.0
        %2331 = vmatpush1.xpose.msra.mxu0 0.0
        %2332 = vmatprep.subr.mxu0 0.0
        %2333 = vmatpush1.xpose.msra.mxu0 0.0
        %2334 = vmatprep.subr.mxu0 0.0
        %2335 = vmatpush1.xpose.msra.mxu0 0.0
        %2336 = vmatprep.subr.mxu0 0.0
        %2337 = vmatpush1.xpose.msra.mxu0 0.0
        %2338 = vmatprep.subr.mxu0 0.0
        %2339 = vmatpush1.xpose.msra.mxu0 0.0
        %2340 = vmatprep.subr.mxu0 0.0
        %2341 = vmatpush1.xpose.msra.mxu0 0.0
        %2342 = vmatprep.subr.mxu0 0.0
        %2343 = vmatpush1.xpose.msra.mxu0 0.0
        %2344 = vmatprep.subr.mxu0 0.0
        %2345 = vmatpush1.xpose.msra.mxu0 0.0
        %2346 = vmatprep.subr.mxu0 0.0
        %2347 = vmatpush1.xpose.msra.mxu0 0.0
        %2348 = vmatprep.subr.mxu0 0.0
        %2349 = vmatpush1.xpose.msra.mxu0 0.0
        %2350 = vmatprep.subr.mxu0 0.0
        %2351 = vmatpush1.xpose.msra.mxu0 0.0
        %2352 = vmatprep.subr.mxu0 0.0
        %2353 = vmatpush1.xpose.msra.mxu0 0.0
        %2354 = vmatprep.subr.mxu0 0.0
        %2355 = vmatpush1.xpose.msra.mxu0 0.0
        %2356 = vmatprep.subr.mxu0 0.0
        %2357 = vmatpush1.xpose.msra.mxu0 0.0
        %2358 = vmatprep.subr.mxu0 0.0
        %2359 = vmatpush1.xpose.msra.mxu0 0.0
        %2360 = vmatprep.subr.mxu0 0.0
        %2361 = vmatpush1.xpose.msra.mxu0 0.0
        %2362 = vmatprep.subr.mxu0 0.0
        %2363 = vmatpush1.xpose.msra.mxu0 0.0
        %2364 = vmatprep.mubr.f32.mxu0 0.0
        %2365 = vmatmul.mubr.f32.gmra.mrb[0].mxu0 %v2296
        %v2366 = vpop.f32.mrb[0].mxu0
        %v2367 = vadd.f32 %v1385, %v2366
        %v2368 = vpop.f32.mrb[0].mxu0
        %2369 = vdwg.mxu0
        %v2370 = vsel %vm1388, %v2289, -inf
        %2371 = vmax.xlane.f32.xlu0 %v2370
        %v2372 = vpop.xlane.xlu0 %2371
        %v2373 = vsel %vm1388, %v2367, -inf
        %2374 = vmax.xlane.f32.xlu0 %v2373
        %v2375 = vpop.xlane.xlu0 %2374
        %v2376 = vsub.f32 %v2289, %v2372
        %v2377 = vsub.f32 %v2367, %v2375
        %v2378 = vmul.f32 %v2376, 1.442695
        %v2379 = vpow.pop %v2378
        %v2380 = vmul.f32 %v2377, 1.442695
        %v2381 = vpow.pop %v2380
        %v2382 = vsel %vm1388, %v2379, 0.0
        %2383 = vadd.xlane.f32.xlu0 %v2382
        %v2384 = vpop.xlane.xlu0 %2383
        %v2385 = vsel %vm1388, %v2381, 0.0
        %2386 = vadd.xlane.f32.xlu0 %v2385
        %v2387 = vpop.xlane.xlu0 %2386
        %v2388 = vrcp.pop %v2384
        %v2389 = vrcp.pop %v2387
        %v2390 = vmul.f32 %v2379, %v2388
        %v2391 = vmul.f32 %v2381, %v2389
        %v2392 = vpack.c.bf16 %v2390, %v2390
        %v2393 = vpack.c.bf16 %v2391, %v2391
        %2394 = vrot.lane.b32.xlu0 %v1565, 104
        %v2395 = vpop.permute.xlu0 %2394
        %v2397 = vsel %vm1388, %v2392, 0
        %v2400 = vsel %vm1570, %v2395, 0
        %2402 = vmatprep.subr.bf16.mxu0 0
        %2403 = vmatpush1.bf16.msra.mxu0 %v2400
        %2404 = vmatprep.subr.bf16.mxu0 0
        %2405 = vmatpush1.bf16.msra.mxu0 0
        %2406 = vmatprep.subr.bf16.mxu0 0
        %2407 = vmatpush1.bf16.msra.mxu0 0
        %2408 = vmatprep.subr.bf16.mxu0 0
        %2409 = vmatpush1.bf16.msra.mxu0 0
        %2410 = vmatprep.subr.bf16.mxu0 0
        %2411 = vmatpush1.bf16.msra.mxu0 0
        %2412 = vmatprep.subr.bf16.mxu0 0
        %2413 = vmatpush1.bf16.msra.mxu0 0
        %2414 = vmatprep.subr.bf16.mxu0 0
        %2415 = vmatpush1.bf16.msra.mxu0 0
        %2416 = vmatprep.subr.bf16.mxu0 0
        %2417 = vmatpush1.bf16.msra.mxu0 0
        %2418 = vmatprep.subr.bf16.mxu0 0
        %2419 = vmatpush1.bf16.msra.mxu0 0
        %2420 = vmatprep.subr.bf16.mxu0 0
        %2421 = vmatpush1.bf16.msra.mxu0 0
        %2422 = vmatprep.subr.bf16.mxu0 0
        %2423 = vmatpush1.bf16.msra.mxu0 0
        %2424 = vmatprep.subr.bf16.mxu0 0
        %2425 = vmatpush1.bf16.msra.mxu0 0
        %2426 = vmatprep.subr.bf16.mxu0 0
        %2427 = vmatpush1.bf16.msra.mxu0 0
        %2428 = vmatprep.subr.bf16.mxu0 0
        %2429 = vmatpush1.bf16.msra.mxu0 0
        %2430 = vmatprep.subr.bf16.mxu0 0
        %2431 = vmatpush1.bf16.msra.mxu0 0
        %2432 = vmatprep.subr.bf16.mxu0 0
        %2433 = vmatpush1.bf16.msra.mxu0 0
        %2434 = vmatprep.mubr.bf16.mxu0 0
        %2435 = vmatmul.mubr.bf16.gmra.mrb[0].mxu0 %v2397
        %v2436 = vpop.f32.mrb[0].mxu0
        %v2437 = vadd.f32 0.0, %v2436
        %v2438 = vpop.f32.mrb[0].mxu0
        %v2439 = vpop.f32.mrb[0].mxu0
        %v2440 = vpop.f32.mrb[0].mxu0
        %2441 = vdwg.mxu0
        %2442 = vrot.lane.b32.xlu0 %v1566, 104
        %v2443 = vpop.permute.xlu0 %2442
        %v2445 = vsel %vm1388, %v2393, 0
        %v2448 = vsel %vm1570, %v2443, 0
        %2450 = vmatprep.subr.bf16.mxu0 0
        %2451 = vmatpush1.bf16.msra.mxu0 %v2448
        %2452 = vmatprep.subr.bf16.mxu0 0
        %2453 = vmatpush1.bf16.msra.mxu0 0
        %2454 = vmatprep.subr.bf16.mxu0 0
        %2455 = vmatpush1.bf16.msra.mxu0 0
        %2456 = vmatprep.subr.bf16.mxu0 0
        %2457 = vmatpush1.bf16.msra.mxu0 0
        %2458 = vmatprep.subr.bf16.mxu0 0
        %2459 = vmatpush1.bf16.msra.mxu0 0
        %2460 = vmatprep.subr.bf16.mxu0 0
        %2461 = vmatpush1.bf16.msra.mxu0 0
        %2462 = vmatprep.subr.bf16.mxu0 0
        %2463 = vmatpush1.bf16.msra.mxu0 0
        %2464 = vmatprep.subr.bf16.mxu0 0
        %2465 = vmatpush1.bf16.msra.mxu0 0
        %2466 = vmatprep.subr.bf16.mxu0 0
        %2467 = vmatpush1.bf16.msra.mxu0 0
        %2468 = vmatprep.subr.bf16.mxu0 0
        %2469 = vmatpush1.bf16.msra.mxu0 0
        %2470 = vmatprep.subr.bf16.mxu0 0
        %2471 = vmatpush1.bf16.msra.mxu0 0
        %2472 = vmatprep.subr.bf16.mxu0 0
        %2473 = vmatpush1.bf16.msra.mxu0 0
        %2474 = vmatprep.subr.bf16.mxu0 0
        %2475 = vmatpush1.bf16.msra.mxu0 0
        %2476 = vmatprep.subr.bf16.mxu0 0
        %2477 = vmatpush1.bf16.msra.mxu0 0
        %2478 = vmatprep.subr.bf16.mxu0 0
        %2479 = vmatpush1.bf16.msra.mxu0 0
        %2480 = vmatprep.subr.bf16.mxu0 0
        %2481 = vmatpush1.bf16.msra.mxu0 0
        %2482 = vmatprep.mubr.bf16.mxu0 0
        %2483 = vmatmul.mubr.bf16.gmra.mrb[0].mxu0 %v2445
        %v2484 = vpop.f32.mrb[0].mxu0
        %v2485 = vadd.f32 0.0, %v2484
        %v2486 = vpop.f32.mrb[0].mxu0
        %v2487 = vpop.f32.mrb[0].mxu0
        %v2488 = vpop.f32.mrb[0].mxu0
        %2489 = vdwg.mxu0
        %2492 = vrot.lane.b32.xlu0 %v1884, 8
        %v2493 = vpop.permute.xlu0 %2492
        %2494 = vrot.lane.b32.xlu0 %v1933, 8
        %v2495 = vpop.permute.xlu0 %2494
        %2500 = vrot.lane.b32.xlu0 %v2161, 16
        %v2501 = vpop.permute.xlu0 %2500
        %2502 = vrot.lane.b32.xlu0 %v2209, 16
        %v2503 = vpop.permute.xlu0 %2502
        %2508 = vrot.lane.b32.xlu0 %v2437, 24
        %v2509 = vpop.permute.xlu0 %2508
        %2510 = vrot.lane.b32.xlu0 %v2485, 24
        %v2511 = vpop.permute.xlu0 %2510
        %v2514 = vsel %vm1388, %v1609, %v2493
        %v2515 = vsel %vm1388, %v1655, %v2495
        %vm2516 = vcmask 130048
        %v2517 = vsel %vm2516, %v2514, %v2501
        %v2518 = vsel %vm2516, %v2515, %v2503
        %vm2519 = vcmask 195584
        %v2520 = vsel %vm2519, %v2517, %v2509
        %v2521 = vsel %vm2519, %v2518, %v2511
        %v2522 = vpack.c.bf16 %v2521, %v2520
        %v2523 = vld [vmem:[%s1089] sm:$0xf]
        %v2524 = vld [vmem:[%s1089 + $0x4] sm:$0xf]
        %v2525 = vld [vmem:[%s1089 + $0x8] sm:$0xf]
        %v2526 = vld [vmem:[%s1089 + $0xc] sm:$0xf]
        %v2527 = vld [vmem:[%s1092] sm:$0x1]
        %v2529 = vlaneseq
        %v2530 = vshrl.u32 %v2529, 7
        %v2531 = vsub.s32 0, %v2530
        %v2532 = vrot.slane %v2527, %v2531
        %v2538 = vunpack.c.l.b16 %v2523
        %v2539 = vunpack.c.l.b16 %v2524
        %v2540 = vunpack.c.l.b16 %v2525
        %v2541 = vunpack.c.l.b16 %v2526
        %v2542 = vpack.c.b16 %v2539, %v2538
        %v2543 = vpack.c.b16 %v2541, %v2540
        %v2547 = vsel %vm1203, %v2522, 0
        %2549 = vmatprep.subr.bf16.mxu0 0
        %2550 = vmatpush1.bf16.msra.mxu0 %v2542
        %2551 = vmatprep.subr.bf16.mxu0 0
        %2552 = vmatpush1.bf16.msra.mxu0 %v2543
        %2553 = vmatprep.subr.bf16.mxu0 0
        %2554 = vmatpush1.bf16.msra.mxu0 0
        %2555 = vmatprep.subr.bf16.mxu0 0
        %2556 = vmatpush1.bf16.msra.mxu0 0
        %2557 = vmatprep.subr.bf16.mxu0 0
        %2558 = vmatpush1.bf16.msra.mxu0 0
        %2559 = vmatprep.subr.bf16.mxu0 0
        %2560 = vmatpush1.bf16.msra.mxu0 0
        %2561 = vmatprep.subr.bf16.mxu0 0
        %2562 = vmatpush1.bf16.msra.mxu0 0
        %2563 = vmatprep.subr.bf16.mxu0 0
        %2564 = vmatpush1.bf16.msra.mxu0 0
        %2565 = vmatprep.subr.bf16.mxu0 0
        %2566 = vmatpush1.bf16.msra.mxu0 0
        %2567 = vmatprep.subr.bf16.mxu0 0
        %2568 = vmatpush1.bf16.msra.mxu0 0
        %2569 = vmatprep.subr.bf16.mxu0 0
        %2570 = vmatpush1.bf16.msra.mxu0 0
        %2571 = vmatprep.subr.bf16.mxu0 0
        %2572 = vmatpush1.bf16.msra.mxu0 0
        %2573 = vmatprep.subr.bf16.mxu0 0
        %2574 = vmatpush1.bf16.msra.mxu0 0
        %2575 = vmatprep.subr.bf16.mxu0 0
        %2576 = vmatpush1.bf16.msra.mxu0 0
        %2577 = vmatprep.subr.bf16.mxu0 0
        %2578 = vmatpush1.bf16.msra.mxu0 0
        %2579 = vmatprep.subr.bf16.mxu0 0
        %2580 = vmatpush1.bf16.msra.mxu0 0
        %2581 = vmatprep.mubr.bf16.mxu0 0
        %2582 = vmatmul.mubr.bf16.gmra.mrb[0].mxu0 %v2547
        %v2583 = vpop.f32.mrb[0].mxu0
        %v2584 = vadd.f32 %v2532, %v2583
        %v2585 = vpop.f32.mrb[0].mxu0
        %v2586 = vpop.f32.mrb[0].mxu0
        %v2587 = vadd.f32 %v2532, %v2586
        %v2588 = vpop.f32.mrb[0].mxu0
        %2589 = vdwg.mxu0
        %v2590 = vadd.f32 %v1175, %v2584
        %v2591 = vadd.f32 %v1176, %v2587
        %v2592 = vld [vmem:[%s1112] sm:$0x1]
        %v2593 = vld [vmem:[%s1115] sm:$0x1]
        %v2594 = vsel %vm1203, %v2590, 0.0
        %2595 = vadd.xlane.f32.xlu0 %v2594
        %v2596 = vpop.xlane.xlu0 %2595
        %v2597 = vsel %vm1203, %v2591, 0.0
        %2598 = vadd.xlane.f32.xlu0 %v2597
        %v2599 = vpop.xlane.xlu0 %2598
        %v2600 = vrcp.pop 32.0
        %v2601 = vmul.f32 %v2596, %v2600
        %v2602 = vmul.f32 %v2599, %v2600
        %v2603 = vsub.f32 %v2590, %v2601
        %v2604 = vsub.f32 %v2591, %v2602
        %v2605 = vmul.f32 %v2603, %v2603
        %v2606 = vmul.f32 %v2604, %v2604
        %v2607 = vsel %vm1203, %v2605, 0.0
        %2608 = vadd.xlane.f32.xlu0 %v2607
        %v2609 = vpop.xlane.xlu0 %2608
        %v2610 = vsel %vm1203, %v2606, 0.0
        %2611 = vadd.xlane.f32.xlu0 %v2610
        %v2612 = vpop.xlane.xlu0 %2611
        %v2613 = vmul.f32 %v2609, %v2600
        %v2614 = vmul.f32 %v2612, %v2600
        %v2615 = vadd.f32 %v2613, 1e-05
        %v2616 = vadd.f32 %v2614, 1e-05
        %v2617 = vrsqrt.pop %v2615
        %v2618 = vrsqrt.pop %v2616
        %v2619 = vmul.f32 %v2603, %v2617
        %v2620 = vmul.f32 %v2604, %v2618
        %v2622 = vlaneseq
        %v2623 = vshrl.u32 %v2622, 7
        %v2624 = vsub.s32 0, %v2623
        %v2625 = vrot.slane %v2592, %v2624
        %v2627 = vmul.f32 %v2619, %v2625
        %v2628 = vmul.f32 %v2620, %v2625
        %v2630 = vlaneseq
        %v2631 = vshrl.u32 %v2630, 7
        %v2632 = vsub.s32 0, %v2631
        %v2633 = vrot.slane %v2593, %v2632
        %v2635 = vadd.f32 %v2627, %v2633
        %v2636 = vadd.f32 %v2628, %v2633
        %v2637 = vpack.c.bf16 %v2636, %v2635
        %v2638 = vld [vmem:[%s1097] sm:$0xff]
        %v2639 = vld [vmem:[%s1097 + $0x8] sm:$0xff]
        %v2640 = vld [vmem:[%s1097 + $0x10] sm:$0xff]
        %v2641 = vld [vmem:[%s1097 + $0x18] sm:$0xff]
        %v2642 = vld [vmem:[%s1097 + $0x20] sm:$0xff]
        %v2643 = vld [vmem:[%s1097 + $0x28] sm:$0xff]
        %v2644 = vld [vmem:[%s1097 + $0x30] sm:$0xff]
        %v2645 = vld [vmem:[%s1097 + $0x38] sm:$0xff]
        %v2646 = vld [vmem:[%s1097 + $0x40] sm:$0xff]
        %v2647 = vld [vmem:[%s1097 + $0x48] sm:$0xff]
        %v2648 = vld [vmem:[%s1097 + $0x50] sm:$0xff]
        %v2649 = vld [vmem:[%s1097 + $0x58] sm:$0xff]
        %v2650 = vld [vmem:[%s1097 + $0x60] sm:$0xff]
        %v2651 = vld [vmem:[%s1097 + $0x68] sm:$0xff]
        %v2652 = vld [vmem:[%s1097 + $0x70] sm:$0xff]
        %v2653 = vld [vmem:[%s1097 + $0x78] sm:$0xff]
        %v2654 = vld [vmem:[%s1097 + $0x80] sm:$0xff]
        %v2655 = vld [vmem:[%s1097 + $0x88] sm:$0xff]
        %v2656 = vld [vmem:[%s1097 + $0x90] sm:$0xff]
        %v2657 = vld [vmem:[%s1097 + $0x98] sm:$0xff]
        %v2658 = vld [vmem:[%s1097 + $0xa0] sm:$0xff]
        %v2659 = vld [vmem:[%s1097 + $0xa8] sm:$0xff]
        %v2660 = vld [vmem:[%s1097 + $0xb0] sm:$0xff]
        %v2661 = vld [vmem:[%s1097 + $0xb8] sm:$0xff]
        %v2662 = vld [vmem:[%s1097 + $0xc0] sm:$0xff]
        %v2663 = vld [vmem:[%s1097 + $0xc8] sm:$0xff]
        %v2664 = vld [vmem:[%s1097 + $0xd0] sm:$0xff]
        %v2665 = vld [vmem:[%s1097 + $0xd8] sm:$0xff]
        %v2666 = vld [vmem:[%s1097 + $0xe0] sm:$0xff]
        %v2667 = vld [vmem:[%s1097 + $0xe8] sm:$0xff]
        %v2668 = vld [vmem:[%s1097 + $0xf0] sm:$0xff]
        %v2669 = vld [vmem:[%s1097 + $0xf8] sm:$0xff]
        %v2670 = vld [vmem:[%s1101] sm:$0xff]
        %v2671 = vld [vmem:[%s1101 + $0x8] sm:$0xff]
        %v2674 = vlaneseq
        %v2675 = vshrl.u32 %v2674, 7
        %v2676 = vsub.s32 0, %v2675
        %v2677 = vrot.slane %v2670, %v2676
        %v2678 = vlaneseq
        %v2679 = vshrl.u32 %v2678, 7
        %v2680 = vsub.s32 1, %v2679
        %v2681 = vrot.slane %v2670, %v2680
        %v2682 = vlaneseq
        %v2683 = vshrl.u32 %v2682, 7
        %v2684 = vsub.s32 2, %v2683
        %v2685 = vrot.slane %v2670, %v2684
        %v2686 = vlaneseq
        %v2687 = vshrl.u32 %v2686, 7
        %v2688 = vsub.s32 3, %v2687
        %v2689 = vrot.slane %v2670, %v2688
        %v2690 = vlaneseq
        %v2691 = vshrl.u32 %v2690, 7
        %v2692 = vsub.s32 4, %v2691
        %v2693 = vrot.slane %v2670, %v2692
        %v2694 = vlaneseq
        %v2695 = vshrl.u32 %v2694, 7
        %v2696 = vsub.s32 5, %v2695
        %v2697 = vrot.slane %v2670, %v2696
        %v2698 = vlaneseq
        %v2699 = vshrl.u32 %v2698, 7
        %v2700 = vsub.s32 6, %v2699
        %v2701 = vrot.slane %v2670, %v2700
        %v2702 = vlaneseq
        %v2703 = vshrl.u32 %v2702, 7
        %v2704 = vsub.s32 7, %v2703
        %v2705 = vrot.slane %v2670, %v2704
        %v2706 = vlaneseq
        %v2707 = vshrl.u32 %v2706, 7
        %v2708 = vsub.s32 0, %v2707
        %v2709 = vrot.slane %v2671, %v2708
        %v2710 = vlaneseq
        %v2711 = vshrl.u32 %v2710, 7
        %v2712 = vsub.s32 1, %v2711
        %v2713 = vrot.slane %v2671, %v2712
        %v2714 = vlaneseq
        %v2715 = vshrl.u32 %v2714, 7
        %v2716 = vsub.s32 2, %v2715
        %v2717 = vrot.slane %v2671, %v2716
        %v2718 = vlaneseq
        %v2719 = vshrl.u32 %v2718, 7
        %v2720 = vsub.s32 3, %v2719
        %v2721 = vrot.slane %v2671, %v2720
        %v2722 = vlaneseq
        %v2723 = vshrl.u32 %v2722, 7
        %v2724 = vsub.s32 4, %v2723
        %v2725 = vrot.slane %v2671, %v2724
        %v2726 = vlaneseq
        %v2727 = vshrl.u32 %v2726, 7
        %v2728 = vsub.s32 5, %v2727
        %v2729 = vrot.slane %v2671, %v2728
        %v2730 = vlaneseq
        %v2731 = vshrl.u32 %v2730, 7
        %v2732 = vsub.s32 6, %v2731
        %v2733 = vrot.slane %v2671, %v2732
        %v2734 = vlaneseq
        %v2735 = vshrl.u32 %v2734, 7
        %v2736 = vsub.s32 7, %v2735
        %v2737 = vrot.slane %v2671, %v2736
        %v2786 = vunpack.c.l.b16 %v2638
        %v2787 = vunpack.c.h.b16 %v2638
        %v2788 = vunpack.c.l.b16 %v2639
        %v2789 = vunpack.c.h.b16 %v2639
        %v2790 = vunpack.c.l.b16 %v2640
        %v2791 = vunpack.c.h.b16 %v2640
        %v2792 = vunpack.c.l.b16 %v2641
        %v2793 = vunpack.c.h.b16 %v2641
        %v2794 = vunpack.c.l.b16 %v2642
        %v2795 = vunpack.c.h.b16 %v2642
        %v2796 = vunpack.c.l.b16 %v2643
        %v2797 = vunpack.c.h.b16 %v2643
        %v2798 = vunpack.c.l.b16 %v2644
        %v2799 = vunpack.c.h.b16 %v2644
        %v2800 = vunpack.c.l.b16 %v2645
        %v2801 = vunpack.c.h.b16 %v2645
        %v2802 = vunpack.c.l.b16 %v2646
        %v2803 = vunpack.c.h.b16 %v2646
        %v2804 = vunpack.c.l.b16 %v2647
        %v2805 = vunpack.c.h.b16 %v2647
        %v2806 = vunpack.c.l.b16 %v2648
        %v2807 = vunpack.c.h.b16 %v2648
        %v2808 = vunpack.c.l.b16 %v2649
        %v2809 = vunpack.c.h.b16 %v2649
        %v2810 = vunpack.c.l.b16 %v2650
        %v2811 = vunpack.c.h.b16 %v2650
        %v2812 = vunpack.c.l.b16 %v2651
        %v2813 = vunpack.c.h.b16 %v2651
        %v2814 = vunpack.c.l.b16 %v2652
        %v2815 = vunpack.c.h.b16 %v2652
        %v2816 = vunpack.c.l.b16 %v2653
        %v2817 = vunpack.c.h.b16 %v2653
        %v2818 = vunpack.c.l.b16 %v2654
        %v2819 = vunpack.c.h.b16 %v2654
        %v2820 = vunpack.c.l.b16 %v2655
        %v2821 = vunpack.c.h.b16 %v2655
        %v2822 = vunpack.c.l.b16 %v2656
        %v2823 = vunpack.c.h.b16 %v2656
        %v2824 = vunpack.c.l.b16 %v2657
        %v2825 = vunpack.c.h.b16 %v2657
        %v2826 = vunpack.c.l.b16 %v2658
        %v2827 = vunpack.c.h.b16 %v2658
        %v2828 = vunpack.c.l.b16 %v2659
        %v2829 = vunpack.c.h.b16 %v2659
        %v2830 = vunpack.c.l.b16 %v2660
        %v2831 = vunpack.c.h.b16 %v2660
        %v2832 = vunpack.c.l.b16 %v2661
        %v2833 = vunpack.c.h.b16 %v2661
        %v2834 = vunpack.c.l.b16 %v2662
        %v2835 = vunpack.c.h.b16 %v2662
        %v2836 = vunpack.c.l.b16 %v2663
        %v2837 = vunpack.c.h.b16 %v2663
        %v2838 = vunpack.c.l.b16 %v2664
        %v2839 = vunpack.c.h.b16 %v2664
        %v2840 = vunpack.c.l.b16 %v2665
        %v2841 = vunpack.c.h.b16 %v2665
        %v2842 = vunpack.c.l.b16 %v2666
        %v2843 = vunpack.c.h.b16 %v2666
        %v2844 = vunpack.c.l.b16 %v2667
        %v2845 = vunpack.c.h.b16 %v2667
        %v2846 = vunpack.c.l.b16 %v2668
        %v2847 = vunpack.c.h.b16 %v2668
        %v2848 = vunpack.c.l.b16 %v2669
        %v2849 = vunpack.c.h.b16 %v2669
        %v2850 = vpack.c.b16 %v2802, %v2786
        %v2851 = vpack.c.b16 %v2803, %v2787
        %v2852 = vpack.c.b16 %v2804, %v2788
        %v2853 = vpack.c.b16 %v2805, %v2789
        %v2854 = vpack.c.b16 %v2806, %v2790
        %v2855 = vpack.c.b16 %v2807, %v2791
        %v2856 = vpack.c.b16 %v2808, %v2792
        %v2857 = vpack.c.b16 %v2809, %v2793
        %v2858 = vpack.c.b16 %v2810, %v2794
        %v2859 = vpack.c.b16 %v2811, %v2795
        %v2860 = vpack.c.b16 %v2812, %v2796
        %v2861 = vpack.c.b16 %v2813, %v2797
        %v2862 = vpack.c.b16 %v2814, %v2798
        %v2863 = vpack.c.b16 %v2815, %v2799
        %v2864 = vpack.c.b16 %v2816, %v2800
        %v2865 = vpack.c.b16 %v2817, %v2801
        %v2866 = vpack.c.b16 %v2834, %v2818
        %v2867 = vpack.c.b16 %v2835, %v2819
        %v2868 = vpack.c.b16 %v2836, %v2820
        %v2869 = vpack.c.b16 %v2837, %v2821
        %v2870 = vpack.c.b16 %v2838, %v2822
        %v2871 = vpack.c.b16 %v2839, %v2823
        %v2872 = vpack.c.b16 %v2840, %v2824
        %v2873 = vpack.c.b16 %v2841, %v2825
        %v2874 = vpack.c.b16 %v2842, %v2826
        %v2875 = vpack.c.b16 %v2843, %v2827
        %v2876 = vpack.c.b16 %v2844, %v2828
        %v2877 = vpack.c.b16 %v2845, %v2829
        %v2878 = vpack.c.b16 %v2846, %v2830
        %v2879 = vpack.c.b16 %v2847, %v2831
        %v2880 = vpack.c.b16 %v2848, %v2832
        %v2881 = vpack.c.b16 %v2849, %v2833
        %v2915 = vsel %vm1203, %v2637, 0
        %2917 = vmatprep.subr.bf16.mxu0 %v2851
        %2918 = vmatpush1.bf16.msra.mxu0 %v2850
        %2919 = vmatprep.subr.bf16.mxu0 %v2867
        %2920 = vmatpush1.bf16.msra.mxu0 %v2866
        %2921 = vmatprep.subr.bf16.mxu0 0
        %2922 = vmatpush1.bf16.msra.mxu0 0
        %2923 = vmatprep.subr.bf16.mxu0 0
        %2924 = vmatpush1.bf16.msra.mxu0 0
        %2925 = vmatprep.subr.bf16.mxu0 0
        %2926 = vmatpush1.bf16.msra.mxu0 0
        %2927 = vmatprep.subr.bf16.mxu0 0
        %2928 = vmatpush1.bf16.msra.mxu0 0
        %2929 = vmatprep.subr.bf16.mxu0 0
        %2930 = vmatpush1.bf16.msra.mxu0 0
        %2931 = vmatprep.subr.bf16.mxu0 0
        %2932 = vmatpush1.bf16.msra.mxu0 0
        %2933 = vmatprep.subr.bf16.mxu0 0
        %2934 = vmatpush1.bf16.msra.mxu0 0
        %2935 = vmatprep.subr.bf16.mxu0 0
        %2936 = vmatpush1.bf16.msra.mxu0 0
        %2937 = vmatprep.subr.bf16.mxu0 0
        %2938 = vmatpush1.bf16.msra.mxu0 0
        %2939 = vmatprep.subr.bf16.mxu0 0
        %2940 = vmatpush1.bf16.msra.mxu0 0
        %2941 = vmatprep.subr.bf16.mxu0 0
        %2942 = vmatpush1.bf16.msra.mxu0 0
        %2943 = vmatprep.subr.bf16.mxu0 0
        %2944 = vmatpush1.bf16.msra.mxu0 0
        %2945 = vmatprep.subr.bf16.mxu0 0
        %2946 = vmatpush1.bf16.msra.mxu0 0
        %2947 = vmatprep.subr.bf16.mxu0 0
        %2948 = vmatpush1.bf16.msra.mxu0 0
        %2949 = vmatprep.mubr.bf16.mxu0 0
        %2950 = vmatmul.mubr.bf16.gmra.mrb[0].mxu0 %v2915
        %v2951 = vpop.f32.mrb[0].mxu0
        %v2952 = vadd.f32 %v2677, %v2951
        %v2953 = vpop.f32.mrb[0].mxu0
        %v2954 = vadd.f32 %v2681, %v2953
        %v2955 = vpop.f32.mrb[0].mxu0
        %v2956 = vadd.f32 %v2677, %v2955
        %v2957 = vpop.f32.mrb[0].mxu0
        %v2958 = vadd.f32 %v2681, %v2957
        %2959 = vdwg.mxu0
        %2960 = vmatprep.subr.bf16.mxu0 %v2853
        %2961 = vmatpush1.bf16.msra.mxu0 %v2852
        %2962 = vmatprep.subr.bf16.mxu0 %v2869
        %2963 = vmatpush1.bf16.msra.mxu0 %v2868
        %2964 = vmatprep.subr.bf16.mxu0 0
        %2965 = vmatpush1.bf16.msra.mxu0 0
        %2966 = vmatprep.subr.bf16.mxu0 0
        %2967 = vmatpush1.bf16.msra.mxu0 0
        %2968 = vmatprep.subr.bf16.mxu0 0
        %2969 = vmatpush1.bf16.msra.mxu0 0
        %2970 = vmatprep.subr.bf16.mxu0 0
        %2971 = vmatpush1.bf16.msra.mxu0 0
        %2972 = vmatprep.subr.bf16.mxu0 0
        %2973 = vmatpush1.bf16.msra.mxu0 0
        %2974 = vmatprep.subr.bf16.mxu0 0
        %2975 = vmatpush1.bf16.msra.mxu0 0
        %2976 = vmatprep.subr.bf16.mxu0 0
        %2977 = vmatpush1.bf16.msra.mxu0 0
        %2978 = vmatprep.subr.bf16.mxu0 0
        %2979 = vmatpush1.bf16.msra.mxu0 0
        %2980 = vmatprep.subr.bf16.mxu0 0
        %2981 = vmatpush1.bf16.msra.mxu0 0
        %2982 = vmatprep.subr.bf16.mxu0 0
        %2983 = vmatpush1.bf16.msra.mxu0 0
        %2984 = vmatprep.subr.bf16.mxu0 0
        %2985 = vmatpush1.bf16.msra.mxu0 0
        %2986 = vmatprep.subr.bf16.mxu0 0
        %2987 = vmatpush1.bf16.msra.mxu0 0
        %2988 = vmatprep.subr.bf16.mxu0 0
        %2989 = vmatpush1.bf16.msra.mxu0 0
        %2990 = vmatprep.subr.bf16.mxu0 0
        %2991 = vmatpush1.bf16.msra.mxu0 0
        %2992 = vmatprep.mubr.bf16.mxu0 0
        %2993 = vmatmul.mubr.bf16.gmra.mrb[0].mxu0 %v2915
        %v2994 = vpop.f32.mrb[0].mxu0
        %v2995 = vadd.f32 %v2685, %v2994
        %v2996 = vpop.f32.mrb[0].mxu0
        %v2997 = vadd.f32 %v2689, %v2996
        %v2998 = vpop.f32.mrb[0].mxu0
        %v2999 = vadd.f32 %v2685, %v2998
        %v3000 = vpop.f32.mrb[0].mxu0
        %v3001 = vadd.f32 %v2689, %v3000
        %3002 = vdwg.mxu0
        %3003 = vmatprep.subr.bf16.mxu0 %v2855
        %3004 = vmatpush1.bf16.msra.mxu0 %v2854
        %3005 = vmatprep.subr.bf16.mxu0 %v2871
        %3006 = vmatpush1.bf16.msra.mxu0 %v2870
        %3007 = vmatprep.subr.bf16.mxu0 0
        %3008 = vmatpush1.bf16.msra.mxu0 0
        %3009 = vmatprep.subr.bf16.mxu0 0
        %3010 = vmatpush1.bf16.msra.mxu0 0
        %3011 = vmatprep.subr.bf16.mxu0 0
        %3012 = vmatpush1.bf16.msra.mxu0 0
        %3013 = vmatprep.subr.bf16.mxu0 0
        %3014 = vmatpush1.bf16.msra.mxu0 0
        %3015 = vmatprep.subr.bf16.mxu0 0
        %3016 = vmatpush1.bf16.msra.mxu0 0
        %3017 = vmatprep.subr.bf16.mxu0 0
        %3018 = vmatpush1.bf16.msra.mxu0 0
        %3019 = vmatprep.subr.bf16.mxu0 0
        %3020 = vmatpush1.bf16.msra.mxu0 0
        %3021 = vmatprep.subr.bf16.mxu0 0
        %3022 = vmatpush1.bf16.msra.mxu0 0
        %3023 = vmatprep.subr.bf16.mxu0 0
        %3024 = vmatpush1.bf16.msra.mxu0 0
        %3025 = vmatprep.subr.bf16.mxu0 0
        %3026 = vmatpush1.bf16.msra.mxu0 0
        %3027 = vmatprep.subr.bf16.mxu0 0
        %3028 = vmatpush1.bf16.msra.mxu0 0
        %3029 = vmatprep.subr.bf16.mxu0 0
        %3030 = vmatpush1.bf16.msra.mxu0 0
        %3031 = vmatprep.subr.bf16.mxu0 0
        %3032 = vmatpush1.bf16.msra.mxu0 0
        %3033 = vmatprep.subr.bf16.mxu0 0
        %3034 = vmatpush1.bf16.msra.mxu0 0
        %3035 = vmatprep.mubr.bf16.mxu0 0
        %3036 = vmatmul.mubr.bf16.gmra.mrb[0].mxu0 %v2915
        %v3037 = vpop.f32.mrb[0].mxu0
        %v3038 = vadd.f32 %v2693, %v3037
        %v3039 = vpop.f32.mrb[0].mxu0
        %v3040 = vadd.f32 %v2697, %v3039
        %v3041 = vpop.f32.mrb[0].mxu0
        %v3042 = vadd.f32 %v2693, %v3041
        %v3043 = vpop.f32.mrb[0].mxu0
        %v3044 = vadd.f32 %v2697, %v3043
        %3045 = vdwg.mxu0
        %3046 = vmatprep.subr.bf16.mxu0 %v2857
        %3047 = vmatpush1.bf16.msra.mxu0 %v2856
        %3048 = vmatprep.subr.bf16.mxu0 %v2873
        %3049 = vmatpush1.bf16.msra.mxu0 %v2872
        %3050 = vmatprep.subr.bf16.mxu0 0
        %3051 = vmatpush1.bf16.msra.mxu0 0
        %3052 = vmatprep.subr.bf16.mxu0 0
        %3053 = vmatpush1.bf16.msra.mxu0 0
        %3054 = vmatprep.subr.bf16.mxu0 0
        %3055 = vmatpush1.bf16.msra.mxu0 0
        %3056 = vmatprep.subr.bf16.mxu0 0
        %3057 = vmatpush1.bf16.msra.mxu0 0
        %3058 = vmatprep.subr.bf16.mxu0 0
        %3059 = vmatpush1.bf16.msra.mxu0 0
        %3060 = vmatprep.subr.bf16.mxu0 0
        %3061 = vmatpush1.bf16.msra.mxu0 0
        %3062 = vmatprep.subr.bf16.mxu0 0
        %3063 = vmatpush1.bf16.msra.mxu0 0
        %3064 = vmatprep.subr.bf16.mxu0 0
        %3065 = vmatpush1.bf16.msra.mxu0 0
        %3066 = vmatprep.subr.bf16.mxu0 0
        %3067 = vmatpush1.bf16.msra.mxu0 0
        %3068 = vmatprep.subr.bf16.mxu0 0
        %3069 = vmatpush1.bf16.msra.mxu0 0
        %3070 = vmatprep.subr.bf16.mxu0 0
        %3071 = vmatpush1.bf16.msra.mxu0 0
        %3072 = vmatprep.subr.bf16.mxu0 0
        %3073 = vmatpush1.bf16.msra.mxu0 0
        %3074 = vmatprep.subr.bf16.mxu0 0
        %3075 = vmatpush1.bf16.msra.mxu0 0
        %3076 = vmatprep.subr.bf16.mxu0 0
        %3077 = vmatpush1.bf16.msra.mxu0 0
        %3078 = vmatprep.mubr.bf16.mxu0 0
        %3079 = vmatmul.mubr.bf16.gmra.mrb[0].mxu0 %v2915
        %v3080 = vpop.f32.mrb[0].mxu0
        %v3081 = vadd.f32 %v2701, %v3080
        %v3082 = vpop.f32.mrb[0].mxu0
        %v3083 = vadd.f32 %v2705, %v3082
        %v3084 = vpop.f32.mrb[0].mxu0
        %v3085 = vadd.f32 %v2701, %v3084
        %v3086 = vpop.f32.mrb[0].mxu0
        %v3087 = vadd.f32 %v2705, %v3086
        %3088 = vdwg.mxu0
        %3089 = vmatprep.subr.bf16.mxu0 %v2859
        %3090 = vmatpush1.bf16.msra.mxu0 %v2858
        %3091 = vmatprep.subr.bf16.mxu0 %v2875
        %3092 = vmatpush1.bf16.msra.mxu0 %v2874
        %3093 = vmatprep.subr.bf16.mxu0 0
        %3094 = vmatpush1.bf16.msra.mxu0 0
        %3095 = vmatprep.subr.bf16.mxu0 0
        %3096 = vmatpush1.bf16.msra.mxu0 0
        %3097 = vmatprep.subr.bf16.mxu0 0
        %3098 = vmatpush1.bf16.msra.mxu0 0
        %3099 = vmatprep.subr.bf16.mxu0 0
        %3100 = vmatpush1.bf16.msra.mxu0 0
        %3101 = vmatprep.subr.bf16.mxu0 0
        %3102 = vmatpush1.bf16.msra.mxu0 0
        %3103 = vmatprep.subr.bf16.mxu0 0
        %3104 = vmatpush1.bf16.msra.mxu0 0
        %3105 = vmatprep.subr.bf16.mxu0 0
        %3106 = vmatpush1.bf16.msra.mxu0 0
        %3107 = vmatprep.subr.bf16.mxu0 0
        %3108 = vmatpush1.bf16.msra.mxu0 0
        %3109 = vmatprep.subr.bf16.mxu0 0
        %3110 = vmatpush1.bf16.msra.mxu0 0
        %3111 = vmatprep.subr.bf16.mxu0 0
        %3112 = vmatpush1.bf16.msra.mxu0 0
        %3113 = vmatprep.subr.bf16.mxu0 0
        %3114 = vmatpush1.bf16.msra.mxu0 0
        %3115 = vmatprep.subr.bf16.mxu0 0
        %3116 = vmatpush1.bf16.msra.mxu0 0
        %3117 = vmatprep.subr.bf16.mxu0 0
        %3118 = vmatpush1.bf16.msra.mxu0 0
        %3119 = vmatprep.subr.bf16.mxu0 0
        %3120 = vmatpush1.bf16.msra.mxu0 0
        %3121 = vmatprep.mubr.bf16.mxu0 0
        %3122 = vmatmul.mubr.bf16.gmra.mrb[0].mxu0 %v2915
        %v3123 = vpop.f32.mrb[0].mxu0
        %v3124 = vadd.f32 %v2709, %v3123
        %v3125 = vpop.f32.mrb[0].mxu0
        %v3126 = vadd.f32 %v2713, %v3125
        %v3127 = vpop.f32.mrb[0].mxu0
        %v3128 = vadd.f32 %v2709, %v3127
        %v3129 = vpop.f32.mrb[0].mxu0
        %v3130 = vadd.f32 %v2713, %v3129
        %3131 = vdwg.mxu0
        %3132 = vmatprep.subr.bf16.mxu0 %v2861
        %3133 = vmatpush1.bf16.msra.mxu0 %v2860
        %3134 = vmatprep.subr.bf16.mxu0 %v2877
        %3135 = vmatpush1.bf16.msra.mxu0 %v2876
        %3136 = vmatprep.subr.bf16.mxu0 0
        %3137 = vmatpush1.bf16.msra.mxu0 0
        %3138 = vmatprep.subr.bf16.mxu0 0
        %3139 = vmatpush1.bf16.msra.mxu0 0
        %3140 = vmatprep.subr.bf16.mxu0 0
        %3141 = vmatpush1.bf16.msra.mxu0 0
        %3142 = vmatprep.subr.bf16.mxu0 0
        %3143 = vmatpush1.bf16.msra.mxu0 0
        %3144 = vmatprep.subr.bf16.mxu0 0
        %3145 = vmatpush1.bf16.msra.mxu0 0
        %3146 = vmatprep.subr.bf16.mxu0 0
        %3147 = vmatpush1.bf16.msra.mxu0 0
        %3148 = vmatprep.subr.bf16.mxu0 0
        %3149 = vmatpush1.bf16.msra.mxu0 0
        %3150 = vmatprep.subr.bf16.mxu0 0
        %3151 = vmatpush1.bf16.msra.mxu0 0
        %3152 = vmatprep.subr.bf16.mxu0 0
        %3153 = vmatpush1.bf16.msra.mxu0 0
        %3154 = vmatprep.subr.bf16.mxu0 0
        %3155 = vmatpush1.bf16.msra.mxu0 0
        %3156 = vmatprep.subr.bf16.mxu0 0
        %3157 = vmatpush1.bf16.msra.mxu0 0
        %3158 = vmatprep.subr.bf16.mxu0 0
        %3159 = vmatpush1.bf16.msra.mxu0 0
        %3160 = vmatprep.subr.bf16.mxu0 0
        %3161 = vmatpush1.bf16.msra.mxu0 0
        %3162 = vmatprep.subr.bf16.mxu0 0
        %3163 = vmatpush1.bf16.msra.mxu0 0
        %3164 = vmatprep.mubr.bf16.mxu0 0
        %3165 = vmatmul.mubr.bf16.gmra.mrb[0].mxu0 %v2915
        %v3166 = vpop.f32.mrb[0].mxu0
        %v3167 = vadd.f32 %v2717, %v3166
        %v3168 = vpop.f32.mrb[0].mxu0
        %v3169 = vadd.f32 %v2721, %v3168
        %v3170 = vpop.f32.mrb[0].mxu0
        %v3171 = vadd.f32 %v2717, %v3170
        %v3172 = vpop.f32.mrb[0].mxu0
        %v3173 = vadd.f32 %v2721, %v3172
        %3174 = vdwg.mxu0
        %3175 = vmatprep.subr.bf16.mxu0 %v2863
        %3176 = vmatpush1.bf16.msra.mxu0 %v2862
        %3177 = vmatprep.subr.bf16.mxu0 %v2879
        %3178 = vmatpush1.bf16.msra.mxu0 %v2878
        %3179 = vmatprep.subr.bf16.mxu0 0
        %3180 = vmatpush1.bf16.msra.mxu0 0
        %3181 = vmatprep.subr.bf16.mxu0 0
        %3182 = vmatpush1.bf16.msra.mxu0 0
        %3183 = vmatprep.subr.bf16.mxu0 0
        %3184 = vmatpush1.bf16.msra.mxu0 0
        %3185 = vmatprep.subr.bf16.mxu0 0
        %3186 = vmatpush1.bf16.msra.mxu0 0
        %3187 = vmatprep.subr.bf16.mxu0 0
        %3188 = vmatpush1.bf16.msra.mxu0 0
        %3189 = vmatprep.subr.bf16.mxu0 0
        %3190 = vmatpush1.bf16.msra.mxu0 0
        %3191 = vmatprep.subr.bf16.mxu0 0
        %3192 = vmatpush1.bf16.msra.mxu0 0
        %3193 = vmatprep.subr.bf16.mxu0 0
        %3194 = vmatpush1.bf16.msra.mxu0 0
        %3195 = vmatprep.subr.bf16.mxu0 0
        %3196 = vmatpush1.bf16.msra.mxu0 0
        %3197 = vmatprep.subr.bf16.mxu0 0
        %3198 = vmatpush1.bf16.msra.mxu0 0
        %3199 = vmatprep.subr.bf16.mxu0 0
        %3200 = vmatpush1.bf16.msra.mxu0 0
        %3201 = vmatprep.subr.bf16.mxu0 0
        %3202 = vmatpush1.bf16.msra.mxu0 0
        %3203 = vmatprep.subr.bf16.mxu0 0
        %3204 = vmatpush1.bf16.msra.mxu0 0
        %3205 = vmatprep.subr.bf16.mxu0 0
        %3206 = vmatpush1.bf16.msra.mxu0 0
        %3207 = vmatprep.mubr.bf16.mxu0 0
        %3208 = vmatmul.mubr.bf16.gmra.mrb[0].mxu0 %v2915
        %v3209 = vpop.f32.mrb[0].mxu0
        %v3210 = vadd.f32 %v2725, %v3209
        %v3211 = vpop.f32.mrb[0].mxu0
        %v3212 = vadd.f32 %v2729, %v3211
        %v3213 = vpop.f32.mrb[0].mxu0
        %v3214 = vadd.f32 %v2725, %v3213
        %v3215 = vpop.f32.mrb[0].mxu0
        %v3216 = vadd.f32 %v2729, %v3215
        %3217 = vdwg.mxu0
        %3218 = vmatprep.subr.bf16.mxu0 %v2865
        %3219 = vmatpush1.bf16.msra.mxu0 %v2864
        %3220 = vmatprep.subr.bf16.mxu0 %v2881
        %3221 = vmatpush1.bf16.msra.mxu0 %v2880
        %3222 = vmatprep.subr.bf16.mxu0 0
        %3223 = vmatpush1.bf16.msra.mxu0 0
        %3224 = vmatprep.subr.bf16.mxu0 0
        %3225 = vmatpush1.bf16.msra.mxu0 0
        %3226 = vmatprep.subr.bf16.mxu0 0
        %3227 = vmatpush1.bf16.msra.mxu0 0
        %3228 = vmatprep.subr.bf16.mxu0 0
        %3229 = vmatpush1.bf16.msra.mxu0 0
        %3230 = vmatprep.subr.bf16.mxu0 0
        %3231 = vmatpush1.bf16.msra.mxu0 0
        %3232 = vmatprep.subr.bf16.mxu0 0
        %3233 = vmatpush1.bf16.msra.mxu0 0
        %3234 = vmatprep.subr.bf16.mxu0 0
        %3235 = vmatpush1.bf16.msra.mxu0 0
        %3236 = vmatprep.subr.bf16.mxu0 0
        %3237 = vmatpush1.bf16.msra.mxu0 0
        %3238 = vmatprep.subr.bf16.mxu0 0
        %3239 = vmatpush1.bf16.msra.mxu0 0
        %3240 = vmatprep.subr.bf16.mxu0 0
        %3241 = vmatpush1.bf16.msra.mxu0 0
        %3242 = vmatprep.subr.bf16.mxu0 0
        %3243 = vmatpush1.bf16.msra.mxu0 0
        %3244 = vmatprep.subr.bf16.mxu0 0
        %3245 = vmatpush1.bf16.msra.mxu0 0
        %3246 = vmatprep.subr.bf16.mxu0 0
        %3247 = vmatpush1.bf16.msra.mxu0 0
        %3248 = vmatprep.subr.bf16.mxu0 0
        %3249 = vmatpush1.bf16.msra.mxu0 0
        %3250 = vmatprep.mubr.bf16.mxu0 0
        %3251 = vmatmul.mubr.bf16.gmra.mrb[0].mxu0 %v2915
        %v3252 = vpop.f32.mrb[0].mxu0
        %v3253 = vadd.f32 %v2733, %v3252
        %v3254 = vpop.f32.mrb[0].mxu0
        %v3255 = vadd.f32 %v2737, %v3254
        %v3256 = vpop.f32.mrb[0].mxu0
        %v3257 = vadd.f32 %v2733, %v3256
        %v3258 = vpop.f32.mrb[0].mxu0
        %v3259 = vadd.f32 %v2737, %v3258
        %3260 = vdwg.mxu0
        %v3261 = vmax.f32 %v2952, 0.0
        %v3262 = vmax.f32 %v2954, 0.0
        %v3263 = vmax.f32 %v2995, 0.0
        %v3264 = vmax.f32 %v2997, 0.0
        %v3265 = vmax.f32 %v3038, 0.0
        %v3266 = vmax.f32 %v3040, 0.0
        %v3267 = vmax.f32 %v3081, 0.0
        %v3268 = vmax.f32 %v3083, 0.0
        %v3269 = vmax.f32 %v3124, 0.0
        %v3270 = vmax.f32 %v3126, 0.0
        %v3271 = vmax.f32 %v3167, 0.0
        %v3272 = vmax.f32 %v3169, 0.0
        %v3273 = vmax.f32 %v3210, 0.0
        %v3274 = vmax.f32 %v3212, 0.0
        %v3275 = vmax.f32 %v3253, 0.0
        %v3276 = vmax.f32 %v3255, 0.0
        %v3277 = vmax.f32 %v2956, 0.0
        %v3278 = vmax.f32 %v2958, 0.0
        %v3279 = vmax.f32 %v2999, 0.0
        %v3280 = vmax.f32 %v3001, 0.0
        %v3281 = vmax.f32 %v3042, 0.0
        %v3282 = vmax.f32 %v3044, 0.0
        %v3283 = vmax.f32 %v3085, 0.0
        %v3284 = vmax.f32 %v3087, 0.0
        %v3285 = vmax.f32 %v3128, 0.0
        %v3286 = vmax.f32 %v3130, 0.0
        %v3287 = vmax.f32 %v3171, 0.0
        %v3288 = vmax.f32 %v3173, 0.0
        %v3289 = vmax.f32 %v3214, 0.0
        %v3290 = vmax.f32 %v3216, 0.0
        %v3291 = vmax.f32 %v3257, 0.0
        %v3292 = vmax.f32 %v3259, 0.0
        %v3293 = vpack.c.bf16 %v3277, %v3261
        %v3294 = vpack.c.bf16 %v3278, %v3262
        %v3295 = vpack.c.bf16 %v3279, %v3263
        %v3296 = vpack.c.bf16 %v3280, %v3264
        %v3297 = vpack.c.bf16 %v3281, %v3265
        %v3298 = vpack.c.bf16 %v3282, %v3266
        %v3299 = vpack.c.bf16 %v3283, %v3267
        %v3300 = vpack.c.bf16 %v3284, %v3268
        %v3301 = vpack.c.bf16 %v3285, %v3269
        %v3302 = vpack.c.bf16 %v3286, %v3270
        %v3303 = vpack.c.bf16 %v3287, %v3271
        %v3304 = vpack.c.bf16 %v3288, %v3272
        %v3305 = vpack.c.bf16 %v3289, %v3273
        %v3306 = vpack.c.bf16 %v3290, %v3274
        %v3307 = vpack.c.bf16 %v3291, %v3275
        %v3308 = vpack.c.bf16 %v3292, %v3276
        %v3309 = vld [vmem:[%s1106] sm:$0xf]
        %v3310 = vld [vmem:[%s1106 + $0x4] sm:$0xf]
        %v3311 = vld [vmem:[%s1106 + $0x8] sm:$0xf]
        %v3312 = vld [vmem:[%s1106 + $0xc] sm:$0xf]
        %v3313 = vld [vmem:[%s1106 + $0x10] sm:$0xf]
        %v3314 = vld [vmem:[%s1106 + $0x14] sm:$0xf]
        %v3315 = vld [vmem:[%s1106 + $0x18] sm:$0xf]
        %v3316 = vld [vmem:[%s1106 + $0x1c] sm:$0xf]
        %v3317 = vld [vmem:[%s1106 + $0x20] sm:$0xf]
        %v3318 = vld [vmem:[%s1106 + $0x24] sm:$0xf]
        %v3319 = vld [vmem:[%s1106 + $0x28] sm:$0xf]
        %v3320 = vld [vmem:[%s1106 + $0x2c] sm:$0xf]
        %v3321 = vld [vmem:[%s1106 + $0x30] sm:$0xf]
        %v3322 = vld [vmem:[%s1106 + $0x34] sm:$0xf]
        %v3323 = vld [vmem:[%s1106 + $0x38] sm:$0xf]
        %v3324 = vld [vmem:[%s1106 + $0x3c] sm:$0xf]
        %v3325 = vld [vmem:[%s1106 + $0x40] sm:$0xf]
        %v3326 = vld [vmem:[%s1106 + $0x44] sm:$0xf]
        %v3327 = vld [vmem:[%s1106 + $0x48] sm:$0xf]
        %v3328 = vld [vmem:[%s1106 + $0x4c] sm:$0xf]
        %v3329 = vld [vmem:[%s1106 + $0x50] sm:$0xf]
        %v3330 = vld [vmem:[%s1106 + $0x54] sm:$0xf]
        %v3331 = vld [vmem:[%s1106 + $0x58] sm:$0xf]
        %v3332 = vld [vmem:[%s1106 + $0x5c] sm:$0xf]
        %v3333 = vld [vmem:[%s1106 + $0x60] sm:$0xf]
        %v3334 = vld [vmem:[%s1106 + $0x64] sm:$0xf]
        %v3335 = vld [vmem:[%s1106 + $0x68] sm:$0xf]
        %v3336 = vld [vmem:[%s1106 + $0x6c] sm:$0xf]
        %v3337 = vld [vmem:[%s1106 + $0x70] sm:$0xf]
        %v3338 = vld [vmem:[%s1106 + $0x74] sm:$0xf]
        %v3339 = vld [vmem:[%s1106 + $0x78] sm:$0xf]
        %v3340 = vld [vmem:[%s1106 + $0x7c] sm:$0xf]
        %v3341 = vld [vmem:[%s1106 + $0x80] sm:$0xf]
        %v3342 = vld [vmem:[%s1106 + $0x84] sm:$0xf]
        %v3343 = vld [vmem:[%s1106 + $0x88] sm:$0xf]
        %v3344 = vld [vmem:[%s1106 + $0x8c] sm:$0xf]
        %v3345 = vld [vmem:[%s1106 + $0x90] sm:$0xf]
        %v3346 = vld [vmem:[%s1106 + $0x94] sm:$0xf]
        %v3347 = vld [vmem:[%s1106 + $0x98] sm:$0xf]
        %v3348 = vld [vmem:[%s1106 + $0x9c] sm:$0xf]
        %v3349 = vld [vmem:[%s1106 + $0xa0] sm:$0xf]
        %v3350 = vld [vmem:[%s1106 + $0xa4] sm:$0xf]
        %v3351 = vld [vmem:[%s1106 + $0xa8] sm:$0xf]
        %v3352 = vld [vmem:[%s1106 + $0xac] sm:$0xf]
        %v3353 = vld [vmem:[%s1106 + $0xb0] sm:$0xf]
        %v3354 = vld [vmem:[%s1106 + $0xb4] sm:$0xf]
        %v3355 = vld [vmem:[%s1106 + $0xb8] sm:$0xf]
        %v3356 = vld [vmem:[%s1106 + $0xbc] sm:$0xf]
        %v3357 = vld [vmem:[%s1106 + $0xc0] sm:$0xf]
        %v3358 = vld [vmem:[%s1106 + $0xc4] sm:$0xf]
        %v3359 = vld [vmem:[%s1106 + $0xc8] sm:$0xf]
        %v3360 = vld [vmem:[%s1106 + $0xcc] sm:$0xf]
        %v3361 = vld [vmem:[%s1106 + $0xd0] sm:$0xf]
        %v3362 = vld [vmem:[%s1106 + $0xd4] sm:$0xf]
        %v3363 = vld [vmem:[%s1106 + $0xd8] sm:$0xf]
        %v3364 = vld [vmem:[%s1106 + $0xdc] sm:$0xf]
        %v3365 = vld [vmem:[%s1106 + $0xe0] sm:$0xf]
        %v3366 = vld [vmem:[%s1106 + $0xe4] sm:$0xf]
        %v3367 = vld [vmem:[%s1106 + $0xe8] sm:$0xf]
        %v3368 = vld [vmem:[%s1106 + $0xec] sm:$0xf]
        %v3369 = vld [vmem:[%s1106 + $0xf0] sm:$0xf]
        %v3370 = vld [vmem:[%s1106 + $0xf4] sm:$0xf]
        %v3371 = vld [vmem:[%s1106 + $0xf8] sm:$0xf]
        %v3372 = vld [vmem:[%s1106 + $0xfc] sm:$0xf]
        %v3373 = vld [vmem:[%s1106 + $0x100] sm:$0xf]
        %v3374 = vld [vmem:[%s1106 + $0x104] sm:$0xf]
        %v3375 = vld [vmem:[%s1106 + $0x108] sm:$0xf]
        %v3376 = vld [vmem:[%s1106 + $0x10c] sm:$0xf]
        %v3377 = vld [vmem:[%s1106 + $0x110] sm:$0xf]
        %v3378 = vld [vmem:[%s1106 + $0x114] sm:$0xf]
        %v3379 = vld [vmem:[%s1106 + $0x118] sm:$0xf]
        %v3380 = vld [vmem:[%s1106 + $0x11c] sm:$0xf]
        %v3381 = vld [vmem:[%s1106 + $0x120] sm:$0xf]
        %v3382 = vld [vmem:[%s1106 + $0x124] sm:$0xf]
        %v3383 = vld [vmem:[%s1106 + $0x128] sm:$0xf]
        %v3384 = vld [vmem:[%s1106 + $0x12c] sm:$0xf]
        %v3385 = vld [vmem:[%s1106 + $0x130] sm:$0xf]
        %v3386 = vld [vmem:[%s1106 + $0x134] sm:$0xf]
        %v3387 = vld [vmem:[%s1106 + $0x138] sm:$0xf]
        %v3388 = vld [vmem:[%s1106 + $0x13c] sm:$0xf]
        %v3389 = vld [vmem:[%s1106 + $0x140] sm:$0xf]
        %v3390 = vld [vmem:[%s1106 + $0x144] sm:$0xf]
        %v3391 = vld [vmem:[%s1106 + $0x148] sm:$0xf]
        %v3392 = vld [vmem:[%s1106 + $0x14c] sm:$0xf]
        %v3393 = vld [vmem:[%s1106 + $0x150] sm:$0xf]
        %v3394 = vld [vmem:[%s1106 + $0x154] sm:$0xf]
        %v3395 = vld [vmem:[%s1106 + $0x158] sm:$0xf]
        %v3396 = vld [vmem:[%s1106 + $0x15c] sm:$0xf]
        %v3397 = vld [vmem:[%s1106 + $0x160] sm:$0xf]
        %v3398 = vld [vmem:[%s1106 + $0x164] sm:$0xf]
        %v3399 = vld [vmem:[%s1106 + $0x168] sm:$0xf]
        %v3400 = vld [vmem:[%s1106 + $0x16c] sm:$0xf]
        %v3401 = vld [vmem:[%s1106 + $0x170] sm:$0xf]
        %v3402 = vld [vmem:[%s1106 + $0x174] sm:$0xf]
        %v3403 = vld [vmem:[%s1106 + $0x178] sm:$0xf]
        %v3404 = vld [vmem:[%s1106 + $0x17c] sm:$0xf]
        %v3405 = vld [vmem:[%s1106 + $0x180] sm:$0xf]
        %v3406 = vld [vmem:[%s1106 + $0x184] sm:$0xf]
        %v3407 = vld [vmem:[%s1106 + $0x188] sm:$0xf]
        %v3408 = vld [vmem:[%s1106 + $0x18c] sm:$0xf]
        %v3409 = vld [vmem:[%s1106 + $0x190] sm:$0xf]
        %v3410 = vld [vmem:[%s1106 + $0x194] sm:$0xf]
        %v3411 = vld [vmem:[%s1106 + $0x198] sm:$0xf]
        %v3412 = vld [vmem:[%s1106 + $0x19c] sm:$0xf]
        %v3413 = vld [vmem:[%s1106 + $0x1a0] sm:$0xf]
        %v3414 = vld [vmem:[%s1106 + $0x1a4] sm:$0xf]
        %v3415 = vld [vmem:[%s1106 + $0x1a8] sm:$0xf]
        %v3416 = vld [vmem:[%s1106 + $0x1ac] sm:$0xf]
        %v3417 = vld [vmem:[%s1106 + $0x1b0] sm:$0xf]
        %v3418 = vld [vmem:[%s1106 + $0x1b4] sm:$0xf]
        %v3419 = vld [vmem:[%s1106 + $0x1b8] sm:$0xf]
        %v3420 = vld [vmem:[%s1106 + $0x1bc] sm:$0xf]
        %v3421 = vld [vmem:[%s1106 + $0x1c0] sm:$0xf]
        %v3422 = vld [vmem:[%s1106 + $0x1c4] sm:$0xf]
        %v3423 = vld [vmem:[%s1106 + $0x1c8] sm:$0xf]
        %v3424 = vld [vmem:[%s1106 + $0x1cc] sm:$0xf]
        %v3425 = vld [vmem:[%s1106 + $0x1d0] sm:$0xf]
        %v3426 = vld [vmem:[%s1106 + $0x1d4] sm:$0xf]
        %v3427 = vld [vmem:[%s1106 + $0x1d8] sm:$0xf]
        %v3428 = vld [vmem:[%s1106 + $0x1dc] sm:$0xf]
        %v3429 = vld [vmem:[%s1106 + $0x1e0] sm:$0xf]
        %v3430 = vld [vmem:[%s1106 + $0x1e4] sm:$0xf]
        %v3431 = vld [vmem:[%s1106 + $0x1e8] sm:$0xf]
        %v3432 = vld [vmem:[%s1106 + $0x1ec] sm:$0xf]
        %v3433 = vld [vmem:[%s1106 + $0x1f0] sm:$0xf]
        %v3434 = vld [vmem:[%s1106 + $0x1f4] sm:$0xf]
        %v3435 = vld [vmem:[%s1106 + $0x1f8] sm:$0xf]
        %v3436 = vld [vmem:[%s1106 + $0x1fc] sm:$0xf]
        %v3437 = vld [vmem:[%s1106 + $0x200] sm:$0xf]
        %v3438 = vld [vmem:[%s1106 + $0x204] sm:$0xf]
        %v3439 = vld [vmem:[%s1106 + $0x208] sm:$0xf]
        %v3440 = vld [vmem:[%s1106 + $0x20c] sm:$0xf]
        %v3441 = vld [vmem:[%s1106 + $0x210] sm:$0xf]
        %v3442 = vld [vmem:[%s1106 + $0x214] sm:$0xf]
        %v3443 = vld [vmem:[%s1106 + $0x218] sm:$0xf]
        %v3444 = vld [vmem:[%s1106 + $0x21c] sm:$0xf]
        %v3445 = vld [vmem:[%s1106 + $0x220] sm:$0xf]
        %v3446 = vld [vmem:[%s1106 + $0x224] sm:$0xf]
        %v3447 = vld [vmem:[%s1106 + $0x228] sm:$0xf]
        %v3448 = vld [vmem:[%s1106 + $0x22c] sm:$0xf]
        %v3449 = vld [vmem:[%s1106 + $0x230] sm:$0xf]
        %v3450 = vld [vmem:[%s1106 + $0x234] sm:$0xf]
        %v3451 = vld [vmem:[%s1106 + $0x238] sm:$0xf]
        %v3452 = vld [vmem:[%s1106 + $0x23c] sm:$0xf]
        %v3453 = vld [vmem:[%s1106 + $0x240] sm:$0xf]
        %v3454 = vld [vmem:[%s1106 + $0x244] sm:$0xf]
        %v3455 = vld [vmem:[%s1106 + $0x248] sm:$0xf]
        %v3456 = vld [vmem:[%s1106 + $0x24c] sm:$0xf]
        %v3457 = vld [vmem:[%s1106 + $0x250] sm:$0xf]
        %v3458 = vld [vmem:[%s1106 + $0x254] sm:$0xf]
        %v3459 = vld [vmem:[%s1106 + $0x258] sm:$0xf]
        %v3460 = vld [vmem:[%s1106 + $0x25c] sm:$0xf]
        %v3461 = vld [vmem:[%s1106 + $0x260] sm:$0xf]
        %v3462 = vld [vmem:[%s1106 + $0x264] sm:$0xf]
        %v3463 = vld [vmem:[%s1106 + $0x268] sm:$0xf]
        %v3464 = vld [vmem:[%s1106 + $0x26c] sm:$0xf]
        %v3465 = vld [vmem:[%s1106 + $0x270] sm:$0xf]
        %v3466 = vld [vmem:[%s1106 + $0x274] sm:$0xf]
        %v3467 = vld [vmem:[%s1106 + $0x278] sm:$0xf]
        %v3468 = vld [vmem:[%s1106 + $0x27c] sm:$0xf]
        %v3469 = vld [vmem:[%s1106 + $0x280] sm:$0xf]
        %v3470 = vld [vmem:[%s1106 + $0x284] sm:$0xf]
        %v3471 = vld [vmem:[%s1106 + $0x288] sm:$0xf]
        %v3472 = vld [vmem:[%s1106 + $0x28c] sm:$0xf]
        %v3473 = vld [vmem:[%s1106 + $0x290] sm:$0xf]
        %v3474 = vld [vmem:[%s1106 + $0x294] sm:$0xf]
        %v3475 = vld [vmem:[%s1106 + $0x298] sm:$0xf]
        %v3476 = vld [vmem:[%s1106 + $0x29c] sm:$0xf]
        %v3477 = vld [vmem:[%s1106 + $0x2a0] sm:$0xf]
        %v3478 = vld [vmem:[%s1106 + $0x2a4] sm:$0xf]
        %v3479 = vld [vmem:[%s1106 + $0x2a8] sm:$0xf]
        %v3480 = vld [vmem:[%s1106 + $0x2ac] sm:$0xf]
        %v3481 = vld [vmem:[%s1106 + $0x2b0] sm:$0xf]
        %v3482 = vld [vmem:[%s1106 + $0x2b4] sm:$0xf]
        %v3483 = vld [vmem:[%s1106 + $0x2b8] sm:$0xf]
        %v3484 = vld [vmem:[%s1106 + $0x2bc] sm:$0xf]
        %v3485 = vld [vmem:[%s1106 + $0x2c0] sm:$0xf]
        %v3486 = vld [vmem:[%s1106 + $0x2c4] sm:$0xf]
        %v3487 = vld [vmem:[%s1106 + $0x2c8] sm:$0xf]
        %v3488 = vld [vmem:[%s1106 + $0x2cc] sm:$0xf]
        %v3489 = vld [vmem:[%s1106 + $0x2d0] sm:$0xf]
        %v3490 = vld [vmem:[%s1106 + $0x2d4] sm:$0xf]
        %v3491 = vld [vmem:[%s1106 + $0x2d8] sm:$0xf]
        %v3492 = vld [vmem:[%s1106 + $0x2dc] sm:$0xf]
        %v3493 = vld [vmem:[%s1106 + $0x2e0] sm:$0xf]
        %v3494 = vld [vmem:[%s1106 + $0x2e4] sm:$0xf]
        %v3495 = vld [vmem:[%s1106 + $0x2e8] sm:$0xf]
        %v3496 = vld [vmem:[%s1106 + $0x2ec] sm:$0xf]
        %v3497 = vld [vmem:[%s1106 + $0x2f0] sm:$0xf]
        %v3498 = vld [vmem:[%s1106 + $0x2f4] sm:$0xf]
        %v3499 = vld [vmem:[%s1106 + $0x2f8] sm:$0xf]
        %v3500 = vld [vmem:[%s1106 + $0x2fc] sm:$0xf]
        %v3501 = vld [vmem:[%s1106 + $0x300] sm:$0xf]
        %v3502 = vld [vmem:[%s1106 + $0x304] sm:$0xf]
        %v3503 = vld [vmem:[%s1106 + $0x308] sm:$0xf]
        %v3504 = vld [vmem:[%s1106 + $0x30c] sm:$0xf]
        %v3505 = vld [vmem:[%s1106 + $0x310] sm:$0xf]
        %v3506 = vld [vmem:[%s1106 + $0x314] sm:$0xf]
        %v3507 = vld [vmem:[%s1106 + $0x318] sm:$0xf]
        %v3508 = vld [vmem:[%s1106 + $0x31c] sm:$0xf]
        %v3509 = vld [vmem:[%s1106 + $0x320] sm:$0xf]
        %v3510 = vld [vmem:[%s1106 + $0x324] sm:$0xf]
        %v3511 = vld [vmem:[%s1106 + $0x328] sm:$0xf]
        %v3512 = vld [vmem:[%s1106 + $0x32c] sm:$0xf]
        %v3513 = vld [vmem:[%s1106 + $0x330] sm:$0xf]
        %v3514 = vld [vmem:[%s1106 + $0x334] sm:$0xf]
        %v3515 = vld [vmem:[%s1106 + $0x338] sm:$0xf]
        %v3516 = vld [vmem:[%s1106 + $0x33c] sm:$0xf]
        %v3517 = vld [vmem:[%s1106 + $0x340] sm:$0xf]
        %v3518 = vld [vmem:[%s1106 + $0x344] sm:$0xf]
        %v3519 = vld [vmem:[%s1106 + $0x348] sm:$0xf]
        %v3520 = vld [vmem:[%s1106 + $0x34c] sm:$0xf]
        %v3521 = vld [vmem:[%s1106 + $0x350] sm:$0xf]
        %v3522 = vld [vmem:[%s1106 + $0x354] sm:$0xf]
        %v3523 = vld [vmem:[%s1106 + $0x358] sm:$0xf]
        %v3524 = vld [vmem:[%s1106 + $0x35c] sm:$0xf]
        %v3525 = vld [vmem:[%s1106 + $0x360] sm:$0xf]
        %v3526 = vld [vmem:[%s1106 + $0x364] sm:$0xf]
        %v3527 = vld [vmem:[%s1106 + $0x368] sm:$0xf]
        %v3528 = vld [vmem:[%s1106 + $0x36c] sm:$0xf]
        %v3529 = vld [vmem:[%s1106 + $0x370] sm:$0xf]
        %v3530 = vld [vmem:[%s1106 + $0x374] sm:$0xf]
        %v3531 = vld [vmem:[%s1106 + $0x378] sm:$0xf]
        %v3532 = vld [vmem:[%s1106 + $0x37c] sm:$0xf]
        %v3533 = vld [vmem:[%s1106 + $0x380] sm:$0xf]
        %v3534 = vld [vmem:[%s1106 + $0x384] sm:$0xf]
        %v3535 = vld [vmem:[%s1106 + $0x388] sm:$0xf]
        %v3536 = vld [vmem:[%s1106 + $0x38c] sm:$0xf]
        %v3537 = vld [vmem:[%s1106 + $0x390] sm:$0xf]
        %v3538 = vld [vmem:[%s1106 + $0x394] sm:$0xf]
        %v3539 = vld [vmem:[%s1106 + $0x398] sm:$0xf]
        %v3540 = vld [vmem:[%s1106 + $0x39c] sm:$0xf]
        %v3541 = vld [vmem:[%s1106 + $0x3a0] sm:$0xf]
        %v3542 = vld [vmem:[%s1106 + $0x3a4] sm:$0xf]
        %v3543 = vld [vmem:[%s1106 + $0x3a8] sm:$0xf]
        %v3544 = vld [vmem:[%s1106 + $0x3ac] sm:$0xf]
        %v3545 = vld [vmem:[%s1106 + $0x3b0] sm:$0xf]
        %v3546 = vld [vmem:[%s1106 + $0x3b4] sm:$0xf]
        %v3547 = vld [vmem:[%s1106 + $0x3b8] sm:$0xf]
        %v3548 = vld [vmem:[%s1106 + $0x3bc] sm:$0xf]
        %v3549 = vld [vmem:[%s1106 + $0x3c0] sm:$0xf]
        %v3550 = vld [vmem:[%s1106 + $0x3c4] sm:$0xf]
        %v3551 = vld [vmem:[%s1106 + $0x3c8] sm:$0xf]
        %v3552 = vld [vmem:[%s1106 + $0x3cc] sm:$0xf]
        %v3553 = vld [vmem:[%s1106 + $0x3d0] sm:$0xf]
        %v3554 = vld [vmem:[%s1106 + $0x3d4] sm:$0xf]
        %v3555 = vld [vmem:[%s1106 + $0x3d8] sm:$0xf]
        %v3556 = vld [vmem:[%s1106 + $0x3dc] sm:$0xf]
        %v3557 = vld [vmem:[%s1106 + $0x3e0] sm:$0xf]
        %v3558 = vld [vmem:[%s1106 + $0x3e4] sm:$0xf]
        %v3559 = vld [vmem:[%s1106 + $0x3e8] sm:$0xf]
        %v3560 = vld [vmem:[%s1106 + $0x3ec] sm:$0xf]
        %v3561 = vld [vmem:[%s1106 + $0x3f0] sm:$0xf]
        %v3562 = vld [vmem:[%s1106 + $0x3f4] sm:$0xf]
        %v3563 = vld [vmem:[%s1106 + $0x3f8] sm:$0xf]
        %v3564 = vld [vmem:[%s1106 + $0x3fc] sm:$0xf]
        %v3565 = vld [vmem:[%s1109] sm:$0x1]
        %v3567 = vlaneseq
        %v3568 = vshrl.u32 %v3567, 7
        %v3569 = vsub.s32 0, %v3568
        %v3570 = vrot.slane %v3565, %v3569
        %v3828 = vunpack.c.l.b16 %v3309
        %v3829 = vunpack.c.l.b16 %v3310
        %v3830 = vunpack.c.l.b16 %v3311
        %v3831 = vunpack.c.l.b16 %v3312
        %v3832 = vunpack.c.l.b16 %v3313
        %v3833 = vunpack.c.l.b16 %v3314
        %v3834 = vunpack.c.l.b16 %v3315
        %v3835 = vunpack.c.l.b16 %v3316
        %v3836 = vunpack.c.l.b16 %v3317
        %v3837 = vunpack.c.l.b16 %v3318
        %v3838 = vunpack.c.l.b16 %v3319
        %v3839 = vunpack.c.l.b16 %v3320
        %v3840 = vunpack.c.l.b16 %v3321
        %v3841 = vunpack.c.l.b16 %v3322
        %v3842 = vunpack.c.l.b16 %v3323
        %v3843 = vunpack.c.l.b16 %v3324
        %v3844 = vunpack.c.l.b16 %v3325
        %v3845 = vunpack.c.l.b16 %v3326
        %v3846 = vunpack.c.l.b16 %v3327
        %v3847 = vunpack.c.l.b16 %v3328
        %v3848 = vunpack.c.l.b16 %v3329
        %v3849 = vunpack.c.l.b16 %v3330
        %v3850 = vunpack.c.l.b16 %v3331
        %v3851 = vunpack.c.l.b16 %v3332
        %v3852 = vunpack.c.l.b16 %v3333
        %v3853 = vunpack.c.l.b16 %v3334
        %v3854 = vunpack.c.l.b16 %v3335
        %v3855 = vunpack.c.l.b16 %v3336
        %v3856 = vunpack.c.l.b16 %v3337
        %v3857 = vunpack.c.l.b16 %v3338
        %v3858 = vunpack.c.l.b16 %v3339
        %v3859 = vunpack.c.l.b16 %v3340
        %v3860 = vunpack.c.l.b16 %v3341
        %v3861 = vunpack.c.l.b16 %v3342
        %v3862 = vunpack.c.l.b16 %v3343
        %v3863 = vunpack.c.l.b16 %v3344
        %v3864 = vunpack.c.l.b16 %v3345
        %v3865 = vunpack.c.l.b16 %v3346
        %v3866 = vunpack.c.l.b16 %v3347
        %v3867 = vunpack.c.l.b16 %v3348
        %v3868 = vunpack.c.l.b16 %v3349
        %v3869 = vunpack.c.l.b16 %v3350
        %v3870 = vunpack.c.l.b16 %v3351
        %v3871 = vunpack.c.l.b16 %v3352
        %v3872 = vunpack.c.l.b16 %v3353
        %v3873 = vunpack.c.l.b16 %v3354
        %v3874 = vunpack.c.l.b16 %v3355
        %v3875 = vunpack.c.l.b16 %v3356
        %v3876 = vunpack.c.l.b16 %v3357
        %v3877 = vunpack.c.l.b16 %v3358
        %v3878 = vunpack.c.l.b16 %v3359
        %v3879 = vunpack.c.l.b16 %v3360
        %v3880 = vunpack.c.l.b16 %v3361
        %v3881 = vunpack.c.l.b16 %v3362
        %v3882 = vunpack.c.l.b16 %v3363
        %v3883 = vunpack.c.l.b16 %v3364
        %v3884 = vunpack.c.l.b16 %v3365
        %v3885 = vunpack.c.l.b16 %v3366
        %v3886 = vunpack.c.l.b16 %v3367
        %v3887 = vunpack.c.l.b16 %v3368
        %v3888 = vunpack.c.l.b16 %v3369
        %v3889 = vunpack.c.l.b16 %v3370
        %v3890 = vunpack.c.l.b16 %v3371
        %v3891 = vunpack.c.l.b16 %v3372
        %v3892 = vunpack.c.l.b16 %v3373
        %v3893 = vunpack.c.l.b16 %v3374
        %v3894 = vunpack.c.l.b16 %v3375
        %v3895 = vunpack.c.l.b16 %v3376
        %v3896 = vunpack.c.l.b16 %v3377
        %v3897 = vunpack.c.l.b16 %v3378
        %v3898 = vunpack.c.l.b16 %v3379
        %v3899 = vunpack.c.l.b16 %v3380
        %v3900 = vunpack.c.l.b16 %v3381
        %v3901 = vunpack.c.l.b16 %v3382
        %v3902 = vunpack.c.l.b16 %v3383
        %v3903 = vunpack.c.l.b16 %v3384
        %v3904 = vunpack.c.l.b16 %v3385
        %v3905 = vunpack.c.l.b16 %v3386
        %v3906 = vunpack.c.l.b16 %v3387
        %v3907 = vunpack.c.l.b16 %v3388
        %v3908 = vunpack.c.l.b16 %v3389
        %v3909 = vunpack.c.l.b16 %v3390
        %v3910 = vunpack.c.l.b16 %v3391
        %v3911 = vunpack.c.l.b16 %v3392
        %v3912 = vunpack.c.l.b16 %v3393
        %v3913 = vunpack.c.l.b16 %v3394
        %v3914 = vunpack.c.l.b16 %v3395
        %v3915 = vunpack.c.l.b16 %v3396
        %v3916 = vunpack.c.l.b16 %v3397
        %v3917 = vunpack.c.l.b16 %v3398
        %v3918 = vunpack.c.l.b16 %v3399
        %v3919 = vunpack.c.l.b16 %v3400
        %v3920 = vunpack.c.l.b16 %v3401
        %v3921 = vunpack.c.l.b16 %v3402
        %v3922 = vunpack.c.l.b16 %v3403
        %v3923 = vunpack.c.l.b16 %v3404
        %v3924 = vunpack.c.l.b16 %v3405
        %v3925 = vunpack.c.l.b16 %v3406
        %v3926 = vunpack.c.l.b16 %v3407
        %v3927 = vunpack.c.l.b16 %v3408
        %v3928 = vunpack.c.l.b16 %v3409
        %v3929 = vunpack.c.l.b16 %v3410
        %v3930 = vunpack.c.l.b16 %v3411
        %v3931 = vunpack.c.l.b16 %v3412
        %v3932 = vunpack.c.l.b16 %v3413
        %v3933 = vunpack.c.l.b16 %v3414
        %v3934 = vunpack.c.l.b16 %v3415
        %v3935 = vunpack.c.l.b16 %v3416
        %v3936 = vunpack.c.l.b16 %v3417
        %v3937 = vunpack.c.l.b16 %v3418
        %v3938 = vunpack.c.l.b16 %v3419
        %v3939 = vunpack.c.l.b16 %v3420
        %v3940 = vunpack.c.l.b16 %v3421
        %v3941 = vunpack.c.l.b16 %v3422
        %v3942 = vunpack.c.l.b16 %v3423
        %v3943 = vunpack.c.l.b16 %v3424
        %v3944 = vunpack.c.l.b16 %v3425
        %v3945 = vunpack.c.l.b16 %v3426
        %v3946 = vunpack.c.l.b16 %v3427
        %v3947 = vunpack.c.l.b16 %v3428
        %v3948 = vunpack.c.l.b16 %v3429
        %v3949 = vunpack.c.l.b16 %v3430
        %v3950 = vunpack.c.l.b16 %v3431
        %v3951 = vunpack.c.l.b16 %v3432
        %v3952 = vunpack.c.l.b16 %v3433
        %v3953 = vunpack.c.l.b16 %v3434
        %v3954 = vunpack.c.l.b16 %v3435
        %v3955 = vunpack.c.l.b16 %v3436
        %v3956 = vunpack.c.l.b16 %v3437
        %v3957 = vunpack.c.l.b16 %v3438
        %v3958 = vunpack.c.l.b16 %v3439
        %v3959 = vunpack.c.l.b16 %v3440
        %v3960 = vunpack.c.l.b16 %v3441
        %v3961 = vunpack.c.l.b16 %v3442
        %v3962 = vunpack.c.l.b16 %v3443
        %v3963 = vunpack.c.l.b16 %v3444
        %v3964 = vunpack.c.l.b16 %v3445
        %v3965 = vunpack.c.l.b16 %v3446
        %v3966 = vunpack.c.l.b16 %v3447
        %v3967 = vunpack.c.l.b16 %v3448
        %v3968 = vunpack.c.l.b16 %v3449
        %v3969 = vunpack.c.l.b16 %v3450
        %v3970 = vunpack.c.l.b16 %v3451
        %v3971 = vunpack.c.l.b16 %v3452
        %v3972 = vunpack.c.l.b16 %v3453
        %v3973 = vunpack.c.l.b16 %v3454
        %v3974 = vunpack.c.l.b16 %v3455
        %v3975 = vunpack.c.l.b16 %v3456
        %v3976 = vunpack.c.l.b16 %v3457
        %v3977 = vunpack.c.l.b16 %v3458
        %v3978 = vunpack.c.l.b16 %v3459
        %v3979 = vunpack.c.l.b16 %v3460
        %v3980 = vunpack.c.l.b16 %v3461
        %v3981 = vunpack.c.l.b16 %v3462
        %v3982 = vunpack.c.l.b16 %v3463
        %v3983 = vunpack.c.l.b16 %v3464
        %v3984 = vunpack.c.l.b16 %v3465
        %v3985 = vunpack.c.l.b16 %v3466
        %v3986 = vunpack.c.l.b16 %v3467
        %v3987 = vunpack.c.l.b16 %v3468
        %v3988 = vunpack.c.l.b16 %v3469
        %v3989 = vunpack.c.l.b16 %v3470
        %v3990 = vunpack.c.l.b16 %v3471
        %v3991 = vunpack.c.l.b16 %v3472
        %v3992 = vunpack.c.l.b16 %v3473
        %v3993 = vunpack.c.l.b16 %v3474
        %v3994 = vunpack.c.l.b16 %v3475
        %v3995 = vunpack.c.l.b16 %v3476
        %v3996 = vunpack.c.l.b16 %v3477
        %v3997 = vunpack.c.l.b16 %v3478
        %v3998 = vunpack.c.l.b16 %v3479
        %v3999 = vunpack.c.l.b16 %v3480
        %v4000 = vunpack.c.l.b16 %v3481
        %v4001 = vunpack.c.l.b16 %v3482
        %v4002 = vunpack.c.l.b16 %v3483
        %v4003 = vunpack.c.l.b16 %v3484
        %v4004 = vunpack.c.l.b16 %v3485
        %v4005 = vunpack.c.l.b16 %v3486
        %v4006 = vunpack.c.l.b16 %v3487
        %v4007 = vunpack.c.l.b16 %v3488
        %v4008 = vunpack.c.l.b16 %v3489
        %v4009 = vunpack.c.l.b16 %v3490
        %v4010 = vunpack.c.l.b16 %v3491
        %v4011 = vunpack.c.l.b16 %v3492
        %v4012 = vunpack.c.l.b16 %v3493
        %v4013 = vunpack.c.l.b16 %v3494
        %v4014 = vunpack.c.l.b16 %v3495
        %v4015 = vunpack.c.l.b16 %v3496
        %v4016 = vunpack.c.l.b16 %v3497
        %v4017 = vunpack.c.l.b16 %v3498
        %v4018 = vunpack.c.l.b16 %v3499
        %v4019 = vunpack.c.l.b16 %v3500
        %v4020 = vunpack.c.l.b16 %v3501
        %v4021 = vunpack.c.l.b16 %v3502
        %v4022 = vunpack.c.l.b16 %v3503
        %v4023 = vunpack.c.l.b16 %v3504
        %v4024 = vunpack.c.l.b16 %v3505
        %v4025 = vunpack.c.l.b16 %v3506
        %v4026 = vunpack.c.l.b16 %v3507
        %v4027 = vunpack.c.l.b16 %v3508
        %v4028 = vunpack.c.l.b16 %v3509
        %v4029 = vunpack.c.l.b16 %v3510
        %v4030 = vunpack.c.l.b16 %v3511
        %v4031 = vunpack.c.l.b16 %v3512
        %v4032 = vunpack.c.l.b16 %v3513
        %v4033 = vunpack.c.l.b16 %v3514
        %v4034 = vunpack.c.l.b16 %v3515
        %v4035 = vunpack.c.l.b16 %v3516
        %v4036 = vunpack.c.l.b16 %v3517
        %v4037 = vunpack.c.l.b16 %v3518
        %v4038 = vunpack.c.l.b16 %v3519
        %v4039 = vunpack.c.l.b16 %v3520
        %v4040 = vunpack.c.l.b16 %v3521
        %v4041 = vunpack.c.l.b16 %v3522
        %v4042 = vunpack.c.l.b16 %v3523
        %v4043 = vunpack.c.l.b16 %v3524
        %v4044 = vunpack.c.l.b16 %v3525
        %v4045 = vunpack.c.l.b16 %v3526
        %v4046 = vunpack.c.l.b16 %v3527
        %v4047 = vunpack.c.l.b16 %v3528
        %v4048 = vunpack.c.l.b16 %v3529
        %v4049 = vunpack.c.l.b16 %v3530
        %v4050 = vunpack.c.l.b16 %v3531
        %v4051 = vunpack.c.l.b16 %v3532
        %v4052 = vunpack.c.l.b16 %v3533
        %v4053 = vunpack.c.l.b16 %v3534
        %v4054 = vunpack.c.l.b16 %v3535
        %v4055 = vunpack.c.l.b16 %v3536
        %v4056 = vunpack.c.l.b16 %v3537
        %v4057 = vunpack.c.l.b16 %v3538
        %v4058 = vunpack.c.l.b16 %v3539
        %v4059 = vunpack.c.l.b16 %v3540
        %v4060 = vunpack.c.l.b16 %v3541
        %v4061 = vunpack.c.l.b16 %v3542
        %v4062 = vunpack.c.l.b16 %v3543
        %v4063 = vunpack.c.l.b16 %v3544
        %v4064 = vunpack.c.l.b16 %v3545
        %v4065 = vunpack.c.l.b16 %v3546
        %v4066 = vunpack.c.l.b16 %v3547
        %v4067 = vunpack.c.l.b16 %v3548
        %v4068 = vunpack.c.l.b16 %v3549
        %v4069 = vunpack.c.l.b16 %v3550
        %v4070 = vunpack.c.l.b16 %v3551
        %v4071 = vunpack.c.l.b16 %v3552
        %v4072 = vunpack.c.l.b16 %v3553
        %v4073 = vunpack.c.l.b16 %v3554
        %v4074 = vunpack.c.l.b16 %v3555
        %v4075 = vunpack.c.l.b16 %v3556
        %v4076 = vunpack.c.l.b16 %v3557
        %v4077 = vunpack.c.l.b16 %v3558
        %v4078 = vunpack.c.l.b16 %v3559
        %v4079 = vunpack.c.l.b16 %v3560
        %v4080 = vunpack.c.l.b16 %v3561
        %v4081 = vunpack.c.l.b16 %v3562
        %v4082 = vunpack.c.l.b16 %v3563
        %v4083 = vunpack.c.l.b16 %v3564
        %v4084 = vpack.c.b16 %v3829, %v3828
        %v4085 = vpack.c.b16 %v3831, %v3830
        %v4086 = vpack.c.b16 %v3833, %v3832
        %v4087 = vpack.c.b16 %v3835, %v3834
        %v4088 = vpack.c.b16 %v3837, %v3836
        %v4089 = vpack.c.b16 %v3839, %v3838
        %v4090 = vpack.c.b16 %v3841, %v3840
        %v4091 = vpack.c.b16 %v3843, %v3842
        %v4092 = vpack.c.b16 %v3845, %v3844
        %v4093 = vpack.c.b16 %v3847, %v3846
        %v4094 = vpack.c.b16 %v3849, %v3848
        %v4095 = vpack.c.b16 %v3851, %v3850
        %v4096 = vpack.c.b16 %v3853, %v3852
        %v4097 = vpack.c.b16 %v3855, %v3854
        %v4098 = vpack.c.b16 %v3857, %v3856
        %v4099 = vpack.c.b16 %v3859, %v3858
        %v4100 = vpack.c.b16 %v3861, %v3860
        %v4101 = vpack.c.b16 %v3863, %v3862
        %v4102 = vpack.c.b16 %v3865, %v3864
        %v4103 = vpack.c.b16 %v3867, %v3866
        %v4104 = vpack.c.b16 %v3869, %v3868
        %v4105 = vpack.c.b16 %v3871, %v3870
        %v4106 = vpack.c.b16 %v3873, %v3872
        %v4107 = vpack.c.b16 %v3875, %v3874
        %v4108 = vpack.c.b16 %v3877, %v3876
        %v4109 = vpack.c.b16 %v3879, %v3878
        %v4110 = vpack.c.b16 %v3881, %v3880
        %v4111 = vpack.c.b16 %v3883, %v3882
        %v4112 = vpack.c.b16 %v3885, %v3884
        %v4113 = vpack.c.b16 %v3887, %v3886
        %v4114 = vpack.c.b16 %v3889, %v3888
        %v4115 = vpack.c.b16 %v3891, %v3890
        %v4116 = vpack.c.b16 %v3893, %v3892
        %v4117 = vpack.c.b16 %v3895, %v3894
        %v4118 = vpack.c.b16 %v3897, %v3896
        %v4119 = vpack.c.b16 %v3899, %v3898
        %v4120 = vpack.c.b16 %v3901, %v3900
        %v4121 = vpack.c.b16 %v3903, %v3902
        %v4122 = vpack.c.b16 %v3905, %v3904
        %v4123 = vpack.c.b16 %v3907, %v3906
        %v4124 = vpack.c.b16 %v3909, %v3908
        %v4125 = vpack.c.b16 %v3911, %v3910
        %v4126 = vpack.c.b16 %v3913, %v3912
        %v4127 = vpack.c.b16 %v3915, %v3914
        %v4128 = vpack.c.b16 %v3917, %v3916
        %v4129 = vpack.c.b16 %v3919, %v3918
        %v4130 = vpack.c.b16 %v3921, %v3920
        %v4131 = vpack.c.b16 %v3923, %v3922
        %v4132 = vpack.c.b16 %v3925, %v3924
        %v4133 = vpack.c.b16 %v3927, %v3926
        %v4134 = vpack.c.b16 %v3929, %v3928
        %v4135 = vpack.c.b16 %v3931, %v3930
        %v4136 = vpack.c.b16 %v3933, %v3932
        %v4137 = vpack.c.b16 %v3935, %v3934
        %v4138 = vpack.c.b16 %v3937, %v3936
        %v4139 = vpack.c.b16 %v3939, %v3938
        %v4140 = vpack.c.b16 %v3941, %v3940
        %v4141 = vpack.c.b16 %v3943, %v3942
        %v4142 = vpack.c.b16 %v3945, %v3944
        %v4143 = vpack.c.b16 %v3947, %v3946
        %v4144 = vpack.c.b16 %v3949, %v3948
        %v4145 = vpack.c.b16 %v3951, %v3950
        %v4146 = vpack.c.b16 %v3953, %v3952
        %v4147 = vpack.c.b16 %v3955, %v3954
        %v4148 = vpack.c.b16 %v3957, %v3956
        %v4149 = vpack.c.b16 %v3959, %v3958
        %v4150 = vpack.c.b16 %v3961, %v3960
        %v4151 = vpack.c.b16 %v3963, %v3962
        %v4152 = vpack.c.b16 %v3965, %v3964
        %v4153 = vpack.c.b16 %v3967, %v3966
        %v4154 = vpack.c.b16 %v3969, %v3968
        %v4155 = vpack.c.b16 %v3971, %v3970
        %v4156 = vpack.c.b16 %v3973, %v3972
        %v4157 = vpack.c.b16 %v3975, %v3974
        %v4158 = vpack.c.b16 %v3977, %v3976
        %v4159 = vpack.c.b16 %v3979, %v3978
        %v4160 = vpack.c.b16 %v3981, %v3980
        %v4161 = vpack.c.b16 %v3983, %v3982
        %v4162 = vpack.c.b16 %v3985, %v3984
        %v4163 = vpack.c.b16 %v3987, %v3986
        %v4164 = vpack.c.b16 %v3989, %v3988
        %v4165 = vpack.c.b16 %v3991, %v3990
        %v4166 = vpack.c.b16 %v3993, %v3992
        %v4167 = vpack.c.b16 %v3995, %v3994
        %v4168 = vpack.c.b16 %v3997, %v3996
        %v4169 = vpack.c.b16 %v3999, %v3998
        %v4170 = vpack.c.b16 %v4001, %v4000
        %v4171 = vpack.c.b16 %v4003, %v4002
        %v4172 = vpack.c.b16 %v4005, %v4004
        %v4173 = vpack.c.b16 %v4007, %v4006
        %v4174 = vpack.c.b16 %v4009, %v4008
        %v4175 = vpack.c.b16 %v4011, %v4010
        %v4176 = vpack.c.b16 %v4013, %v4012
        %v4177 = vpack.c.b16 %v4015, %v4014
        %v4178 = vpack.c.b16 %v4017, %v4016
        %v4179 = vpack.c.b16 %v4019, %v4018
        %v4180 = vpack.c.b16 %v4021, %v4020
        %v4181 = vpack.c.b16 %v4023, %v4022
        %v4182 = vpack.c.b16 %v4025, %v4024
        %v4183 = vpack.c.b16 %v4027, %v4026
        %v4184 = vpack.c.b16 %v4029, %v4028
        %v4185 = vpack.c.b16 %v4031, %v4030
        %v4186 = vpack.c.b16 %v4033, %v4032
        %v4187 = vpack.c.b16 %v4035, %v4034
        %v4188 = vpack.c.b16 %v4037, %v4036
        %v4189 = vpack.c.b16 %v4039, %v4038
        %v4190 = vpack.c.b16 %v4041, %v4040
        %v4191 = vpack.c.b16 %v4043, %v4042
        %v4192 = vpack.c.b16 %v4045, %v4044
        %v4193 = vpack.c.b16 %v4047, %v4046
        %v4194 = vpack.c.b16 %v4049, %v4048
        %v4195 = vpack.c.b16 %v4051, %v4050
        %v4196 = vpack.c.b16 %v4053, %v4052
        %v4197 = vpack.c.b16 %v4055, %v4054
        %v4198 = vpack.c.b16 %v4057, %v4056
        %v4199 = vpack.c.b16 %v4059, %v4058
        %v4200 = vpack.c.b16 %v4061, %v4060
        %v4201 = vpack.c.b16 %v4063, %v4062
        %v4202 = vpack.c.b16 %v4065, %v4064
        %v4203 = vpack.c.b16 %v4067, %v4066
        %v4204 = vpack.c.b16 %v4069, %v4068
        %v4205 = vpack.c.b16 %v4071, %v4070
        %v4206 = vpack.c.b16 %v4073, %v4072
        %v4207 = vpack.c.b16 %v4075, %v4074
        %v4208 = vpack.c.b16 %v4077, %v4076
        %v4209 = vpack.c.b16 %v4079, %v4078
        %v4210 = vpack.c.b16 %v4081, %v4080
        %v4211 = vpack.c.b16 %v4083, %v4082
        %4340 = vmatprep.subr.bf16.mxu0 0
        %4341 = vmatpush1.bf16.msra.mxu0 %v4084
        %4342 = vmatprep.subr.bf16.mxu0 0
        %4343 = vmatpush1.bf16.msra.mxu0 %v4085
        %4344 = vmatprep.subr.bf16.mxu0 0
        %4345 = vmatpush1.bf16.msra.mxu0 %v4086
        %4346 = vmatprep.subr.bf16.mxu0 0
        %4347 = vmatpush1.bf16.msra.mxu0 %v4087
        %4348 = vmatprep.subr.bf16.mxu0 0
        %4349 = vmatpush1.bf16.msra.mxu0 %v4088
        %4350 = vmatprep.subr.bf16.mxu0 0
        %4351 = vmatpush1.bf16.msra.mxu0 %v4089
        %4352 = vmatprep.subr.bf16.mxu0 0
        %4353 = vmatpush1.bf16.msra.mxu0 %v4090
        %4354 = vmatprep.subr.bf16.mxu0 0
        %4355 = vmatpush1.bf16.msra.mxu0 %v4091
        %4356 = vmatprep.subr.bf16.mxu0 0
        %4357 = vmatpush1.bf16.msra.mxu0 %v4092
        %4358 = vmatprep.subr.bf16.mxu0 0
        %4359 = vmatpush1.bf16.msra.mxu0 %v4093
        %4360 = vmatprep.subr.bf16.mxu0 0
        %4361 = vmatpush1.bf16.msra.mxu0 %v4094
        %4362 = vmatprep.subr.bf16.mxu0 0
        %4363 = vmatpush1.bf16.msra.mxu0 %v4095
        %4364 = vmatprep.subr.bf16.mxu0 0
        %4365 = vmatpush1.bf16.msra.mxu0 %v4096
        %4366 = vmatprep.subr.bf16.mxu0 0
        %4367 = vmatpush1.bf16.msra.mxu0 %v4097
        %4368 = vmatprep.subr.bf16.mxu0 0
        %4369 = vmatpush1.bf16.msra.mxu0 %v4098
        %4370 = vmatprep.subr.bf16.mxu0 0
        %4371 = vmatpush1.bf16.msra.mxu0 %v4099
        %4372 = vmatprep.mubr.bf16.mxu0 %v3294
        %4373 = vmatmul.mubr.bf16.gmra.mrb[0].mxu0 %v3293
        %v4374 = vpop.f32.mrb[0].mxu0
        %v4375 = vadd.f32 %v3570, %v4374
        %v4376 = vpop.f32.mrb[0].mxu0
        %v4377 = vpop.f32.mrb[0].mxu0
        %v4378 = vadd.f32 %v3570, %v4377
        %v4379 = vpop.f32.mrb[0].mxu0
        %4380 = vdwg.mxu0
        %4381 = vmatprep.subr.bf16.mxu0 0
        %4382 = vmatpush1.bf16.msra.mxu0 %v4100
        %4383 = vmatprep.subr.bf16.mxu0 0
        %4384 = vmatpush1.bf16.msra.mxu0 %v4101
        %4385 = vmatprep.subr.bf16.mxu0 0
        %4386 = vmatpush1.bf16.msra.mxu0 %v4102
        %4387 = vmatprep.subr.bf16.mxu0 0
        %4388 = vmatpush1.bf16.msra.mxu0 %v4103
        %4389 = vmatprep.subr.bf16.mxu0 0
        %4390 = vmatpush1.bf16.msra.mxu0 %v4104
        %4391 = vmatprep.subr.bf16.mxu0 0
        %4392 = vmatpush1.bf16.msra.mxu0 %v4105
        %4393 = vmatprep.subr.bf16.mxu0 0
        %4394 = vmatpush1.bf16.msra.mxu0 %v4106
        %4395 = vmatprep.subr.bf16.mxu0 0
        %4396 = vmatpush1.bf16.msra.mxu0 %v4107
        %4397 = vmatprep.subr.bf16.mxu0 0
        %4398 = vmatpush1.bf16.msra.mxu0 %v4108
        %4399 = vmatprep.subr.bf16.mxu0 0
        %4400 = vmatpush1.bf16.msra.mxu0 %v4109
        %4401 = vmatprep.subr.bf16.mxu0 0
        %4402 = vmatpush1.bf16.msra.mxu0 %v4110
        %4403 = vmatprep.subr.bf16.mxu0 0
        %4404 = vmatpush1.bf16.msra.mxu0 %v4111
        %4405 = vmatprep.subr.bf16.mxu0 0
        %4406 = vmatpush1.bf16.msra.mxu0 %v4112
        %4407 = vmatprep.subr.bf16.mxu0 0
        %4408 = vmatpush1.bf16.msra.mxu0 %v4113
        %4409 = vmatprep.subr.bf16.mxu0 0
        %4410 = vmatpush1.bf16.msra.mxu0 %v4114
        %4411 = vmatprep.subr.bf16.mxu0 0
        %4412 = vmatpush1.bf16.msra.mxu0 %v4115
        %4413 = vmatprep.mubr.bf16.mxu0 %v3296
        %4414 = vmatmul.mubr.bf16.gmra.mrb[0].mxu0 %v3295
        %v4415 = vpop.f32.mrb[0].mxu0
        %v4416 = vadd.f32 %v4375, %v4415
        %v4417 = vpop.f32.mrb[0].mxu0
        %v4418 = vpop.f32.mrb[0].mxu0
        %v4419 = vadd.f32 %v4378, %v4418
        %v4420 = vpop.f32.mrb[0].mxu0
        %4421 = vdwg.mxu0
        %4422 = vmatprep.subr.bf16.mxu0 0
        %4423 = vmatpush1.bf16.msra.mxu0 %v4116
        %4424 = vmatprep.subr.bf16.mxu0 0
        %4425 = vmatpush1.bf16.msra.mxu0 %v4117
        %4426 = vmatprep.subr.bf16.mxu0 0
        %4427 = vmatpush1.bf16.msra.mxu0 %v4118
        %4428 = vmatprep.subr.bf16.mxu0 0
        %4429 = vmatpush1.bf16.msra.mxu0 %v4119
        %4430 = vmatprep.subr.bf16.mxu0 0
        %4431 = vmatpush1.bf16.msra.mxu0 %v4120
        %4432 = vmatprep.subr.bf16.mxu0 0
        %4433 = vmatpush1.bf16.msra.mxu0 %v4121
        %4434 = vmatprep.subr.bf16.mxu0 0
        %4435 = vmatpush1.bf16.msra.mxu0 %v4122
        %4436 = vmatprep.subr.bf16.mxu0 0
        %4437 = vmatpush1.bf16.msra.mxu0 %v4123
        %4438 = vmatprep.subr.bf16.mxu0 0
        %4439 = vmatpush1.bf16.msra.mxu0 %v4124
        %4440 = vmatprep.subr.bf16.mxu0 0
        %4441 = vmatpush1.bf16.msra.mxu0 %v4125
        %4442 = vmatprep.subr.bf16.mxu0 0
        %4443 = vmatpush1.bf16.msra.mxu0 %v4126
        %4444 = vmatprep.subr.bf16.mxu0 0
        %4445 = vmatpush1.bf16.msra.mxu0 %v4127
        %4446 = vmatprep.subr.bf16.mxu0 0
        %4447 = vmatpush1.bf16.msra.mxu0 %v4128
        %4448 = vmatprep.subr.bf16.mxu0 0
        %4449 = vmatpush1.bf16.msra.mxu0 %v4129
        %4450 = vmatprep.subr.bf16.mxu0 0
        %4451 = vmatpush1.bf16.msra.mxu0 %v4130
        %4452 = vmatprep.subr.bf16.mxu0 0
        %4453 = vmatpush1.bf16.msra.mxu0 %v4131
        %4454 = vmatprep.mubr.bf16.mxu0 %v3298
        %4455 = vmatmul.mubr.bf16.gmra.mrb[0].mxu0 %v3297
        %v4456 = vpop.f32.mrb[0].mxu0
        %v4457 = vadd.f32 %v4416, %v4456
        %v4458 = vpop.f32.mrb[0].mxu0
        %v4459 = vpop.f32.mrb[0].mxu0
        %v4460 = vadd.f32 %v4419, %v4459
        %v4461 = vpop.f32.mrb[0].mxu0
        %4462 = vdwg.mxu0
        %4463 = vmatprep.subr.bf16.mxu0 0
        %4464 = vmatpush1.bf16.msra.mxu0 %v4132
        %4465 = vmatprep.subr.bf16.mxu0 0
        %4466 = vmatpush1.bf16.msra.mxu0 %v4133
        %4467 = vmatprep.subr.bf16.mxu0 0
        %4468 = vmatpush1.bf16.msra.mxu0 %v4134
        %4469 = vmatprep.subr.bf16.mxu0 0
        %4470 = vmatpush1.bf16.msra.mxu0 %v4135
        %4471 = vmatprep.subr.bf16.mxu0 0
        %4472 = vmatpush1.bf16.msra.mxu0 %v4136
        %4473 = vmatprep.subr.bf16.mxu0 0
        %4474 = vmatpush1.bf16.msra.mxu0 %v4137
        %4475 = vmatprep.subr.bf16.mxu0 0
        %4476 = vmatpush1.bf16.msra.mxu0 %v4138
        %4477 = vmatprep.subr.bf16.mxu0 0
        %4478 = vmatpush1.bf16.msra.mxu0 %v4139
        %4479 = vmatprep.subr.bf16.mxu0 0
        %4480 = vmatpush1.bf16.msra.mxu0 %v4140
        %4481 = vmatprep.subr.bf16.mxu0 0
        %4482 = vmatpush1.bf16.msra.mxu0 %v4141
        %4483 = vmatprep.subr.bf16.mxu0 0
        %4484 = vmatpush1.bf16.msra.mxu0 %v4142
        %4485 = vmatprep.subr.bf16.mxu0 0
        %4486 = vmatpush1.bf16.msra.mxu0 %v4143
        %4487 = vmatprep.subr.bf16.mxu0 0
        %4488 = vmatpush1.bf16.msra.mxu0 %v4144
        %4489 = vmatprep.subr.bf16.mxu0 0
        %4490 = vmatpush1.bf16.msra.mxu0 %v4145
        %4491 = vmatprep.subr.bf16.mxu0 0
        %4492 = vmatpush1.bf16.msra.mxu0 %v4146
        %4493 = vmatprep.subr.bf16.mxu0 0
        %4494 = vmatpush1.bf16.msra.mxu0 %v4147
        %4495 = vmatprep.mubr.bf16.mxu0 %v3300
        %4496 = vmatmul.mubr.bf16.gmra.mrb[0].mxu0 %v3299
        %v4497 = vpop.f32.mrb[0].mxu0
        %v4498 = vadd.f32 %v4457, %v4497
        %v4499 = vpop.f32.mrb[0].mxu0
        %v4500 = vpop.f32.mrb[0].mxu0
        %v4501 = vadd.f32 %v4460, %v4500
        %v4502 = vpop.f32.mrb[0].mxu0
        %4503 = vdwg.mxu0
        %4504 = vmatprep.subr.bf16.mxu0 0
        %4505 = vmatpush1.bf16.msra.mxu0 %v4148
        %4506 = vmatprep.subr.bf16.mxu0 0
        %4507 = vmatpush1.bf16.msra.mxu0 %v4149
        %4508 = vmatprep.subr.bf16.mxu0 0
        %4509 = vmatpush1.bf16.msra.mxu0 %v4150
        %4510 = vmatprep.subr.bf16.mxu0 0
        %4511 = vmatpush1.bf16.msra.mxu0 %v4151
        %4512 = vmatprep.subr.bf16.mxu0 0
        %4513 = vmatpush1.bf16.msra.mxu0 %v4152
        %4514 = vmatprep.subr.bf16.mxu0 0
        %4515 = vmatpush1.bf16.msra.mxu0 %v4153
        %4516 = vmatprep.subr.bf16.mxu0 0
        %4517 = vmatpush1.bf16.msra.mxu0 %v4154
        %4518 = vmatprep.subr.bf16.mxu0 0
        %4519 = vmatpush1.bf16.msra.mxu0 %v4155
        %4520 = vmatprep.subr.bf16.mxu0 0
        %4521 = vmatpush1.bf16.msra.mxu0 %v4156
        %4522 = vmatprep.subr.bf16.mxu0 0
        %4523 = vmatpush1.bf16.msra.mxu0 %v4157
        %4524 = vmatprep.subr.bf16.mxu0 0
        %4525 = vmatpush1.bf16.msra.mxu0 %v4158
        %4526 = vmatprep.subr.bf16.mxu0 0
        %4527 = vmatpush1.bf16.msra.mxu0 %v4159
        %4528 = vmatprep.subr.bf16.mxu0 0
        %4529 = vmatpush1.bf16.msra.mxu0 %v4160
        %4530 = vmatprep.subr.bf16.mxu0 0
        %4531 = vmatpush1.bf16.msra.mxu0 %v4161
        %4532 = vmatprep.subr.bf16.mxu0 0
        %4533 = vmatpush1.bf16.msra.mxu0 %v4162
        %4534 = vmatprep.subr.bf16.mxu0 0
        %4535 = vmatpush1.bf16.msra.mxu0 %v4163
        %4536 = vmatprep.mubr.bf16.mxu0 %v3302
        %4537 = vmatmul.mubr.bf16.gmra.mrb[0].mxu0 %v3301
        %v4538 = vpop.f32.mrb[0].mxu0
        %v4539 = vadd.f32 %v4498, %v4538
        %v4540 = vpop.f32.mrb[0].mxu0
        %v4541 = vpop.f32.mrb[0].mxu0
        %v4542 = vadd.f32 %v4501, %v4541
        %v4543 = vpop.f32.mrb[0].mxu0
        %4544 = vdwg.mxu0
        %4545 = vmatprep.subr.bf16.mxu0 0
        %4546 = vmatpush1.bf16.msra.mxu0 %v4164
        %4547 = vmatprep.subr.bf16.mxu0 0
        %4548 = vmatpush1.bf16.msra.mxu0 %v4165
        %4549 = vmatprep.subr.bf16.mxu0 0
        %4550 = vmatpush1.bf16.msra.mxu0 %v4166
        %4551 = vmatprep.subr.bf16.mxu0 0
        %4552 = vmatpush1.bf16.msra.mxu0 %v4167
        %4553 = vmatprep.subr.bf16.mxu0 0
        %4554 = vmatpush1.bf16.msra.mxu0 %v4168
        %4555 = vmatprep.subr.bf16.mxu0 0
        %4556 = vmatpush1.bf16.msra.mxu0 %v4169
        %4557 = vmatprep.subr.bf16.mxu0 0
        %4558 = vmatpush1.bf16.msra.mxu0 %v4170
        %4559 = vmatprep.subr.bf16.mxu0 0
        %4560 = vmatpush1.bf16.msra.mxu0 %v4171
        %4561 = vmatprep.subr.bf16.mxu0 0
        %4562 = vmatpush1.bf16.msra.mxu0 %v4172
        %4563 = vmatprep.subr.bf16.mxu0 0
        %4564 = vmatpush1.bf16.msra.mxu0 %v4173
        %4565 = vmatprep.subr.bf16.mxu0 0
        %4566 = vmatpush1.bf16.msra.mxu0 %v4174
        %4567 = vmatprep.subr.bf16.mxu0 0
        %4568 = vmatpush1.bf16.msra.mxu0 %v4175
        %4569 = vmatprep.subr.bf16.mxu0 0
        %4570 = vmatpush1.bf16.msra.mxu0 %v4176
        %4571 = vmatprep.subr.bf16.mxu0 0
        %4572 = vmatpush1.bf16.msra.mxu0 %v4177
        %4573 = vmatprep.subr.bf16.mxu0 0
        %4574 = vmatpush1.bf16.msra.mxu0 %v4178
        %4575 = vmatprep.subr.bf16.mxu0 0
        %4576 = vmatpush1.bf16.msra.mxu0 %v4179
        %4577 = vmatprep.mubr.bf16.mxu0 %v3304
        %4578 = vmatmul.mubr.bf16.gmra.mrb[0].mxu0 %v3303
        %v4579 = vpop.f32.mrb[0].mxu0
        %v4580 = vadd.f32 %v4539, %v4579
        %v4581 = vpop.f32.mrb[0].mxu0
        %v4582 = vpop.f32.mrb[0].mxu0
        %v4583 = vadd.f32 %v4542, %v4582
        %v4584 = vpop.f32.mrb[0].mxu0
        %4585 = vdwg.mxu0
        %4586 = vmatprep.subr.bf16.mxu0 0
        %4587 = vmatpush1.bf16.msra.mxu0 %v4180
        %4588 = vmatprep.subr.bf16.mxu0 0
        %4589 = vmatpush1.bf16.msra.mxu0 %v4181
        %4590 = vmatprep.subr.bf16.mxu0 0
        %4591 = vmatpush1.bf16.msra.mxu0 %v4182
        %4592 = vmatprep.subr.bf16.mxu0 0
        %4593 = vmatpush1.bf16.msra.mxu0 %v4183
        %4594 = vmatprep.subr.bf16.mxu0 0
        %4595 = vmatpush1.bf16.msra.mxu0 %v4184
        %4596 = vmatprep.subr.bf16.mxu0 0
        %4597 = vmatpush1.bf16.msra.mxu0 %v4185
        %4598 = vmatprep.subr.bf16.mxu0 0
        %4599 = vmatpush1.bf16.msra.mxu0 %v4186
        %4600 = vmatprep.subr.bf16.mxu0 0
        %4601 = vmatpush1.bf16.msra.mxu0 %v4187
        %4602 = vmatprep.subr.bf16.mxu0 0
        %4603 = vmatpush1.bf16.msra.mxu0 %v4188
        %4604 = vmatprep.subr.bf16.mxu0 0
        %4605 = vmatpush1.bf16.msra.mxu0 %v4189
        %4606 = vmatprep.subr.bf16.mxu0 0
        %4607 = vmatpush1.bf16.msra.mxu0 %v4190
        %4608 = vmatprep.subr.bf16.mxu0 0
        %4609 = vmatpush1.bf16.msra.mxu0 %v4191
        %4610 = vmatprep.subr.bf16.mxu0 0
        %4611 = vmatpush1.bf16.msra.mxu0 %v4192
        %4612 = vmatprep.subr.bf16.mxu0 0
        %4613 = vmatpush1.bf16.msra.mxu0 %v4193
        %4614 = vmatprep.subr.bf16.mxu0 0
        %4615 = vmatpush1.bf16.msra.mxu0 %v4194
        %4616 = vmatprep.subr.bf16.mxu0 0
        %4617 = vmatpush1.bf16.msra.mxu0 %v4195
        %4618 = vmatprep.mubr.bf16.mxu0 %v3306
        %4619 = vmatmul.mubr.bf16.gmra.mrb[0].mxu0 %v3305
        %v4620 = vpop.f32.mrb[0].mxu0
        %v4621 = vadd.f32 %v4580, %v4620
        %v4622 = vpop.f32.mrb[0].mxu0
        %v4623 = vpop.f32.mrb[0].mxu0
        %v4624 = vadd.f32 %v4583, %v4623
        %v4625 = vpop.f32.mrb[0].mxu0
        %4626 = vdwg.mxu0
        %4627 = vmatprep.subr.bf16.mxu0 0
        %4628 = vmatpush1.bf16.msra.mxu0 %v4196
        %4629 = vmatprep.subr.bf16.mxu0 0
        %4630 = vmatpush1.bf16.msra.mxu0 %v4197
        %4631 = vmatprep.subr.bf16.mxu0 0
        %4632 = vmatpush1.bf16.msra.mxu0 %v4198
        %4633 = vmatprep.subr.bf16.mxu0 0
        %4634 = vmatpush1.bf16.msra.mxu0 %v4199
        %4635 = vmatprep.subr.bf16.mxu0 0
        %4636 = vmatpush1.bf16.msra.mxu0 %v4200
        %4637 = vmatprep.subr.bf16.mxu0 0
        %4638 = vmatpush1.bf16.msra.mxu0 %v4201
        %4639 = vmatprep.subr.bf16.mxu0 0
        %4640 = vmatpush1.bf16.msra.mxu0 %v4202
        %4641 = vmatprep.subr.bf16.mxu0 0
        %4642 = vmatpush1.bf16.msra.mxu0 %v4203
        %4643 = vmatprep.subr.bf16.mxu0 0
        %4644 = vmatpush1.bf16.msra.mxu0 %v4204
        %4645 = vmatprep.subr.bf16.mxu0 0
        %4646 = vmatpush1.bf16.msra.mxu0 %v4205
        %4647 = vmatprep.subr.bf16.mxu0 0
        %4648 = vmatpush1.bf16.msra.mxu0 %v4206
        %4649 = vmatprep.subr.bf16.mxu0 0
        %4650 = vmatpush1.bf16.msra.mxu0 %v4207
        %4651 = vmatprep.subr.bf16.mxu0 0
        %4652 = vmatpush1.bf16.msra.mxu0 %v4208
        %4653 = vmatprep.subr.bf16.mxu0 0
        %4654 = vmatpush1.bf16.msra.mxu0 %v4209
        %4655 = vmatprep.subr.bf16.mxu0 0
        %4656 = vmatpush1.bf16.msra.mxu0 %v4210
        %4657 = vmatprep.subr.bf16.mxu0 0
        %4658 = vmatpush1.bf16.msra.mxu0 %v4211
        %4659 = vmatprep.mubr.bf16.mxu0 %v3308
        %4660 = vmatmul.mubr.bf16.gmra.mrb[0].mxu0 %v3307
        %v4661 = vpop.f32.mrb[0].mxu0
        %v4662 = vadd.f32 %v4621, %v4661
        %v4663 = vpop.f32.mrb[0].mxu0
        %v4664 = vpop.f32.mrb[0].mxu0
        %v4665 = vadd.f32 %v4624, %v4664
        %v4666 = vpop.f32.mrb[0].mxu0
        %4667 = vdwg.mxu0
        %v4668 = vadd.f32 %v2635, %v4662
        %v4669 = vadd.f32 %v2636, %v4665
        %v4670 = vld [vmem:[%s1118] sm:$0x1]
        %v4671 = vld [vmem:[%s1121] sm:$0x1]
        %v4672 = vsel %vm1203, %v4668, 0.0
        %4673 = vadd.xlane.f32.xlu0 %v4672
        %v4674 = vpop.xlane.xlu0 %4673
        %v4675 = vsel %vm1203, %v4669, 0.0
        %4676 = vadd.xlane.f32.xlu0 %v4675
        %v4677 = vpop.xlane.xlu0 %4676
        %v4678 = vmul.f32 %v4674, %v2600
        %v4679 = vmul.f32 %v4677, %v2600
        %v4680 = vsub.f32 %v4668, %v4678
        %v4681 = vsub.f32 %v4669, %v4679
        %v4682 = vmul.f32 %v4680, %v4680
        %v4683 = vmul.f32 %v4681, %v4681
        %v4684 = vsel %vm1203, %v4682, 0.0
        %4685 = vadd.xlane.f32.xlu0 %v4684
        %v4686 = vpop.xlane.xlu0 %4685
        %v4687 = vsel %vm1203, %v4683, 0.0
        %4688 = vadd.xlane.f32.xlu0 %v4687
        %v4689 = vpop.xlane.xlu0 %4688
        %v4690 = vmul.f32 %v4686, %v2600
        %v4691 = vmul.f32 %v4689, %v2600
        %v4692 = vadd.f32 %v4690, 1e-05
        %v4693 = vadd.f32 %v4691, 1e-05
        %v4694 = vrsqrt.pop %v4692
        %v4695 = vrsqrt.pop %v4693
        %v4696 = vmul.f32 %v4680, %v4694
        %v4697 = vmul.f32 %v4681, %v4695
        %v4699 = vlaneseq
        %v4700 = vshrl.u32 %v4699, 7
        %v4701 = vsub.s32 0, %v4700
        %v4702 = vrot.slane %v4670, %v4701
        %v4704 = vmul.f32 %v4696, %v4702
        %v4705 = vmul.f32 %v4697, %v4702
        %v4707 = vlaneseq
        %v4708 = vshrl.u32 %v4707, 7
        %v4709 = vsub.s32 0, %v4708
        %v4710 = vrot.slane %v4671, %v4709
        %v4712 = vadd.f32 %v4704, %v4710
        %v4713 = vadd.f32 %v4705, %v4710
        %4714 = vst.msk [vmem:[#allocation2] sm:$0xff] %vm1203, %v4712
        %4715 = vst.msk [vmem:[#allocation2 + $0x8] sm:$0xff] %vm1203, %v4713
        %p4716 = scmp.eq.s32.totalorder %s44, 1
        // Predicated region
        $region121: #{tpu_custom_call.1} parent=115 // pred_check
          %p4717 = pneg %p4716
        $region122: #{tpu_custom_call.1} parent=115 // pred_check_branch
          %4719 = sbr.rel (%p4717) target = $region124
        $region123: #{tpu_custom_call.1} parent=115 // pred_region
          %v4720 = vpack.c.bf16 %v4713, %v4712
          %v4721 = vld [vmem:[%s22] sm:$0xf]
          %v4722 = vld [vmem:[%s22 + $0x4] sm:$0xf]
          %v4723 = vld [vmem:[%s22 + $0x8] sm:$0xf]
          %v4724 = vld [vmem:[%s22 + $0xc] sm:$0xf]
          %v4725 = vld [vmem:[%s23] sm:$0x1]
          %v4727 = vlaneseq
          %v4728 = vshrl.u32 %v4727, 7
          %v4729 = vsub.s32 0, %v4728
          %v4730 = vrot.slane %v4725, %v4729
          %v4736 = vunpack.c.l.b16 %v4721
          %v4737 = vunpack.c.l.b16 %v4722
          %v4738 = vunpack.c.l.b16 %v4723
          %v4739 = vunpack.c.l.b16 %v4724
          %v4740 = vpack.c.b16 %v4737, %v4736
          %v4741 = vpack.c.b16 %v4739, %v4738
          %v4745 = vsel %vm1203, %v4720, 0
          %4747 = vmatprep.subr.bf16.mxu0 0
          %4748 = vmatpush1.bf16.msra.mxu0 %v4740
          %4749 = vmatprep.subr.bf16.mxu0 0
          %4750 = vmatpush1.bf16.msra.mxu0 %v4741
          %4751 = vmatprep.subr.bf16.mxu0 0
          %4752 = vmatpush1.bf16.msra.mxu0 0
          %4753 = vmatprep.subr.bf16.mxu0 0
          %4754 = vmatpush1.bf16.msra.mxu0 0
          %4755 = vmatprep.subr.bf16.mxu0 0
          %4756 = vmatpush1.bf16.msra.mxu0 0
          %4757 = vmatprep.subr.bf16.mxu0 0
          %4758 = vmatpush1.bf16.msra.mxu0 0
          %4759 = vmatprep.subr.bf16.mxu0 0
          %4760 = vmatpush1.bf16.msra.mxu0 0
          %4761 = vmatprep.subr.bf16.mxu0 0
          %4762 = vmatpush1.bf16.msra.mxu0 0
          %4763 = vmatprep.subr.bf16.mxu0 0
          %4764 = vmatpush1.bf16.msra.mxu0 0
          %4765 = vmatprep.subr.bf16.mxu0 0
          %4766 = vmatpush1.bf16.msra.mxu0 0
          %4767 = vmatprep.subr.bf16.mxu0 0
          %4768 = vmatpush1.bf16.msra.mxu0 0
          %4769 = vmatprep.subr.bf16.mxu0 0
          %4770 = vmatpush1.bf16.msra.mxu0 0
          %4771 = vmatprep.subr.bf16.mxu0 0
          %4772 = vmatpush1.bf16.msra.mxu0 0
          %4773 = vmatprep.subr.bf16.mxu0 0
          %4774 = vmatpush1.bf16.msra.mxu0 0
          %4775 = vmatprep.subr.bf16.mxu0 0
          %4776 = vmatpush1.bf16.msra.mxu0 0
          %4777 = vmatprep.subr.bf16.mxu0 0
          %4778 = vmatpush1.bf16.msra.mxu0 0
          %4779 = vmatprep.mubr.bf16.mxu0 0
          %4780 = vmatmul.mubr.bf16.gmra.mrb[0].mxu0 %v4745
          %v4781 = vpop.f32.mrb[0].mxu0
          %v4782 = vadd.f32 %v4730, %v4781
          %v4783 = vpop.f32.mrb[0].mxu0
          %v4784 = vpop.f32.mrb[0].mxu0
          %v4785 = vadd.f32 %v4730, %v4784
          %v4786 = vpop.f32.mrb[0].mxu0
          %4787 = vdwg.mxu0
          %v4788 = vsub.f32 0.0, %v4782
          %v4789 = vsub.f32 0.0, %v4785
          %v4790 = vmul.f32 %v4788, 1.442695
          %v4791 = vpow.pop %v4790
          %v4792 = vmul.f32 %v4789, 1.442695
          %v4793 = vpow.pop %v4792
          %v4794 = vadd.f32 %v4791, 1.0
          %v4795 = vadd.f32 %v4793, 1.0
          %v4796 = vrcp.pop %v4794
          %v4797 = vmul.f32 1.0, %v4796
          %v4798 = vrcp.pop %v4795
          %v4799 = vmul.f32 1.0, %v4798
          %v4800 = vpack.c.bf16 %v4797, %v4797
          %v4801 = vpack.c.bf16 %v4799, %v4799
          %4802 = vst [vmem:[#allocation3] sm:$0xf] %v4800
          %4803 = vst [vmem:[#allocation3 + $0x4] sm:$0xf] %v4801
          %v4804 = vld [vmem:[%s1059] sm:$0xff]
          %v4805 = vld [vmem:[%s1059 + $0x8] sm:$0xff]
          %v4806 = vld [vmem:[%s1041] sm:$0xff]
          %v4807 = vld [vmem:[%s1041 + $0x8] sm:$0xff]
          %v4808 = vmax.f32 %v4782, 0.0
          %v4809 = vmax.f32 %v4785, 0.0
          %v4810 = vmul.f32 %v4782, %v4804
          %v4811 = vmul.f32 %v4785, %v4805
          %v4812 = vsub.f32 %v4808, %v4810
          %v4813 = vsub.f32 %v4809, %v4811
          %v4814 = vand.u32 2147483647, %v4782
          %v4815 = vand.u32 2147483647, %v4785
          %v4816 = vsub.f32 0.0, %v4814
          %v4817 = vsub.f32 0.0, %v4815
          %v4818 = vmul.f32 %v4816, 1.442695
          %v4819 = vpow.pop %v4818
          %v4820 = vmul.f32 %v4817, 1.442695
          %v4821 = vpow.pop %v4820
          %v4822 = vadd.f32 %v4819, 1.0
          %v4823 = vadd.f32 %v4821, 1.0
          %v4824 = vlog2.pop %v4822
          %v4825 = vmul.f32 %v4824, 0.6931472
          %v4826 = vlog2.pop %v4823
          %v4827 = vmul.f32 %v4826, 0.6931472
          %v4828 = vadd.f32 %v4812, %v4825
          %v4829 = vadd.f32 %v4813, %v4827
          %4831 = vset.pattern.permute.xlu0 0
          %4832 = vperm.xlu0 %4831, %v4806
          %v4833 = vpop.permute.xlu0 %4832
          %4836 = vset.pattern.permute.xlu0 0
          %4837 = vperm.xlu0 %4836, %v4807
          %v4838 = vpop.permute.xlu0 %4837
          %v4840 = vmul.f32 %v4828, %v4833
          %v4841 = vmul.f32 %v4829, %v4838
          %vm4842 = vcmask 80896
          %v4843 = vsel %vm4842, %v4840, 0.0
          %v4844 = vsel %vm4842, %v4841, 0.0
          %v4845 = vadd.f32 %v4843, %v4844
          %4846 = vadd.xlane.f32.xlu0 %v4845
          %v4847 = vpop.xlane.xlu0 %4846
          %v4848 = vrot.slane %v4847, 4
          %v4849 = vadd.f32 %v4847, %v4848
          %v4850 = vrot.slane %v4849, 2
          %v4851 = vadd.f32 %v4849, %v4850
          %v4852 = vrot.slane %v4851, 1
          %v4853 = vadd.f32 %v4851, %v4852
          %s4854 = vtos %v4853
          %v4855 = vstv %s4854
          %vm4856 = vcmask 0
          %4857 = vst.msk [vmem:[#allocation5] sm:$0x1] %vm4856, %v4855
        $region124: #{tpu_custom_call.1} parent=115 // pred_fallthru
          _
        // Predicated region
        $region125: #{tpu_custom_call.1} parent=115 // pred_check
          %p4858 = pneg %p678
        $region126: #{tpu_custom_call.1} parent=115 // pred_check_branch
          %4860 = sbr.rel (%p4858) target = $region128
        $region127: #{tpu_custom_call.1} parent=115 // pred_region
          %s4861 = smul.u32 2, %s43
          %s4863 = ssub.s32 128, 128
          %4864 = vsyncadd [#allocation4], %s4863
          %s4865 = smul.addr %s4861, 64
          %s4866 = scalar_lea.hbm %s24, %s4865
          %s4867 = sshll.u32 [#allocation3], 4
          %s4868 = int_to_ptr.vmem [resolvable:$true] %s4867
          %4873 = dma.vmem_to_hbm [thread:$0]  %s4868, 128, %s4866, [#allocation4], 64, 64, 4
        $region128: #{tpu_custom_call.1} parent=115 // pred_fallthru
          _
        // Predicated region
        $region129: #{tpu_custom_call.1} parent=115 // pred_check
          %p4874 = pneg %p704
        $region130: #{tpu_custom_call.1} parent=115 // pred_check_branch
          %4876 = sbr.rel (%p4874) target = $region132
        $region131: #{tpu_custom_call.1} parent=115 // pred_region
          %s4878 = ssub.s32 16, 16
          %4879 = vsyncadd [#allocation6], %s4878
          %s4880 = smul.addr %s43, 16
          %s4881 = scalar_lea.hbm %s25, %s4880
          %s4883 = sshll.u32 [#allocation5], 4
          %s4884 = int_to_ptr.vmem [resolvable:$true] %s4883
          %4886 = dma.vmem_to_hbm [thread:$0]  %s4884, 16, %s4881, [#allocation6]
        $region132: #{tpu_custom_call.1} parent=115 // pred_fallthru
          _
        // Predicated region
        $region133: #{tpu_custom_call.1} parent=115 // pred_check
          %p4887 = pneg %p678
        $region134: #{tpu_custom_call.1} parent=115 // pred_check_branch
          %4889 = sbr.rel (%p4887) target = $region136
        $region135: #{tpu_custom_call.1} parent=115 // pred_region
          %4890 = dma.done [#allocation4], 128
        $region136: #{tpu_custom_call.1} parent=115 // pred_fallthru
          _
        // Predicated region
        $region137: #{tpu_custom_call.1} parent=115 // pred_check
          %p4891 = pneg %p704
        $region138: #{tpu_custom_call.1} parent=115 // pred_check_branch
          %4893 = sbr.rel (%p4891) target = $region140
        $region139: #{tpu_custom_call.1} parent=115 // pred_region
          %4894 = dma.done [#allocation6], 16
        $region140: #{tpu_custom_call.1} parent=115 // pred_fallthru
          _
      $region116: #{tpu_custom_call.1} parent=5 // pred_fallthru
        _
      %p4895 = scmp.le.s32.totalorder 2, %s34
      // Predicated region
      $region141: #{tpu_custom_call.1} parent=5 // pred_check
        %p4896 = pneg %p4895
      $region142: #{tpu_custom_call.1} parent=5 // pred_check_branch
        %4898 = sbr.rel (%p4896) target = $region144
      $region143: #{tpu_custom_call.1} parent=5 // pred_region
        %s4899 = ssub.s32 %s34, 2
      $region144: #{tpu_custom_call.1} parent=5 // pred_fallthru
        _
    $region6: #{tpu_custom_call.1} parent=1 // loop_footer
      %s38 = sadd.s32 1, %s34
    $region7: #{tpu_custom_call.1} parent=1 // loop_footer_branch
      %33 = sbr.rel target = $region3
    $region8: #{tpu_custom_call.1} parent=1 // loop_exit
      _
    %4900 = vsyncpa [#allocation4], 1
    %s4901 = scalar_lea.sflag [#allocation4], 1
    %4902 = vsyncpa %s4901, 1
    %4903 = vsyncpa [#allocation6], 1

</llo_original>
